<compile_context>
chip_gen: v6e
topology: v6e:2x2x1
jax: 0.10.0
libtpu: 0.0.40
codegen_flags: <defaults>
</compile_context>

<pallas_src>
import math

import jax
import jax.numpy as jnp
from jax import lax
from jax.experimental import pallas as pl
from jax.experimental.pallas import tpu as pltpu

# ---------------- configuration (small shapes consistent with the module) ---
BATCH = 2
SEQ = 8
FEATURE = 16        # feature_size
EMB = 128           # emb_dim
NHEAD = 4
HEAD_DIM = EMB // NHEAD
FF = 128            # dim_feedforward
NUM_LAYERS = 2
DEC_HIDDEN = 32
LN_EPS = 1e-5

CDT = jnp.bfloat16   # matmul-input / weight compute dtype (f32 accumulation)


# ----------------------------- helpers ---------------------------------------
def _layer_norm(x, gamma, beta):
    # Two independent cross-lane reductions; var = E[x^2] - mean^2.
    inv_d = 1.0 / EMB
    mu = jnp.sum(x, axis=-1, keepdims=True) * inv_d
    ex2 = jnp.sum(x * x, axis=-1, keepdims=True) * inv_d
    var = ex2 - mu * mu
    return (x - mu) * lax.rsqrt(var + LN_EPS) * gamma + beta


# ----------------------------- fused Pallas kernel ---------------------------
def fused_transformer_kernel(x_ref, pe_ref, emb_w_ref, wqkv_ref, wo_ref,
                             w1_ref, w2_ref, misc_ref, dw1_ref, dmisc_ref,
                             o_ref):
    B, S, D, H, HD = BATCH, SEQ, EMB, NHEAD, HEAD_DIM
    inv_sqrt_hd = 1.0 / math.sqrt(HD)
    f32 = jnp.float32

    # ---- embedding (*sqrt(D) folded into weights) + positional encoding ----
    # pe_ref already contains tile(pe, B) + sqrt(D) * emb_bias.
    h = jnp.dot(x_ref[...].astype(CDT), emb_w_ref[...],
                preferred_element_type=f32) + pe_ref[...]            # (B*S, D)

    # ---- encoder layers (post-norm, relu FFN) -------------------------------
    for l in range(NUM_LAYERS):                  # static unroll over layers
        m = misc_ref[l]                          # (10, D) packed small params
        h_c = h.astype(CDT)

        # packed QKV projection: single (B*S, D) @ (D, 3D) MXU push
        qkv = jnp.dot(h_c, wqkv_ref[l], preferred_element_type=f32)  # (B*S,3D)
        q = (qkv[:, 0:D]         + m[0:1]).reshape(B, S, D)
        k = (qkv[:, D:2 * D]     + m[1:2]).reshape(B, S, D)
        v = (qkv[:, 2 * D:3 * D] + m[2:3]).reshape(B, S, D)

        # all-head scores stacked along the batch axis -> ONE softmax chain
        s = jnp.concatenate(
            [jnp.einsum('bqd,bkd->bqk',
                        q[:, :, hh * HD:(hh + 1) * HD],
                        k[:, :, hh * HD:(hh + 1) * HD],
                        preferred_element_type=f32)
             for hh in range(H)], axis=0) * inv_sqrt_hd              # (H*B,S,S)
        s = s - jnp.max(s, axis=-1, keepdims=True)
        p = jnp.exp(s)
        p = p * pl.reciprocal(jnp.sum(p, axis=-1, keepdims=True), approx=True)

        # context + output projection as a SUM of per-head partial matmuls
        attn = jnp.zeros((B * S, D), f32)
        for hh in range(H):
            ctx_h = jnp.einsum('bqk,bkd->bqd',
                               p[hh * B:(hh + 1) * B],
                               v[:, :, hh * HD:(hh + 1) * HD],
                               preferred_element_type=f32)           # (B,S,HD)
            attn = attn + jnp.dot(ctx_h.reshape(B * S, HD).astype(CDT),
                                  wo_ref[l, hh],
                                  preferred_element_type=f32)
        attn = attn + m[3:4]                                         # out bias

        h = _layer_norm(h + attn, m[4:5], m[5:6])

        # feed-forward (relu)
        f1 = jnp.maximum(
            jnp.dot(h.astype(CDT), w1_ref[l],
                    preferred_element_type=f32) + m[6:7], 0.0)
        f2 = jnp.dot(f1.astype(CDT), w2_ref[l],
                     preferred_element_type=f32) + m[7:8]
        h = _layer_norm(h + f2, m[8:9], m[9:10])

    # ---- decoder (zero-padded to 128 lanes) + mean over sequence ------------
    dm = dmisc_ref[...]                                              # (3, D)
    hd = jnp.maximum(
        jnp.dot(h.astype(CDT), dw1_ref[...],
                preferred_element_type=f32) + dm[0:1], 0.0)          # (B*S, D)
    pooled = jnp.mean(hd.reshape(B, S, D), axis=1)                   # (B, D)
    # mean over S commutes with the final affine; lanes >= 32 are exact zeros.
    out = jnp.sum(pooled * dm[1:2], axis=-1, keepdims=True) + dm[2:3, 0:1]
    o_ref[...] = out                                                 # (B, 1)


# ----------------------------- pallas_call wrapper ----------------------------
@jax.jit
def simple_transformer_forward(src, params):
    # src: (B, S, FEATURE)  ->  (B, 1)
    B, S, F = src.shape
    x2d = src.reshape(B * S, F)

    args = (
        x2d, params["pe_bias"], params["emb_w"], params["wqkv"],
        params["wo_heads"], params["w1"], params["w2"], params["layer_misc"],
        params["dec_w1"], params["dec_misc"],
    )
    vmem = pl.BlockSpec(memory_space=pltpu.MemorySpace.VMEM)

    return pl.pallas_call(
        fused_transformer_kernel,
        out_shape=jax.ShapeDtypeStruct((B, 1), jnp.float32),
        in_specs=[vmem] * len(args),
        out_specs=vmem,
    )(*args)


# ----------------------------- parameter setup -------------------------------
def make_positional_encoding(seq_len, emb_dim):
    pos = jnp.arange(seq_len, dtype=jnp.float32)[:, None]            # (S, 1)
    two_i = jnp.arange(0, emb_dim, 2, dtype=jnp.float32)             # (D/2,)
    angles = pos / jnp.power(10000.0, two_i / emb_dim)               # (S, D/2)
    pe = jnp.zeros((seq_len, emb_dim), dtype=jnp.float32)
    pe = pe.at[:, 0::2].set(jnp.sin(angles))
    pe = pe.at[:, 1::2].set(jnp.cos(angles))
    return pe


def init_params(key):
    keys = jax.random.split(key, 16)
    ki = iter(keys)

    def normal(shape, scale=0.02):
        return scale * jax.random.normal(next(ki), shape, dtype=jnp.float32)

    sqrt_d = math.sqrt(EMB)
    p = {}

    # embedding Linear(F -> D); sqrt(D) scale folded into weight & bias.
    emb_w = normal((FEATURE, EMB))
    emb_b = normal((EMB,))
    p["emb_w"] = (emb_w * sqrt_d).astype(CDT)

    # positional encoding pre-tiled over batch, with scaled emb bias folded in.
    pe = make_positional_encoding(SEQ, EMB)                          # (S, D)
    p["pe_bias"] = jnp.tile(pe, (BATCH, 1)) + emb_b[None, :] * sqrt_d

    # per-layer encoder weights (bf16), packed QKV, Wo split per head.
    p["wqkv"] = normal((NUM_LAYERS, EMB, 3 * EMB)).astype(CDT)
    wo = normal((NUM_LAYERS, EMB, EMB))
    p["wo_heads"] = wo.reshape(NUM_LAYERS, NHEAD, HEAD_DIM, EMB).astype(CDT)
    p["w1"] = normal((NUM_LAYERS, EMB, FF)).astype(CDT)
    p["w2"] = normal((NUM_LAYERS, FF, EMB)).astype(CDT)

    # packed small per-layer params: rows = [bq, bk, bv, bo, g1, be1, b1, b2, g2, be2]
    p["layer_misc"] = jnp.concatenate([
        normal((NUM_LAYERS, 3, EMB)),                                # bq, bk, bv
        normal((NUM_LAYERS, 1, EMB)),                                # bo
        jnp.ones((NUM_LAYERS, 1, EMB), jnp.float32),                 # g1
        jnp.zeros((NUM_LAYERS, 1, EMB), jnp.float32),                # be1
        normal((NUM_LAYERS, 1, EMB)),                                # ffn b1
        normal((NUM_LAYERS, 1, EMB)),                                # ffn b2
        jnp.ones((NUM_LAYERS, 1, EMB), jnp.float32),                 # g2
        jnp.zeros((NUM_LAYERS, 1, EMB), jnp.float32),                # be2
    ], axis=1)                                                       # (L,10,D)

    # decoder: Linear(D,32) -> ReLU -> Linear(32,1); uniform(-0.1,0.1), zero bias
    dw1 = jax.random.uniform(next(ki), (EMB, DEC_HIDDEN), jnp.float32, -0.1, 0.1)
    dw1_pad = jnp.zeros((EMB, EMB), jnp.float32).at[:, :DEC_HIDDEN].set(dw1)
    p["dec_w1"] = dw1_pad.astype(CDT)                                # (D, 128)
    dw2 = jax.random.uniform(next(ki), (DEC_HIDDEN,), jnp.float32, -0.1, 0.1)
    dmisc = jnp.zeros((3, EMB), jnp.float32)                         # b1 / w2 / b2
    dmisc = dmisc.at[1, :DEC_HIDDEN].set(dw2)                        # dec bias = 0
    p["dec_misc"] = dmisc
    return p


# ----------------------------- main -------------------------------------------
if __name__ == "__main__":
    key = jax.random.PRNGKey(0)
    k_param, k_data = jax.random.split(key)
    params = init_params(k_param)
    src = jax.random.normal(k_data, (BATCH, SEQ, FEATURE), dtype=jnp.float32)

    out = simple_transformer_forward(src, params)
    out = jax.block_until_ready(out)
    assert out.shape == (BATCH, 1)
    assert bool(jnp.all(jnp.isfinite(out)))
    print("KERNEL_OK")
</pallas_src>

<mosaic_0001>
module attributes {stable_mosaic.version = 11 : i64} {
  func.func @fused_transformer_kernel(%arg0: memref<16x16xf32, #tpu.memory_space<vmem>>, %arg1: memref<16x128xf32, #tpu.memory_space<vmem>>, %arg2: memref<16x128xbf16, #tpu.memory_space<vmem>>, %arg3: memref<2x128x384xbf16, #tpu.memory_space<vmem>>, %arg4: memref<2x4x32x128xbf16, #tpu.memory_space<vmem>>, %arg5: memref<2x128x128xbf16, #tpu.memory_space<vmem>>, %arg6: memref<2x128x128xbf16, #tpu.memory_space<vmem>>, %arg7: memref<2x10x128xf32, #tpu.memory_space<vmem>>, %arg8: memref<128x128xbf16, #tpu.memory_space<vmem>>, %arg9: memref<3x128xf32, #tpu.memory_space<vmem>>, %arg10: memref<2x1xf32, #tpu.memory_space<vmem>>) attributes {dimension_semantics = [], scalar_prefetch = 0 : i64, scratch_operands = 0 : i64, tpu.core_type = #tpu.core_type<tc>} {
    %c0 = arith.constant 0 : index
    %c0_0 = arith.constant 0 : index
    %0 = vector.load %arg0[%c0, %c0_0] : memref<16x16xf32, #tpu.memory_space<vmem>>, vector<16x16xf32>
    %1 = arith.truncf %0 : vector<16x16xf32> to vector<16x16xbf16>
    %c0_1 = arith.constant 0 : index
    %c0_2 = arith.constant 0 : index
    %2 = vector.load %arg2[%c0_1, %c0_2] : memref<16x128xbf16, #tpu.memory_space<vmem>>, vector<16x128xbf16>
    %cst = arith.constant dense<0.000000e+00> : vector<16x128xf32>
    %3 = tpu.matmul %1, %2, %cst {dimension_numbers = #tpu.dot_dimension_numbers<[1], [0], [0], [1], [0, 0, 1, 1], [], []>} : vector<16x16xbf16>, vector<16x128xbf16>, vector<16x128xf32> -> vector<16x128xf32>
    %c0_3 = arith.constant 0 : index
    %c0_4 = arith.constant 0 : index
    %4 = vector.load %arg1[%c0_3, %c0_4] : memref<16x128xf32, #tpu.memory_space<vmem>>, vector<16x128xf32>
    %5 = arith.addf %3, %4 : vector<16x128xf32>
    %c0_5 = arith.constant 0 : index
    %c0_6 = arith.constant 0 : index
    %c0_7 = arith.constant 0 : index
    %6 = vector.load %arg7[%c0_5, %c0_6, %c0_7] : memref<2x10x128xf32, #tpu.memory_space<vmem>>, vector<1x10x128xf32>
    %7 = vector.shape_cast %6 : vector<1x10x128xf32> to vector<10x128xf32>
    %8 = arith.truncf %5 : vector<16x128xf32> to vector<16x128xbf16>
    %c0_8 = arith.constant 0 : index
    %c0_9 = arith.constant 0 : index
    %c0_10 = arith.constant 0 : index
    %9 = vector.load %arg3[%c0_8, %c0_9, %c0_10] : memref<2x128x384xbf16, #tpu.memory_space<vmem>>, vector<1x128x384xbf16>
    %10 = vector.shape_cast %9 : vector<1x128x384xbf16> to vector<128x384xbf16>
    %cst_11 = arith.constant dense<0.000000e+00> : vector<16x384xf32>
    %11 = tpu.matmul %8, %10, %cst_11 {dimension_numbers = #tpu.dot_dimension_numbers<[1], [0], [0], [1], [0, 0, 1, 1], [], []>} : vector<16x128xbf16>, vector<128x384xbf16>, vector<16x384xf32> -> vector<16x384xf32>
    %12 = vector.extract_strided_slice %11 {offsets = [0, 0], sizes = [16, 128], strides = [1, 1]} : vector<16x384xf32> to vector<16x128xf32>
    %13 = vector.extract_strided_slice %7 {offsets = [0, 0], sizes = [1, 128], strides = [1, 1]} : vector<10x128xf32> to vector<1x128xf32>
    %14 = vector.broadcast %13 : vector<1x128xf32> to vector<16x128xf32>
    %15 = arith.addf %12, %14 : vector<16x128xf32>
    %16 = vector.shape_cast %15 : vector<16x128xf32> to vector<2x8x128xf32>
    %17 = vector.extract_strided_slice %11 {offsets = [0, 128], sizes = [16, 128], strides = [1, 1]} : vector<16x384xf32> to vector<16x128xf32>
    %18 = vector.extract_strided_slice %7 {offsets = [1, 0], sizes = [1, 128], strides = [1, 1]} : vector<10x128xf32> to vector<1x128xf32>
    %19 = vector.broadcast %18 : vector<1x128xf32> to vector<16x128xf32>
    %20 = arith.addf %17, %19 : vector<16x128xf32>
    %21 = vector.shape_cast %20 : vector<16x128xf32> to vector<2x8x128xf32>
    %22 = vector.extract_strided_slice %11 {offsets = [0, 256], sizes = [16, 128], strides = [1, 1]} : vector<16x384xf32> to vector<16x128xf32>
    %23 = vector.extract_strided_slice %7 {offsets = [2, 0], sizes = [1, 128], strides = [1, 1]} : vector<10x128xf32> to vector<1x128xf32>
    %24 = vector.broadcast %23 : vector<1x128xf32> to vector<16x128xf32>
    %25 = arith.addf %22, %24 : vector<16x128xf32>
    %26 = vector.shape_cast %25 : vector<16x128xf32> to vector<2x8x128xf32>
    %27 = vector.extract_strided_slice %16 {offsets = [0, 0, 0], sizes = [2, 8, 32], strides = [1, 1, 1]} : vector<2x8x128xf32> to vector<2x8x32xf32>
    %28 = vector.extract_strided_slice %21 {offsets = [0, 0, 0], sizes = [2, 8, 32], strides = [1, 1, 1]} : vector<2x8x128xf32> to vector<2x8x32xf32>
    "tpu.trace_start"() <{level = 10 : i32, message = "bqd,bkd->bqk"}> : () -> ()
    %cst_12 = arith.constant dense<0.000000e+00> : vector<2x8x8xf32>
    %29 = tpu.matmul %27, %28, %cst_12 {dimension_numbers = #tpu.dot_dimension_numbers<[2], [2], [1], [1], [0, 0, 0, 1, 1, 1], [0], [0]>} : vector<2x8x32xf32>, vector<2x8x32xf32>, vector<2x8x8xf32> -> vector<2x8x8xf32>
    "tpu.trace_stop"() : () -> ()
    %30 = vector.extract_strided_slice %16 {offsets = [0, 0, 32], sizes = [2, 8, 32], strides = [1, 1, 1]} : vector<2x8x128xf32> to vector<2x8x32xf32>
    %31 = vector.extract_strided_slice %21 {offsets = [0, 0, 32], sizes = [2, 8, 32], strides = [1, 1, 1]} : vector<2x8x128xf32> to vector<2x8x32xf32>
    "tpu.trace_start"() <{level = 10 : i32, message = "bqd,bkd->bqk"}> : () -> ()
    %cst_13 = arith.constant dense<0.000000e+00> : vector<2x8x8xf32>
    %32 = tpu.matmul %30, %31, %cst_13 {dimension_numbers = #tpu.dot_dimension_numbers<[2], [2], [1], [1], [0, 0, 0, 1, 1, 1], [0], [0]>} : vector<2x8x32xf32>, vector<2x8x32xf32>, vector<2x8x8xf32> -> vector<2x8x8xf32>
    "tpu.trace_stop"() : () -> ()
    %33 = vector.extract_strided_slice %16 {offsets = [0, 0, 64], sizes = [2, 8, 32], strides = [1, 1, 1]} : vector<2x8x128xf32> to vector<2x8x32xf32>
    %34 = vector.extract_strided_slice %21 {offsets = [0, 0, 64], sizes = [2, 8, 32], strides = [1, 1, 1]} : vector<2x8x128xf32> to vector<2x8x32xf32>
    "tpu.trace_start"() <{level = 10 : i32, message = "bqd,bkd->bqk"}> : () -> ()
    %cst_14 = arith.constant dense<0.000000e+00> : vector<2x8x8xf32>
    %35 = tpu.matmul %33, %34, %cst_14 {dimension_numbers = #tpu.dot_dimension_numbers<[2], [2], [1], [1], [0, 0, 0, 1, 1, 1], [0], [0]>} : vector<2x8x32xf32>, vector<2x8x32xf32>, vector<2x8x8xf32> -> vector<2x8x8xf32>
    "tpu.trace_stop"() : () -> ()
    %36 = vector.extract_strided_slice %16 {offsets = [0, 0, 96], sizes = [2, 8, 32], strides = [1, 1, 1]} : vector<2x8x128xf32> to vector<2x8x32xf32>
    %37 = vector.extract_strided_slice %21 {offsets = [0, 0, 96], sizes = [2, 8, 32], strides = [1, 1, 1]} : vector<2x8x128xf32> to vector<2x8x32xf32>
    "tpu.trace_start"() <{level = 10 : i32, message = "bqd,bkd->bqk"}> : () -> ()
    %cst_15 = arith.constant dense<0.000000e+00> : vector<2x8x8xf32>
    %38 = tpu.matmul %36, %37, %cst_15 {dimension_numbers = #tpu.dot_dimension_numbers<[2], [2], [1], [1], [0, 0, 0, 1, 1, 1], [0], [0]>} : vector<2x8x32xf32>, vector<2x8x32xf32>, vector<2x8x8xf32> -> vector<2x8x8xf32>
    "tpu.trace_stop"() : () -> ()
    %39 = tpu.concatenate %29, %32, %35, %38 in 0 : vector<2x8x8xf32>, vector<2x8x8xf32>, vector<2x8x8xf32>, vector<2x8x8xf32> -> vector<8x8x8xf32>
    %cst_16 = arith.constant 0.176776692 : f32
    %40 = vector.broadcast %cst_16 : f32 to vector<8x8x8xf32>
    %41 = arith.mulf %39, %40 : vector<8x8x8xf32>
    %cst_17 = arith.constant dense<0xFF800000> : vector<8x8xf32>
    %42 = vector.multi_reduction <maximumf>, %41, %cst_17 [2] : vector<8x8x8xf32> to vector<8x8xf32>
    %43 = vector.shape_cast %42 : vector<8x8xf32> to vector<8x8x1xf32>
    %44 = vector.broadcast %43 : vector<8x8x1xf32> to vector<8x8x8xf32>
    %45 = arith.subf %41, %44 : vector<8x8x8xf32>
    %46 = math.exp %45 : vector<8x8x8xf32>
    %cst_18 = arith.constant dense<0.000000e+00> : vector<8x8xf32>
    %47 = vector.multi_reduction <add>, %46, %cst_18 [2] : vector<8x8x8xf32> to vector<8x8xf32>
    %48 = vector.shape_cast %47 : vector<8x8xf32> to vector<8x8x1xf32>
    %49 = tpu.reciprocal %48 {approx = true} : vector<8x8x1xf32> -> vector<8x8x1xf32>
    %50 = vector.broadcast %49 : vector<8x8x1xf32> to vector<8x8x8xf32>
    %51 = arith.mulf %46, %50 : vector<8x8x8xf32>
    %cst_19 = arith.constant 0.000000e+00 : f32
    %52 = vector.broadcast %cst_19 : f32 to vector<16x128xf32>
    %53 = vector.extract_strided_slice %51 {offsets = [0, 0, 0], sizes = [2, 8, 8], strides = [1, 1, 1]} : vector<8x8x8xf32> to vector<2x8x8xf32>
    %54 = vector.extract_strided_slice %26 {offsets = [0, 0, 0], sizes = [2, 8, 32], strides = [1, 1, 1]} : vector<2x8x128xf32> to vector<2x8x32xf32>
    "tpu.trace_start"() <{level = 10 : i32, message = "bqk,bkd->bqd"}> : () -> ()
    %cst_20 = arith.constant dense<0.000000e+00> : vector<2x8x32xf32>
    %55 = tpu.matmul %53, %54, %cst_20 {dimension_numbers = #tpu.dot_dimension_numbers<[2], [1], [1], [2], [0, 0, 0, 1, 1, 2], [0], [0]>} : vector<2x8x8xf32>, vector<2x8x32xf32>, vector<2x8x32xf32> -> vector<2x8x32xf32>
    "tpu.trace_stop"() : () -> ()
    %56 = vector.shape_cast %55 : vector<2x8x32xf32> to vector<16x32xf32>
    %57 = arith.truncf %56 : vector<16x32xf32> to vector<16x32xbf16>
    %c0_21 = arith.constant 0 : index
    %c0_22 = arith.constant 0 : index
    %c0_23 = arith.constant 0 : index
    %c0_24 = arith.constant 0 : index
    %58 = vector.load %arg4[%c0_21, %c0_22, %c0_23, %c0_24] : memref<2x4x32x128xbf16, #tpu.memory_space<vmem>>, vector<1x1x32x128xbf16>
    %59 = vector.shape_cast %58 : vector<1x1x32x128xbf16> to vector<32x128xbf16>
    %cst_25 = arith.constant dense<0.000000e+00> : vector<16x128xf32>
    %60 = tpu.matmul %57, %59, %cst_25 {dimension_numbers = #tpu.dot_dimension_numbers<[1], [0], [0], [1], [0, 0, 1, 1], [], []>} : vector<16x32xbf16>, vector<32x128xbf16>, vector<16x128xf32> -> vector<16x128xf32>
    %61 = arith.addf %52, %60 : vector<16x128xf32>
    %62 = vector.extract_strided_slice %51 {offsets = [2, 0, 0], sizes = [2, 8, 8], strides = [1, 1, 1]} : vector<8x8x8xf32> to vector<2x8x8xf32>
    %63 = vector.extract_strided_slice %26 {offsets = [0, 0, 32], sizes = [2, 8, 32], strides = [1, 1, 1]} : vector<2x8x128xf32> to vector<2x8x32xf32>
    "tpu.trace_start"() <{level = 10 : i32, message = "bqk,bkd->bqd"}> : () -> ()
    %cst_26 = arith.constant dense<0.000000e+00> : vector<2x8x32xf32>
    %64 = tpu.matmul %62, %63, %cst_26 {dimension_numbers = #tpu.dot_dimension_numbers<[2], [1], [1], [2], [0, 0, 0, 1, 1, 2], [0], [0]>} : vector<2x8x8xf32>, vector<2x8x32xf32>, vector<2x8x32xf32> -> vector<2x8x32xf32>
    "tpu.trace_stop"() : () -> ()
    %65 = vector.shape_cast %64 : vector<2x8x32xf32> to vector<16x32xf32>
    %66 = arith.truncf %65 : vector<16x32xf32> to vector<16x32xbf16>
    %c0_27 = arith.constant 0 : index
    %c1 = arith.constant 1 : index
    %c0_28 = arith.constant 0 : index
    %c0_29 = arith.constant 0 : index
    %67 = vector.load %arg4[%c0_27, %c1, %c0_28, %c0_29] : memref<2x4x32x128xbf16, #tpu.memory_space<vmem>>, vector<1x1x32x128xbf16>
    %68 = vector.shape_cast %67 : vector<1x1x32x128xbf16> to vector<32x128xbf16>
    %cst_30 = arith.constant dense<0.000000e+00> : vector<16x128xf32>
    %69 = tpu.matmul %66, %68, %cst_30 {dimension_numbers = #tpu.dot_dimension_numbers<[1], [0], [0], [1], [0, 0, 1, 1], [], []>} : vector<16x32xbf16>, vector<32x128xbf16>, vector<16x128xf32> -> vector<16x128xf32>
    %70 = arith.addf %61, %69 : vector<16x128xf32>
    %71 = vector.extract_strided_slice %51 {offsets = [4, 0, 0], sizes = [2, 8, 8], strides = [1, 1, 1]} : vector<8x8x8xf32> to vector<2x8x8xf32>
    %72 = vector.extract_strided_slice %26 {offsets = [0, 0, 64], sizes = [2, 8, 32], strides = [1, 1, 1]} : vector<2x8x128xf32> to vector<2x8x32xf32>
    "tpu.trace_start"() <{level = 10 : i32, message = "bqk,bkd->bqd"}> : () -> ()
    %cst_31 = arith.constant dense<0.000000e+00> : vector<2x8x32xf32>
    %73 = tpu.matmul %71, %72, %cst_31 {dimension_numbers = #tpu.dot_dimension_numbers<[2], [1], [1], [2], [0, 0, 0, 1, 1, 2], [0], [0]>} : vector<2x8x8xf32>, vector<2x8x32xf32>, vector<2x8x32xf32> -> vector<2x8x32xf32>
    "tpu.trace_stop"() : () -> ()
    %74 = vector.shape_cast %73 : vector<2x8x32xf32> to vector<16x32xf32>
    %75 = arith.truncf %74 : vector<16x32xf32> to vector<16x32xbf16>
    %c0_32 = arith.constant 0 : index
    %c2 = arith.constant 2 : index
    %c0_33 = arith.constant 0 : index
    %c0_34 = arith.constant 0 : index
    %76 = vector.load %arg4[%c0_32, %c2, %c0_33, %c0_34] : memref<2x4x32x128xbf16, #tpu.memory_space<vmem>>, vector<1x1x32x128xbf16>
    %77 = vector.shape_cast %76 : vector<1x1x32x128xbf16> to vector<32x128xbf16>
    %cst_35 = arith.constant dense<0.000000e+00> : vector<16x128xf32>
    %78 = tpu.matmul %75, %77, %cst_35 {dimension_numbers = #tpu.dot_dimension_numbers<[1], [0], [0], [1], [0, 0, 1, 1], [], []>} : vector<16x32xbf16>, vector<32x128xbf16>, vector<16x128xf32> -> vector<16x128xf32>
    %79 = arith.addf %70, %78 : vector<16x128xf32>
    %80 = vector.extract_strided_slice %51 {offsets = [6, 0, 0], sizes = [2, 8, 8], strides = [1, 1, 1]} : vector<8x8x8xf32> to vector<2x8x8xf32>
    %81 = vector.extract_strided_slice %26 {offsets = [0, 0, 96], sizes = [2, 8, 32], strides = [1, 1, 1]} : vector<2x8x128xf32> to vector<2x8x32xf32>
    "tpu.trace_start"() <{level = 10 : i32, message = "bqk,bkd->bqd"}> : () -> ()
    %cst_36 = arith.constant dense<0.000000e+00> : vector<2x8x32xf32>
    %82 = tpu.matmul %80, %81, %cst_36 {dimension_numbers = #tpu.dot_dimension_numbers<[2], [1], [1], [2], [0, 0, 0, 1, 1, 2], [0], [0]>} : vector<2x8x8xf32>, vector<2x8x32xf32>, vector<2x8x32xf32> -> vector<2x8x32xf32>
    "tpu.trace_stop"() : () -> ()
    %83 = vector.shape_cast %82 : vector<2x8x32xf32> to vector<16x32xf32>
    %84 = arith.truncf %83 : vector<16x32xf32> to vector<16x32xbf16>
    %c0_37 = arith.constant 0 : index
    %c3 = arith.constant 3 : index
    %c0_38 = arith.constant 0 : index
    %c0_39 = arith.constant 0 : index
    %85 = vector.load %arg4[%c0_37, %c3, %c0_38, %c0_39] : memref<2x4x32x128xbf16, #tpu.memory_space<vmem>>, vector<1x1x32x128xbf16>
    %86 = vector.shape_cast %85 : vector<1x1x32x128xbf16> to vector<32x128xbf16>
    %cst_40 = arith.constant dense<0.000000e+00> : vector<16x128xf32>
    %87 = tpu.matmul %84, %86, %cst_40 {dimension_numbers = #tpu.dot_dimension_numbers<[1], [0], [0], [1], [0, 0, 1, 1], [], []>} : vector<16x32xbf16>, vector<32x128xbf16>, vector<16x128xf32> -> vector<16x128xf32>
    %88 = arith.addf %79, %87 : vector<16x128xf32>
    %89 = vector.extract_strided_slice %7 {offsets = [3, 0], sizes = [1, 128], strides = [1, 1]} : vector<10x128xf32> to vector<1x128xf32>
    %90 = vector.broadcast %89 : vector<1x128xf32> to vector<16x128xf32>
    %91 = arith.addf %88, %90 : vector<16x128xf32>
    %92 = arith.addf %5, %91 : vector<16x128xf32>
    %93 = vector.extract_strided_slice %7 {offsets = [4, 0], sizes = [1, 128], strides = [1, 1]} : vector<10x128xf32> to vector<1x128xf32>
    %94 = vector.extract_strided_slice %7 {offsets = [5, 0], sizes = [1, 128], strides = [1, 1]} : vector<10x128xf32> to vector<1x128xf32>
    %cst_41 = arith.constant dense<0.000000e+00> : vector<16xf32>
    %95 = vector.multi_reduction <add>, %92, %cst_41 [1] : vector<16x128xf32> to vector<16xf32>
    %96 = vector.shape_cast %95 : vector<16xf32> to vector<16x1xf32>
    %cst_42 = arith.constant 7.812500e-03 : f32
    %97 = vector.broadcast %cst_42 : f32 to vector<16x1xf32>
    %98 = arith.mulf %96, %97 : vector<16x1xf32>
    %99 = arith.mulf %92, %92 : vector<16x128xf32>
    %cst_43 = arith.constant dense<0.000000e+00> : vector<16xf32>
    %100 = vector.multi_reduction <add>, %99, %cst_43 [1] : vector<16x128xf32> to vector<16xf32>
    %101 = vector.shape_cast %100 : vector<16xf32> to vector<16x1xf32>
    %cst_44 = arith.constant 7.812500e-03 : f32
    %102 = vector.broadcast %cst_44 : f32 to vector<16x1xf32>
    %103 = arith.mulf %101, %102 : vector<16x1xf32>
    %104 = arith.mulf %98, %98 : vector<16x1xf32>
    %105 = arith.subf %103, %104 : vector<16x1xf32>
    %106 = vector.broadcast %98 : vector<16x1xf32> to vector<16x128xf32>
    %107 = arith.subf %92, %106 : vector<16x128xf32>
    %cst_45 = arith.constant 9.99999974E-6 : f32
    %108 = vector.broadcast %cst_45 : f32 to vector<16x1xf32>
    %109 = arith.addf %105, %108 : vector<16x1xf32>
    %110 = math.rsqrt %109 : vector<16x1xf32>
    %111 = vector.broadcast %110 : vector<16x1xf32> to vector<16x128xf32>
    %112 = arith.mulf %107, %111 : vector<16x128xf32>
    %113 = vector.broadcast %93 : vector<1x128xf32> to vector<16x128xf32>
    %114 = arith.mulf %112, %113 : vector<16x128xf32>
    %115 = vector.broadcast %94 : vector<1x128xf32> to vector<16x128xf32>
    %116 = arith.addf %114, %115 : vector<16x128xf32>
    %117 = arith.truncf %116 : vector<16x128xf32> to vector<16x128xbf16>
    %c0_46 = arith.constant 0 : index
    %c0_47 = arith.constant 0 : index
    %c0_48 = arith.constant 0 : index
    %118 = vector.load %arg5[%c0_46, %c0_47, %c0_48] : memref<2x128x128xbf16, #tpu.memory_space<vmem>>, vector<1x128x128xbf16>
    %119 = vector.shape_cast %118 : vector<1x128x128xbf16> to vector<128x128xbf16>
    %cst_49 = arith.constant dense<0.000000e+00> : vector<16x128xf32>
    %120 = tpu.matmul %117, %119, %cst_49 {dimension_numbers = #tpu.dot_dimension_numbers<[1], [0], [0], [1], [0, 0, 1, 1], [], []>} : vector<16x128xbf16>, vector<128x128xbf16>, vector<16x128xf32> -> vector<16x128xf32>
    %121 = vector.extract_strided_slice %7 {offsets = [6, 0], sizes = [1, 128], strides = [1, 1]} : vector<10x128xf32> to vector<1x128xf32>
    %122 = vector.broadcast %121 : vector<1x128xf32> to vector<16x128xf32>
    %123 = arith.addf %120, %122 : vector<16x128xf32>
    %cst_50 = arith.constant 0.000000e+00 : f32
    %124 = vector.broadcast %cst_50 : f32 to vector<16x128xf32>
    %125 = arith.maximumf %123, %124 : vector<16x128xf32>
    %126 = arith.truncf %125 : vector<16x128xf32> to vector<16x128xbf16>
    %c0_51 = arith.constant 0 : index
    %c0_52 = arith.constant 0 : index
    %c0_53 = arith.constant 0 : index
    %127 = vector.load %arg6[%c0_51, %c0_52, %c0_53] : memref<2x128x128xbf16, #tpu.memory_space<vmem>>, vector<1x128x128xbf16>
    %128 = vector.shape_cast %127 : vector<1x128x128xbf16> to vector<128x128xbf16>
    %cst_54 = arith.constant dense<0.000000e+00> : vector<16x128xf32>
    %129 = tpu.matmul %126, %128, %cst_54 {dimension_numbers = #tpu.dot_dimension_numbers<[1], [0], [0], [1], [0, 0, 1, 1], [], []>} : vector<16x128xbf16>, vector<128x128xbf16>, vector<16x128xf32> -> vector<16x128xf32>
    %130 = vector.extract_strided_slice %7 {offsets = [7, 0], sizes = [1, 128], strides = [1, 1]} : vector<10x128xf32> to vector<1x128xf32>
    %131 = vector.broadcast %130 : vector<1x128xf32> to vector<16x128xf32>
    %132 = arith.addf %129, %131 : vector<16x128xf32>
    %133 = arith.addf %116, %132 : vector<16x128xf32>
    %134 = vector.extract_strided_slice %7 {offsets = [8, 0], sizes = [1, 128], strides = [1, 1]} : vector<10x128xf32> to vector<1x128xf32>
    %135 = vector.extract_strided_slice %7 {offsets = [9, 0], sizes = [1, 128], strides = [1, 1]} : vector<10x128xf32> to vector<1x128xf32>
    %cst_55 = arith.constant dense<0.000000e+00> : vector<16xf32>
    %136 = vector.multi_reduction <add>, %133, %cst_55 [1] : vector<16x128xf32> to vector<16xf32>
    %137 = vector.shape_cast %136 : vector<16xf32> to vector<16x1xf32>
    %cst_56 = arith.constant 7.812500e-03 : f32
    %138 = vector.broadcast %cst_56 : f32 to vector<16x1xf32>
    %139 = arith.mulf %137, %138 : vector<16x1xf32>
    %140 = arith.mulf %133, %133 : vector<16x128xf32>
    %cst_57 = arith.constant dense<0.000000e+00> : vector<16xf32>
    %141 = vector.multi_reduction <add>, %140, %cst_57 [1] : vector<16x128xf32> to vector<16xf32>
    %142 = vector.shape_cast %141 : vector<16xf32> to vector<16x1xf32>
    %cst_58 = arith.constant 7.812500e-03 : f32
    %143 = vector.broadcast %cst_58 : f32 to vector<16x1xf32>
    %144 = arith.mulf %142, %143 : vector<16x1xf32>
    %145 = arith.mulf %139, %139 : vector<16x1xf32>
    %146 = arith.subf %144, %145 : vector<16x1xf32>
    %147 = vector.broadcast %139 : vector<16x1xf32> to vector<16x128xf32>
    %148 = arith.subf %133, %147 : vector<16x128xf32>
    %cst_59 = arith.constant 9.99999974E-6 : f32
    %149 = vector.broadcast %cst_59 : f32 to vector<16x1xf32>
    %150 = arith.addf %146, %149 : vector<16x1xf32>
    %151 = math.rsqrt %150 : vector<16x1xf32>
    %152 = vector.broadcast %151 : vector<16x1xf32> to vector<16x128xf32>
    %153 = arith.mulf %148, %152 : vector<16x128xf32>
    %154 = vector.broadcast %134 : vector<1x128xf32> to vector<16x128xf32>
    %155 = arith.mulf %153, %154 : vector<16x128xf32>
    %156 = vector.broadcast %135 : vector<1x128xf32> to vector<16x128xf32>
    %157 = arith.addf %155, %156 : vector<16x128xf32>
    %c1_60 = arith.constant 1 : index
    %c0_61 = arith.constant 0 : index
    %c0_62 = arith.constant 0 : index
    %158 = vector.load %arg7[%c1_60, %c0_61, %c0_62] : memref<2x10x128xf32, #tpu.memory_space<vmem>>, vector<1x10x128xf32>
    %159 = vector.shape_cast %158 : vector<1x10x128xf32> to vector<10x128xf32>
    %160 = arith.truncf %157 : vector<16x128xf32> to vector<16x128xbf16>
    %c1_63 = arith.constant 1 : index
    %c0_64 = arith.constant 0 : index
    %c0_65 = arith.constant 0 : index
    %161 = vector.load %arg3[%c1_63, %c0_64, %c0_65] : memref<2x128x384xbf16, #tpu.memory_space<vmem>>, vector<1x128x384xbf16>
    %162 = vector.shape_cast %161 : vector<1x128x384xbf16> to vector<128x384xbf16>
    %cst_66 = arith.constant dense<0.000000e+00> : vector<16x384xf32>
    %163 = tpu.matmul %160, %162, %cst_66 {dimension_numbers = #tpu.dot_dimension_numbers<[1], [0], [0], [1], [0, 0, 1, 1], [], []>} : vector<16x128xbf16>, vector<128x384xbf16>, vector<16x384xf32> -> vector<16x384xf32>
    %164 = vector.extract_strided_slice %163 {offsets = [0, 0], sizes = [16, 128], strides = [1, 1]} : vector<16x384xf32> to vector<16x128xf32>
    %165 = vector.extract_strided_slice %159 {offsets = [0, 0], sizes = [1, 128], strides = [1, 1]} : vector<10x128xf32> to vector<1x128xf32>
    %166 = vector.broadcast %165 : vector<1x128xf32> to vector<16x128xf32>
    %167 = arith.addf %164, %166 : vector<16x128xf32>
    %168 = vector.shape_cast %167 : vector<16x128xf32> to vector<2x8x128xf32>
    %169 = vector.extract_strided_slice %163 {offsets = [0, 128], sizes = [16, 128], strides = [1, 1]} : vector<16x384xf32> to vector<16x128xf32>
    %170 = vector.extract_strided_slice %159 {offsets = [1, 0], sizes = [1, 128], strides = [1, 1]} : vector<10x128xf32> to vector<1x128xf32>
    %171 = vector.broadcast %170 : vector<1x128xf32> to vector<16x128xf32>
    %172 = arith.addf %169, %171 : vector<16x128xf32>
    %173 = vector.shape_cast %172 : vector<16x128xf32> to vector<2x8x128xf32>
    %174 = vector.extract_strided_slice %163 {offsets = [0, 256], sizes = [16, 128], strides = [1, 1]} : vector<16x384xf32> to vector<16x128xf32>
    %175 = vector.extract_strided_slice %159 {offsets = [2, 0], sizes = [1, 128], strides = [1, 1]} : vector<10x128xf32> to vector<1x128xf32>
    %176 = vector.broadcast %175 : vector<1x128xf32> to vector<16x128xf32>
    %177 = arith.addf %174, %176 : vector<16x128xf32>
    %178 = vector.shape_cast %177 : vector<16x128xf32> to vector<2x8x128xf32>
    %179 = vector.extract_strided_slice %168 {offsets = [0, 0, 0], sizes = [2, 8, 32], strides = [1, 1, 1]} : vector<2x8x128xf32> to vector<2x8x32xf32>
    %180 = vector.extract_strided_slice %173 {offsets = [0, 0, 0], sizes = [2, 8, 32], strides = [1, 1, 1]} : vector<2x8x128xf32> to vector<2x8x32xf32>
    "tpu.trace_start"() <{level = 10 : i32, message = "bqd,bkd->bqk"}> : () -> ()
    %cst_67 = arith.constant dense<0.000000e+00> : vector<2x8x8xf32>
    %181 = tpu.matmul %179, %180, %cst_67 {dimension_numbers = #tpu.dot_dimension_numbers<[2], [2], [1], [1], [0, 0, 0, 1, 1, 1], [0], [0]>} : vector<2x8x32xf32>, vector<2x8x32xf32>, vector<2x8x8xf32> -> vector<2x8x8xf32>
    "tpu.trace_stop"() : () -> ()
    %182 = vector.extract_strided_slice %168 {offsets = [0, 0, 32], sizes = [2, 8, 32], strides = [1, 1, 1]} : vector<2x8x128xf32> to vector<2x8x32xf32>
    %183 = vector.extract_strided_slice %173 {offsets = [0, 0, 32], sizes = [2, 8, 32], strides = [1, 1, 1]} : vector<2x8x128xf32> to vector<2x8x32xf32>
    "tpu.trace_start"() <{level = 10 : i32, message = "bqd,bkd->bqk"}> : () -> ()
    %cst_68 = arith.constant dense<0.000000e+00> : vector<2x8x8xf32>
    %184 = tpu.matmul %182, %183, %cst_68 {dimension_numbers = #tpu.dot_dimension_numbers<[2], [2], [1], [1], [0, 0, 0, 1, 1, 1], [0], [0]>} : vector<2x8x32xf32>, vector<2x8x32xf32>, vector<2x8x8xf32> -> vector<2x8x8xf32>
    "tpu.trace_stop"() : () -> ()
    %185 = vector.extract_strided_slice %168 {offsets = [0, 0, 64], sizes = [2, 8, 32], strides = [1, 1, 1]} : vector<2x8x128xf32> to vector<2x8x32xf32>
    %186 = vector.extract_strided_slice %173 {offsets = [0, 0, 64], sizes = [2, 8, 32], strides = [1, 1, 1]} : vector<2x8x128xf32> to vector<2x8x32xf32>
    "tpu.trace_start"() <{level = 10 : i32, message = "bqd,bkd->bqk"}> : () -> ()
    %cst_69 = arith.constant dense<0.000000e+00> : vector<2x8x8xf32>
    %187 = tpu.matmul %185, %186, %cst_69 {dimension_numbers = #tpu.dot_dimension_numbers<[2], [2], [1], [1], [0, 0, 0, 1, 1, 1], [0], [0]>} : vector<2x8x32xf32>, vector<2x8x32xf32>, vector<2x8x8xf32> -> vector<2x8x8xf32>
    "tpu.trace_stop"() : () -> ()
    %188 = vector.extract_strided_slice %168 {offsets = [0, 0, 96], sizes = [2, 8, 32], strides = [1, 1, 1]} : vector<2x8x128xf32> to vector<2x8x32xf32>
    %189 = vector.extract_strided_slice %173 {offsets = [0, 0, 96], sizes = [2, 8, 32], strides = [1, 1, 1]} : vector<2x8x128xf32> to vector<2x8x32xf32>
    "tpu.trace_start"() <{level = 10 : i32, message = "bqd,bkd->bqk"}> : () -> ()
    %cst_70 = arith.constant dense<0.000000e+00> : vector<2x8x8xf32>
    %190 = tpu.matmul %188, %189, %cst_70 {dimension_numbers = #tpu.dot_dimension_numbers<[2], [2], [1], [1], [0, 0, 0, 1, 1, 1], [0], [0]>} : vector<2x8x32xf32>, vector<2x8x32xf32>, vector<2x8x8xf32> -> vector<2x8x8xf32>
    "tpu.trace_stop"() : () -> ()
    %191 = tpu.concatenate %181, %184, %187, %190 in 0 : vector<2x8x8xf32>, vector<2x8x8xf32>, vector<2x8x8xf32>, vector<2x8x8xf32> -> vector<8x8x8xf32>
    %cst_71 = arith.constant 0.176776692 : f32
    %192 = vector.broadcast %cst_71 : f32 to vector<8x8x8xf32>
    %193 = arith.mulf %191, %192 : vector<8x8x8xf32>
    %cst_72 = arith.constant dense<0xFF800000> : vector<8x8xf32>
    %194 = vector.multi_reduction <maximumf>, %193, %cst_72 [2] : vector<8x8x8xf32> to vector<8x8xf32>
    %195 = vector.shape_cast %194 : vector<8x8xf32> to vector<8x8x1xf32>
    %196 = vector.broadcast %195 : vector<8x8x1xf32> to vector<8x8x8xf32>
    %197 = arith.subf %193, %196 : vector<8x8x8xf32>
    %198 = math.exp %197 : vector<8x8x8xf32>
    %cst_73 = arith.constant dense<0.000000e+00> : vector<8x8xf32>
    %199 = vector.multi_reduction <add>, %198, %cst_73 [2] : vector<8x8x8xf32> to vector<8x8xf32>
    %200 = vector.shape_cast %199 : vector<8x8xf32> to vector<8x8x1xf32>
    %201 = tpu.reciprocal %200 {approx = true} : vector<8x8x1xf32> -> vector<8x8x1xf32>
    %202 = vector.broadcast %201 : vector<8x8x1xf32> to vector<8x8x8xf32>
    %203 = arith.mulf %198, %202 : vector<8x8x8xf32>
    %cst_74 = arith.constant 0.000000e+00 : f32
    %204 = vector.broadcast %cst_74 : f32 to vector<16x128xf32>
    %205 = vector.extract_strided_slice %203 {offsets = [0, 0, 0], sizes = [2, 8, 8], strides = [1, 1, 1]} : vector<8x8x8xf32> to vector<2x8x8xf32>
    %206 = vector.extract_strided_slice %178 {offsets = [0, 0, 0], sizes = [2, 8, 32], strides = [1, 1, 1]} : vector<2x8x128xf32> to vector<2x8x32xf32>
    "tpu.trace_start"() <{level = 10 : i32, message = "bqk,bkd->bqd"}> : () -> ()
    %cst_75 = arith.constant dense<0.000000e+00> : vector<2x8x32xf32>
    %207 = tpu.matmul %205, %206, %cst_75 {dimension_numbers = #tpu.dot_dimension_numbers<[2], [1], [1], [2], [0, 0, 0, 1, 1, 2], [0], [0]>} : vector<2x8x8xf32>, vector<2x8x32xf32>, vector<2x8x32xf32> -> vector<2x8x32xf32>
    "tpu.trace_stop"() : () -> ()
    %208 = vector.shape_cast %207 : vector<2x8x32xf32> to vector<16x32xf32>
    %209 = arith.truncf %208 : vector<16x32xf32> to vector<16x32xbf16>
    %c1_76 = arith.constant 1 : index
    %c0_77 = arith.constant 0 : index
    %c0_78 = arith.constant 0 : index
    %c0_79 = arith.constant 0 : index
    %210 = vector.load %arg4[%c1_76, %c0_77, %c0_78, %c0_79] : memref<2x4x32x128xbf16, #tpu.memory_space<vmem>>, vector<1x1x32x128xbf16>
    %211 = vector.shape_cast %210 : vector<1x1x32x128xbf16> to vector<32x128xbf16>
    %cst_80 = arith.constant dense<0.000000e+00> : vector<16x128xf32>
    %212 = tpu.matmul %209, %211, %cst_80 {dimension_numbers = #tpu.dot_dimension_numbers<[1], [0], [0], [1], [0, 0, 1, 1], [], []>} : vector<16x32xbf16>, vector<32x128xbf16>, vector<16x128xf32> -> vector<16x128xf32>
    %213 = arith.addf %204, %212 : vector<16x128xf32>
    %214 = vector.extract_strided_slice %203 {offsets = [2, 0, 0], sizes = [2, 8, 8], strides = [1, 1, 1]} : vector<8x8x8xf32> to vector<2x8x8xf32>
    %215 = vector.extract_strided_slice %178 {offsets = [0, 0, 32], sizes = [2, 8, 32], strides = [1, 1, 1]} : vector<2x8x128xf32> to vector<2x8x32xf32>
    "tpu.trace_start"() <{level = 10 : i32, message = "bqk,bkd->bqd"}> : () -> ()
    %cst_81 = arith.constant dense<0.000000e+00> : vector<2x8x32xf32>
    %216 = tpu.matmul %214, %215, %cst_81 {dimension_numbers = #tpu.dot_dimension_numbers<[2], [1], [1], [2], [0, 0, 0, 1, 1, 2], [0], [0]>} : vector<2x8x8xf32>, vector<2x8x32xf32>, vector<2x8x32xf32> -> vector<2x8x32xf32>
    "tpu.trace_stop"() : () -> ()
    %217 = vector.shape_cast %216 : vector<2x8x32xf32> to vector<16x32xf32>
    %218 = arith.truncf %217 : vector<16x32xf32> to vector<16x32xbf16>
    %c1_82 = arith.constant 1 : index
    %c1_83 = arith.constant 1 : index
    %c0_84 = arith.constant 0 : index
    %c0_85 = arith.constant 0 : index
    %219 = vector.load %arg4[%c1_82, %c1_83, %c0_84, %c0_85] : memref<2x4x32x128xbf16, #tpu.memory_space<vmem>>, vector<1x1x32x128xbf16>
    %220 = vector.shape_cast %219 : vector<1x1x32x128xbf16> to vector<32x128xbf16>
    %cst_86 = arith.constant dense<0.000000e+00> : vector<16x128xf32>
    %221 = tpu.matmul %218, %220, %cst_86 {dimension_numbers = #tpu.dot_dimension_numbers<[1], [0], [0], [1], [0, 0, 1, 1], [], []>} : vector<16x32xbf16>, vector<32x128xbf16>, vector<16x128xf32> -> vector<16x128xf32>
    %222 = arith.addf %213, %221 : vector<16x128xf32>
    %223 = vector.extract_strided_slice %203 {offsets = [4, 0, 0], sizes = [2, 8, 8], strides = [1, 1, 1]} : vector<8x8x8xf32> to vector<2x8x8xf32>
    %224 = vector.extract_strided_slice %178 {offsets = [0, 0, 64], sizes = [2, 8, 32], strides = [1, 1, 1]} : vector<2x8x128xf32> to vector<2x8x32xf32>
    "tpu.trace_start"() <{level = 10 : i32, message = "bqk,bkd->bqd"}> : () -> ()
    %cst_87 = arith.constant dense<0.000000e+00> : vector<2x8x32xf32>
    %225 = tpu.matmul %223, %224, %cst_87 {dimension_numbers = #tpu.dot_dimension_numbers<[2], [1], [1], [2], [0, 0, 0, 1, 1, 2], [0], [0]>} : vector<2x8x8xf32>, vector<2x8x32xf32>, vector<2x8x32xf32> -> vector<2x8x32xf32>
    "tpu.trace_stop"() : () -> ()
    %226 = vector.shape_cast %225 : vector<2x8x32xf32> to vector<16x32xf32>
    %227 = arith.truncf %226 : vector<16x32xf32> to vector<16x32xbf16>
    %c1_88 = arith.constant 1 : index
    %c2_89 = arith.constant 2 : index
    %c0_90 = arith.constant 0 : index
    %c0_91 = arith.constant 0 : index
    %228 = vector.load %arg4[%c1_88, %c2_89, %c0_90, %c0_91] : memref<2x4x32x128xbf16, #tpu.memory_space<vmem>>, vector<1x1x32x128xbf16>
    %229 = vector.shape_cast %228 : vector<1x1x32x128xbf16> to vector<32x128xbf16>
    %cst_92 = arith.constant dense<0.000000e+00> : vector<16x128xf32>
    %230 = tpu.matmul %227, %229, %cst_92 {dimension_numbers = #tpu.dot_dimension_numbers<[1], [0], [0], [1], [0, 0, 1, 1], [], []>} : vector<16x32xbf16>, vector<32x128xbf16>, vector<16x128xf32> -> vector<16x128xf32>
    %231 = arith.addf %222, %230 : vector<16x128xf32>
    %232 = vector.extract_strided_slice %203 {offsets = [6, 0, 0], sizes = [2, 8, 8], strides = [1, 1, 1]} : vector<8x8x8xf32> to vector<2x8x8xf32>
    %233 = vector.extract_strided_slice %178 {offsets = [0, 0, 96], sizes = [2, 8, 32], strides = [1, 1, 1]} : vector<2x8x128xf32> to vector<2x8x32xf32>
    "tpu.trace_start"() <{level = 10 : i32, message = "bqk,bkd->bqd"}> : () -> ()
    %cst_93 = arith.constant dense<0.000000e+00> : vector<2x8x32xf32>
    %234 = tpu.matmul %232, %233, %cst_93 {dimension_numbers = #tpu.dot_dimension_numbers<[2], [1], [1], [2], [0, 0, 0, 1, 1, 2], [0], [0]>} : vector<2x8x8xf32>, vector<2x8x32xf32>, vector<2x8x32xf32> -> vector<2x8x32xf32>
    "tpu.trace_stop"() : () -> ()
    %235 = vector.shape_cast %234 : vector<2x8x32xf32> to vector<16x32xf32>
    %236 = arith.truncf %235 : vector<16x32xf32> to vector<16x32xbf16>
    %c1_94 = arith.constant 1 : index
    %c3_95 = arith.constant 3 : index
    %c0_96 = arith.constant 0 : index
    %c0_97 = arith.constant 0 : index
    %237 = vector.load %arg4[%c1_94, %c3_95, %c0_96, %c0_97] : memref<2x4x32x128xbf16, #tpu.memory_space<vmem>>, vector<1x1x32x128xbf16>
    %238 = vector.shape_cast %237 : vector<1x1x32x128xbf16> to vector<32x128xbf16>
    %cst_98 = arith.constant dense<0.000000e+00> : vector<16x128xf32>
    %239 = tpu.matmul %236, %238, %cst_98 {dimension_numbers = #tpu.dot_dimension_numbers<[1], [0], [0], [1], [0, 0, 1, 1], [], []>} : vector<16x32xbf16>, vector<32x128xbf16>, vector<16x128xf32> -> vector<16x128xf32>
    %240 = arith.addf %231, %239 : vector<16x128xf32>
    %241 = vector.extract_strided_slice %159 {offsets = [3, 0], sizes = [1, 128], strides = [1, 1]} : vector<10x128xf32> to vector<1x128xf32>
    %242 = vector.broadcast %241 : vector<1x128xf32> to vector<16x128xf32>
    %243 = arith.addf %240, %242 : vector<16x128xf32>
    %244 = arith.addf %157, %243 : vector<16x128xf32>
    %245 = vector.extract_strided_slice %159 {offsets = [4, 0], sizes = [1, 128], strides = [1, 1]} : vector<10x128xf32> to vector<1x128xf32>
    %246 = vector.extract_strided_slice %159 {offsets = [5, 0], sizes = [1, 128], strides = [1, 1]} : vector<10x128xf32> to vector<1x128xf32>
    %cst_99 = arith.constant dense<0.000000e+00> : vector<16xf32>
    %247 = vector.multi_reduction <add>, %244, %cst_99 [1] : vector<16x128xf32> to vector<16xf32>
    %248 = vector.shape_cast %247 : vector<16xf32> to vector<16x1xf32>
    %cst_100 = arith.constant 7.812500e-03 : f32
    %249 = vector.broadcast %cst_100 : f32 to vector<16x1xf32>
    %250 = arith.mulf %248, %249 : vector<16x1xf32>
    %251 = arith.mulf %244, %244 : vector<16x128xf32>
    %cst_101 = arith.constant dense<0.000000e+00> : vector<16xf32>
    %252 = vector.multi_reduction <add>, %251, %cst_101 [1] : vector<16x128xf32> to vector<16xf32>
    %253 = vector.shape_cast %252 : vector<16xf32> to vector<16x1xf32>
    %cst_102 = arith.constant 7.812500e-03 : f32
    %254 = vector.broadcast %cst_102 : f32 to vector<16x1xf32>
    %255 = arith.mulf %253, %254 : vector<16x1xf32>
    %256 = arith.mulf %250, %250 : vector<16x1xf32>
    %257 = arith.subf %255, %256 : vector<16x1xf32>
    %258 = vector.broadcast %250 : vector<16x1xf32> to vector<16x128xf32>
    %259 = arith.subf %244, %258 : vector<16x128xf32>
    %cst_103 = arith.constant 9.99999974E-6 : f32
    %260 = vector.broadcast %cst_103 : f32 to vector<16x1xf32>
    %261 = arith.addf %257, %260 : vector<16x1xf32>
    %262 = math.rsqrt %261 : vector<16x1xf32>
    %263 = vector.broadcast %262 : vector<16x1xf32> to vector<16x128xf32>
    %264 = arith.mulf %259, %263 : vector<16x128xf32>
    %265 = vector.broadcast %245 : vector<1x128xf32> to vector<16x128xf32>
    %266 = arith.mulf %264, %265 : vector<16x128xf32>
    %267 = vector.broadcast %246 : vector<1x128xf32> to vector<16x128xf32>
    %268 = arith.addf %266, %267 : vector<16x128xf32>
    %269 = arith.truncf %268 : vector<16x128xf32> to vector<16x128xbf16>
    %c1_104 = arith.constant 1 : index
    %c0_105 = arith.constant 0 : index
    %c0_106 = arith.constant 0 : index
    %270 = vector.load %arg5[%c1_104, %c0_105, %c0_106] : memref<2x128x128xbf16, #tpu.memory_space<vmem>>, vector<1x128x128xbf16>
    %271 = vector.shape_cast %270 : vector<1x128x128xbf16> to vector<128x128xbf16>
    %cst_107 = arith.constant dense<0.000000e+00> : vector<16x128xf32>
    %272 = tpu.matmul %269, %271, %cst_107 {dimension_numbers = #tpu.dot_dimension_numbers<[1], [0], [0], [1], [0, 0, 1, 1], [], []>} : vector<16x128xbf16>, vector<128x128xbf16>, vector<16x128xf32> -> vector<16x128xf32>
    %273 = vector.extract_strided_slice %159 {offsets = [6, 0], sizes = [1, 128], strides = [1, 1]} : vector<10x128xf32> to vector<1x128xf32>
    %274 = vector.broadcast %273 : vector<1x128xf32> to vector<16x128xf32>
    %275 = arith.addf %272, %274 : vector<16x128xf32>
    %cst_108 = arith.constant 0.000000e+00 : f32
    %276 = vector.broadcast %cst_108 : f32 to vector<16x128xf32>
    %277 = arith.maximumf %275, %276 : vector<16x128xf32>
    %278 = arith.truncf %277 : vector<16x128xf32> to vector<16x128xbf16>
    %c1_109 = arith.constant 1 : index
    %c0_110 = arith.constant 0 : index
    %c0_111 = arith.constant 0 : index
    %279 = vector.load %arg6[%c1_109, %c0_110, %c0_111] : memref<2x128x128xbf16, #tpu.memory_space<vmem>>, vector<1x128x128xbf16>
    %280 = vector.shape_cast %279 : vector<1x128x128xbf16> to vector<128x128xbf16>
    %cst_112 = arith.constant dense<0.000000e+00> : vector<16x128xf32>
    %281 = tpu.matmul %278, %280, %cst_112 {dimension_numbers = #tpu.dot_dimension_numbers<[1], [0], [0], [1], [0, 0, 1, 1], [], []>} : vector<16x128xbf16>, vector<128x128xbf16>, vector<16x128xf32> -> vector<16x128xf32>
    %282 = vector.extract_strided_slice %159 {offsets = [7, 0], sizes = [1, 128], strides = [1, 1]} : vector<10x128xf32> to vector<1x128xf32>
    %283 = vector.broadcast %282 : vector<1x128xf32> to vector<16x128xf32>
    %284 = arith.addf %281, %283 : vector<16x128xf32>
    %285 = arith.addf %268, %284 : vector<16x128xf32>
    %286 = vector.extract_strided_slice %159 {offsets = [8, 0], sizes = [1, 128], strides = [1, 1]} : vector<10x128xf32> to vector<1x128xf32>
    %287 = vector.extract_strided_slice %159 {offsets = [9, 0], sizes = [1, 128], strides = [1, 1]} : vector<10x128xf32> to vector<1x128xf32>
    %cst_113 = arith.constant dense<0.000000e+00> : vector<16xf32>
    %288 = vector.multi_reduction <add>, %285, %cst_113 [1] : vector<16x128xf32> to vector<16xf32>
    %289 = vector.shape_cast %288 : vector<16xf32> to vector<16x1xf32>
    %cst_114 = arith.constant 7.812500e-03 : f32
    %290 = vector.broadcast %cst_114 : f32 to vector<16x1xf32>
    %291 = arith.mulf %289, %290 : vector<16x1xf32>
    %292 = arith.mulf %285, %285 : vector<16x128xf32>
    %cst_115 = arith.constant dense<0.000000e+00> : vector<16xf32>
    %293 = vector.multi_reduction <add>, %292, %cst_115 [1] : vector<16x128xf32> to vector<16xf32>
    %294 = vector.shape_cast %293 : vector<16xf32> to vector<16x1xf32>
    %cst_116 = arith.constant 7.812500e-03 : f32
    %295 = vector.broadcast %cst_116 : f32 to vector<16x1xf32>
    %296 = arith.mulf %294, %295 : vector<16x1xf32>
    %297 = arith.mulf %291, %291 : vector<16x1xf32>
    %298 = arith.subf %296, %297 : vector<16x1xf32>
    %299 = vector.broadcast %291 : vector<16x1xf32> to vector<16x128xf32>
    %300 = arith.subf %285, %299 : vector<16x128xf32>
    %cst_117 = arith.constant 9.99999974E-6 : f32
    %301 = vector.broadcast %cst_117 : f32 to vector<16x1xf32>
    %302 = arith.addf %298, %301 : vector<16x1xf32>
    %303 = math.rsqrt %302 : vector<16x1xf32>
    %304 = vector.broadcast %303 : vector<16x1xf32> to vector<16x128xf32>
    %305 = arith.mulf %300, %304 : vector<16x128xf32>
    %306 = vector.broadcast %286 : vector<1x128xf32> to vector<16x128xf32>
    %307 = arith.mulf %305, %306 : vector<16x128xf32>
    %308 = vector.broadcast %287 : vector<1x128xf32> to vector<16x128xf32>
    %309 = arith.addf %307, %308 : vector<16x128xf32>
    %c0_118 = arith.constant 0 : index
    %c0_119 = arith.constant 0 : index
    %310 = vector.load %arg9[%c0_118, %c0_119] : memref<3x128xf32, #tpu.memory_space<vmem>>, vector<3x128xf32>
    %311 = arith.truncf %309 : vector<16x128xf32> to vector<16x128xbf16>
    %c0_120 = arith.constant 0 : index
    %c0_121 = arith.constant 0 : index
    %312 = vector.load %arg8[%c0_120, %c0_121] : memref<128x128xbf16, #tpu.memory_space<vmem>>, vector<128x128xbf16>
    %cst_122 = arith.constant dense<0.000000e+00> : vector<16x128xf32>
    %313 = tpu.matmul %311, %312, %cst_122 {dimension_numbers = #tpu.dot_dimension_numbers<[1], [0], [0], [1], [0, 0, 1, 1], [], []>} : vector<16x128xbf16>, vector<128x128xbf16>, vector<16x128xf32> -> vector<16x128xf32>
    %314 = vector.extract_strided_slice %310 {offsets = [0, 0], sizes = [1, 128], strides = [1, 1]} : vector<3x128xf32> to vector<1x128xf32>
    %315 = vector.broadcast %314 : vector<1x128xf32> to vector<16x128xf32>
    %316 = arith.addf %313, %315 : vector<16x128xf32>
    %cst_123 = arith.constant 0.000000e+00 : f32
    %317 = vector.broadcast %cst_123 : f32 to vector<16x128xf32>
    %318 = arith.maximumf %316, %317 : vector<16x128xf32>
    %319 = vector.shape_cast %318 : vector<16x128xf32> to vector<2x8x128xf32>
    %cst_124 = arith.constant dense<0.000000e+00> : vector<2x128xf32>
    %320 = vector.multi_reduction <add>, %319, %cst_124 [1] : vector<2x8x128xf32> to vector<2x128xf32>
    %cst_125 = arith.constant 8.000000e+00 : f32
    %321 = vector.broadcast %cst_125 : f32 to vector<2x128xf32>
    %322 = arith.divf %320, %321 : vector<2x128xf32>
    %323 = vector.extract_strided_slice %310 {offsets = [1, 0], sizes = [1, 128], strides = [1, 1]} : vector<3x128xf32> to vector<1x128xf32>
    %324 = vector.broadcast %323 : vector<1x128xf32> to vector<2x128xf32>
    %325 = arith.mulf %322, %324 : vector<2x128xf32>
    %cst_126 = arith.constant dense<0.000000e+00> : vector<2xf32>
    %326 = vector.multi_reduction <add>, %325, %cst_126 [1] : vector<2x128xf32> to vector<2xf32>
    %327 = vector.shape_cast %326 : vector<2xf32> to vector<2x1xf32>
    %328 = vector.extract_strided_slice %310 {offsets = [2, 0], sizes = [1, 1], strides = [1, 1]} : vector<3x128xf32> to vector<1x1xf32>
    %329 = vector.broadcast %328 : vector<1x1xf32> to vector<2x1xf32>
    %330 = arith.addf %327, %329 : vector<2x1xf32>
    %c0_127 = arith.constant 0 : index
    %c0_128 = arith.constant 0 : index
    %331 = vector.load %arg10[%c0_127, %c0_128] : memref<2x1xf32, #tpu.memory_space<vmem>>, vector<2x1xf32>
    tpu.vector_store %arg10[%c0_127, %c0_128], %330 {strides = array<i32>} : memref<2x1xf32, #tpu.memory_space<vmem>>, vector<2x1xf32>,
    return
  }
}

</mosaic_0001>

<llo_original>
// kernel: simple_transformer_forward.1
$region0: #{simple_transformer_forward.1}
  #allocation0 [shape = 'u32[]', space=smem, size = 0x4, offset = 0x4, fixed_abs, tag = 'smem constant byte address 0x4 - core index']
  #allocation1 [shape = 'u32[144,128]{1,0:T(1,128)}', space=vmem, size = 0x12000, scoped, tag = 'internal scratch']
  %s0 = inlined_call_operand.vmem [shape: f32[16,16], index: 0, kind: input, shape index: {}]
  %s1 = inlined_call_operand.vmem [shape: f32[16,128], index: 1, kind: input, shape index: {}]
  %s2 = inlined_call_operand.vmem [shape: bf16[16,128], index: 2, kind: input, shape index: {}]
  %s3 = inlined_call_operand.hbm [shape: bf16[2,128,384], index: 3, kind: input, shape index: {}]
  %s4 = inlined_call_operand.hbm [shape: bf16[2,4,32,128], index: 4, kind: input, shape index: {}]
  %s5 = inlined_call_operand.hbm [shape: bf16[2,128,128], index: 5, kind: input, shape index: {}]
  %s6 = inlined_call_operand.hbm [shape: bf16[2,128,128], index: 6, kind: input, shape index: {}]
  %s7 = inlined_call_operand.vmem [shape: f32[2,10,128], index: 7, kind: input, shape index: {}]
  %s8 = inlined_call_operand.hbm [shape: bf16[128,128], index: 8, kind: input, shape index: {}]
  %s9 = inlined_call_operand.vmem [shape: f32[3,128], index: 9, kind: input, shape index: {}]
  %s10 = inlined_call_operand.vmem [shape: f32[2,1], index: 10, kind: output, shape index: {}]
  %s11 = sld [smem:[#allocation0]]
  $region70: #{simple_transformer_forward.1} parent=0
    _
  %s13 = ssub.s32 1, %s11
  %s14 = scalar_select 0, %s13, %s11
  $region1: #{simple_transformer_forward.1} parent=0
    #allocation2 [shape = 'u8[196608]{0}', space=vmem, size = 0x30000, scoped, tag = 'input window, operand 3, single buffered']
    #allocation3 [shape = 's32[1]{0}', space=sflag, size = 0x4, scoped, tag = 'scoped memory for simple_transformer_forward.1']
    #allocation4 [shape = 'u8[65536]{0}', space=vmem, size = 0x10000, scoped, tag = 'input window, operand 4, single buffered']
    #allocation5 [shape = 's32[1]{0}', space=sflag, size = 0x4, scoped, tag = 'scoped memory for simple_transformer_forward.1']
    #allocation6 [shape = 'u8[65536]{0}', space=vmem, size = 0x10000, scoped, tag = 'input window, operand 5, single buffered']
    #allocation7 [shape = 'u8[65536]{0}', space=vmem, size = 0x10000, scoped, tag = 'input window, operand 6, single buffered']
    #allocation8 [shape = 's32[1]{0}', space=sflag, size = 0x4, scoped, tag = 'scoped memory for simple_transformer_forward.1']
    #allocation9 [shape = 'u8[32768]{0}', space=vmem, size = 0x8000, scoped, tag = 'input window, operand 8, single buffered']
    %15 = vsyncpa [#allocation3], 0
    %16 = vsyncpa [#allocation5], 0
    %17 = vsyncpa [#allocation8], 0
    // Predicated region
    $region2: #{simple_transformer_forward.1} parent=1 // pred_check
      _
    $region3: #{simple_transformer_forward.1} parent=1 // pred_check_branch
      %19 = sbr.rel (0) target = $region5
    $region4: #{simple_transformer_forward.1} parent=1 // pred_region
      _
    $region5: #{simple_transformer_forward.1} parent=1 // pred_fallthru
      _
    // Predicated region
    $region6: #{simple_transformer_forward.1} parent=1 // pred_check
      _
    $region7: #{simple_transformer_forward.1} parent=1 // pred_check_branch
      %21 = sbr.rel (0) target = $region9
    $region8: #{simple_transformer_forward.1} parent=1 // pred_region
      _
    $region9: #{simple_transformer_forward.1} parent=1 // pred_fallthru
      _
    // Predicated region
    $region10: #{simple_transformer_forward.1} parent=1 // pred_check
      _
    $region11: #{simple_transformer_forward.1} parent=1 // pred_check_branch
      %23 = sbr.rel (0) target = $region13
    $region12: #{simple_transformer_forward.1} parent=1 // pred_region
      _
    $region13: #{simple_transformer_forward.1} parent=1 // pred_fallthru
      _
    // Predicated region
    $region14: #{simple_transformer_forward.1} parent=1 // pred_check
      _
    $region15: #{simple_transformer_forward.1} parent=1 // pred_check_branch
      %25 = sbr.rel (0) target = $region17
    $region16: #{simple_transformer_forward.1} parent=1 // pred_region
      %s27 = ssub.s32 6144, 6144
      %28 = vsyncadd [#allocation3], %s27
      %s29 = sshll.u32 [#allocation2], 4
      %s30 = int_to_ptr.vmem [resolvable:$true] %s29
      %35 = dma.hbm_to_vmem [thread:$0]  %s3, 6144, %s30, [#allocation3], 192, 192, 12
    $region17: #{simple_transformer_forward.1} parent=1 // pred_fallthru
      _
    // Predicated region
    $region18: #{simple_transformer_forward.1} parent=1 // pred_check
      _
    $region19: #{simple_transformer_forward.1} parent=1 // pred_check_branch
      %37 = sbr.rel (0) target = $region21
    $region20: #{simple_transformer_forward.1} parent=1 // pred_region
      %s39 = ssub.s32 2048, 2048
      %40 = vsyncadd [#allocation5], %s39
      %s41 = sshll.u32 [#allocation4], 4
      %s42 = int_to_ptr.vmem [resolvable:$true] %s41
      %47 = dma.hbm_to_vmem [thread:$0]  %s4, 2048, %s42, [#allocation5], 64, 64, 4
    $region21: #{simple_transformer_forward.1} parent=1 // pred_fallthru
      _
    // Predicated region
    $region22: #{simple_transformer_forward.1} parent=1 // pred_check
      _
    $region23: #{simple_transformer_forward.1} parent=1 // pred_check_branch
      %49 = sbr.rel (0) target = $region25
    $region24: #{simple_transformer_forward.1} parent=1 // pred_region
      %s51 = ssub.s32 2048, 2048
      %52 = vsyncadd [#allocation5], %s51
      %s53 = sshll.u32 [#allocation6], 4
      %s54 = int_to_ptr.vmem [resolvable:$true] %s53
      %59 = dma.hbm_to_vmem [thread:$0]  %s5, 2048, %s54, [#allocation5], 64, 64, 4
    $region25: #{simple_transformer_forward.1} parent=1 // pred_fallthru
      _
    // Predicated region
    $region26: #{simple_transformer_forward.1} parent=1 // pred_check
      _
    $region27: #{simple_transformer_forward.1} parent=1 // pred_check_branch
      %61 = sbr.rel (0) target = $region29
    $region28: #{simple_transformer_forward.1} parent=1 // pred_region
      %s63 = ssub.s32 2048, 2048
      %64 = vsyncadd [#allocation8], %s63
      %s65 = sshll.u32 [#allocation7], 4
      %s66 = int_to_ptr.vmem [resolvable:$true] %s65
      %71 = dma.hbm_to_vmem [thread:$0]  %s6, 2048, %s66, [#allocation8], 64, 64, 4
    $region29: #{simple_transformer_forward.1} parent=1 // pred_fallthru
      _
    // Predicated region
    $region30: #{simple_transformer_forward.1} parent=1 // pred_check
      _
    $region31: #{simple_transformer_forward.1} parent=1 // pred_check_branch
      %73 = sbr.rel (0) target = $region33
    $region32: #{simple_transformer_forward.1} parent=1 // pred_region
      _
    $region33: #{simple_transformer_forward.1} parent=1 // pred_fallthru
      _
    // Predicated region
    $region34: #{simple_transformer_forward.1} parent=1 // pred_check
      _
    $region35: #{simple_transformer_forward.1} parent=1 // pred_check_branch
      %75 = sbr.rel (0) target = $region37
    $region36: #{simple_transformer_forward.1} parent=1 // pred_region
      %s77 = ssub.s32 1024, 1024
      %78 = vsyncadd [#allocation8], %s77
      %s79 = sshll.u32 [#allocation9], 4
      %s80 = int_to_ptr.vmem [resolvable:$true] %s79
      %85 = dma.hbm_to_vmem [thread:$0]  %s8, 1024, %s80, [#allocation8], 64, 64, 4
    $region37: #{simple_transformer_forward.1} parent=1 // pred_fallthru
      _
    // Predicated region
    $region38: #{simple_transformer_forward.1} parent=1 // pred_check
      _
    $region39: #{simple_transformer_forward.1} parent=1 // pred_check_branch
      %87 = sbr.rel (0) target = $region41
    $region40: #{simple_transformer_forward.1} parent=1 // pred_region
      _
    $region41: #{simple_transformer_forward.1} parent=1 // pred_fallthru
      _
    // Predicated region
    $region42: #{simple_transformer_forward.1} parent=1 // pred_check
      _
    $region43: #{simple_transformer_forward.1} parent=1 // pred_check_branch
      %89 = sbr.rel (0) target = $region45
    $region44: #{simple_transformer_forward.1} parent=1 // pred_region
      %90 = dma.done [#allocation3], 6144
    $region45: #{simple_transformer_forward.1} parent=1 // pred_fallthru
      _
    // Predicated region
    $region46: #{simple_transformer_forward.1} parent=1 // pred_check
      _
    $region47: #{simple_transformer_forward.1} parent=1 // pred_check_branch
      %92 = sbr.rel (0) target = $region49
    $region48: #{simple_transformer_forward.1} parent=1 // pred_region
      %93 = dma.done [#allocation5], 2048
    $region49: #{simple_transformer_forward.1} parent=1 // pred_fallthru
      _
    // Predicated region
    $region50: #{simple_transformer_forward.1} parent=1 // pred_check
      _
    $region51: #{simple_transformer_forward.1} parent=1 // pred_check_branch
      %95 = sbr.rel (0) target = $region53
    $region52: #{simple_transformer_forward.1} parent=1 // pred_region
      %96 = dma.done [#allocation5], 2048
    $region53: #{simple_transformer_forward.1} parent=1 // pred_fallthru
      _
    // Predicated region
    $region54: #{simple_transformer_forward.1} parent=1 // pred_check
      _
    $region55: #{simple_transformer_forward.1} parent=1 // pred_check_branch
      %98 = sbr.rel (0) target = $region57
    $region56: #{simple_transformer_forward.1} parent=1 // pred_region
      %99 = dma.done [#allocation8], 2048
    $region57: #{simple_transformer_forward.1} parent=1 // pred_fallthru
      _
    // Predicated region
    $region58: #{simple_transformer_forward.1} parent=1 // pred_check
      _
    $region59: #{simple_transformer_forward.1} parent=1 // pred_check_branch
      %101 = sbr.rel (0) target = $region61
    $region60: #{simple_transformer_forward.1} parent=1 // pred_region
      %102 = dma.done [#allocation8], 1024
    $region61: #{simple_transformer_forward.1} parent=1 // pred_fallthru
      _
    %v104 = vld [vmem:[%s0] sm:$0xff]
    %v105 = vld [vmem:[%s0 + $0x8] sm:$0xff]
    %v106 = vpack.c.bf16 %v105, %v104
    %v107 = vld [vmem:[%s2] sm:$0xf]
    %v108 = vld [vmem:[%s2 + $0x4] sm:$0xf]
    %v109 = vld [vmem:[%s1] sm:$0xff]
    %v110 = vld [vmem:[%s1 + $0x8] sm:$0xff]
    %v113 = vunpack.c.l.b16 %v107
    %v114 = vunpack.c.l.b16 %v108
    %v115 = vpack.c.b16 %v114, %v113
    %vm117 = vcmask 130048
    %v119 = vsel %vm117, %v106, 0
    %121 = vmatprep.subr.bf16.mxu0 0
    %122 = vmatpush1.bf16.msra.mxu0 0
    %123 = vmatprep.subr.bf16.mxu0 0
    %124 = vmatpush1.bf16.msra.mxu0 0
    %125 = vmatprep.subr.bf16.mxu0 0
    %126 = vmatpush1.bf16.msra.mxu0 0
    %127 = vmatprep.subr.bf16.mxu0 0
    %128 = vmatpush1.bf16.msra.mxu0 0
    %129 = vmatprep.subr.bf16.mxu0 0
    %130 = vmatpush1.bf16.msra.mxu0 0
    %131 = vmatprep.subr.bf16.mxu0 0
    %132 = vmatpush1.bf16.msra.mxu0 0
    %133 = vmatprep.subr.bf16.mxu0 0
    %134 = vmatpush1.bf16.msra.mxu0 0
    %135 = vmatprep.subr.bf16.mxu0 0
    %136 = vmatpush1.bf16.msra.mxu0 %v115
    %137 = vmatprep.subr.bf16.mxu0 0
    %138 = vmatpush2.bf16.msra.mxu0 0
    %139 = vmatprep.subr.bf16.mxu0 0
    %140 = vmatpush2.bf16.msra.mxu0 0
    %141 = vmatprep.subr.bf16.mxu0 0
    %142 = vmatpush2.bf16.msra.mxu0 0
    %143 = vmatprep.subr.bf16.mxu0 0
    %144 = vmatpush2.bf16.msra.mxu0 0
    %145 = vmatprep.subr.bf16.mxu0 0
    %146 = vmatpush2.bf16.msra.mxu0 0
    %147 = vmatprep.subr.bf16.mxu0 0
    %148 = vmatpush2.bf16.msra.mxu0 0
    %149 = vmatprep.subr.bf16.mxu0 0
    %150 = vmatpush2.bf16.msra.mxu0 0
    %151 = vmatprep.subr.bf16.mxu0 0
    %152 = vmatpush2.bf16.msra.mxu0 0
    %153 = vmatprep.mubr.bf16.mxu0 0
    %154 = vmatmul.mubr.bf16.gmra.mxu0 %v119
    %v155 = vpop.f32.mrf.mxu0
    %v156 = vadd.f32 %v109, %v155
    %v157 = vpop.f32.mrf.mxu0
    %v158 = vpop.f32.mrf.mxu0
    %v159 = vadd.f32 %v110, %v158
    %v160 = vpop.f32.mrf.mxu0
    %161 = vdwg.mxu0
    %v162 = vld [vmem:[%s7] sm:$0xff]
    %v163 = vld [vmem:[%s7 + $0x8] sm:$0x3]
    %v164 = vpack.c.bf16 %v159, %v156
    %v165 = vld [vmem:[#allocation2] sm:$0xff]
    %v166 = vld [vmem:[#allocation2 + $0x8] sm:$0xf]
    %v167 = vld [vmem:[#allocation2 + $0xc] sm:$0xff]
    %v168 = vld [vmem:[#allocation2 + $0x14] sm:$0xf]
    %v169 = vld [vmem:[#allocation2 + $0x18] sm:$0xff]
    %v170 = vld [vmem:[#allocation2 + $0x20] sm:$0xf]
    %v171 = vld [vmem:[#allocation2 + $0x24] sm:$0xff]
    %v172 = vld [vmem:[#allocation2 + $0x2c] sm:$0xf]
    %v173 = vld [vmem:[#allocation2 + $0x30] sm:$0xff]
    %v174 = vld [vmem:[#allocation2 + $0x38] sm:$0xf]
    %v175 = vld [vmem:[#allocation2 + $0x3c] sm:$0xff]
    %v176 = vld [vmem:[#allocation2 + $0x44] sm:$0xf]
    %v177 = vld [vmem:[#allocation2 + $0x48] sm:$0xff]
    %v178 = vld [vmem:[#allocation2 + $0x50] sm:$0xf]
    %v179 = vld [vmem:[#allocation2 + $0x54] sm:$0xff]
    %v180 = vld [vmem:[#allocation2 + $0x5c] sm:$0xf]
    %v181 = vld [vmem:[#allocation2 + $0x60] sm:$0xff]
    %v182 = vld [vmem:[#allocation2 + $0x68] sm:$0xf]
    %v183 = vld [vmem:[#allocation2 + $0x6c] sm:$0xff]
    %v184 = vld [vmem:[#allocation2 + $0x74] sm:$0xf]
    %v185 = vld [vmem:[#allocation2 + $0x78] sm:$0xff]
    %v186 = vld [vmem:[#allocation2 + $0x80] sm:$0xf]
    %v187 = vld [vmem:[#allocation2 + $0x84] sm:$0xff]
    %v188 = vld [vmem:[#allocation2 + $0x8c] sm:$0xf]
    %v189 = vld [vmem:[#allocation2 + $0x90] sm:$0xff]
    %v190 = vld [vmem:[#allocation2 + $0x98] sm:$0xf]
    %v191 = vld [vmem:[#allocation2 + $0x9c] sm:$0xff]
    %v192 = vld [vmem:[#allocation2 + $0xa4] sm:$0xf]
    %v193 = vld [vmem:[#allocation2 + $0xa8] sm:$0xff]
    %v194 = vld [vmem:[#allocation2 + $0xb0] sm:$0xf]
    %v195 = vld [vmem:[#allocation2 + $0xb4] sm:$0xff]
    %v196 = vld [vmem:[#allocation2 + $0xbc] sm:$0xf]
    %v229 = vunpack.c.l.b16 %v165
    %v230 = vunpack.c.h.b16 %v165
    %v231 = vunpack.c.l.b16 %v166
    %v232 = vunpack.c.l.b16 %v167
    %v233 = vunpack.c.h.b16 %v167
    %v234 = vunpack.c.l.b16 %v168
    %v235 = vunpack.c.l.b16 %v169
    %v236 = vunpack.c.h.b16 %v169
    %v237 = vunpack.c.l.b16 %v170
    %v238 = vunpack.c.l.b16 %v171
    %v239 = vunpack.c.h.b16 %v171
    %v240 = vunpack.c.l.b16 %v172
    %v241 = vunpack.c.l.b16 %v173
    %v242 = vunpack.c.h.b16 %v173
    %v243 = vunpack.c.l.b16 %v174
    %v244 = vunpack.c.l.b16 %v175
    %v245 = vunpack.c.h.b16 %v175
    %v246 = vunpack.c.l.b16 %v176
    %v247 = vunpack.c.l.b16 %v177
    %v248 = vunpack.c.h.b16 %v177
    %v249 = vunpack.c.l.b16 %v178
    %v250 = vunpack.c.l.b16 %v179
    %v251 = vunpack.c.h.b16 %v179
    %v252 = vunpack.c.l.b16 %v180
    %v253 = vunpack.c.l.b16 %v181
    %v254 = vunpack.c.h.b16 %v181
    %v255 = vunpack.c.l.b16 %v182
    %v256 = vunpack.c.l.b16 %v183
    %v257 = vunpack.c.h.b16 %v183
    %v258 = vunpack.c.l.b16 %v184
    %v259 = vunpack.c.l.b16 %v185
    %v260 = vunpack.c.h.b16 %v185
    %v261 = vunpack.c.l.b16 %v186
    %v262 = vunpack.c.l.b16 %v187
    %v263 = vunpack.c.h.b16 %v187
    %v264 = vunpack.c.l.b16 %v188
    %v265 = vunpack.c.l.b16 %v189
    %v266 = vunpack.c.h.b16 %v189
    %v267 = vunpack.c.l.b16 %v190
    %v268 = vunpack.c.l.b16 %v191
    %v269 = vunpack.c.h.b16 %v191
    %v270 = vunpack.c.l.b16 %v192
    %v271 = vunpack.c.l.b16 %v193
    %v272 = vunpack.c.h.b16 %v193
    %v273 = vunpack.c.l.b16 %v194
    %v274 = vunpack.c.l.b16 %v195
    %v275 = vunpack.c.h.b16 %v195
    %v276 = vunpack.c.l.b16 %v196
    %v277 = vpack.c.b16 %v232, %v229
    %v278 = vpack.c.b16 %v233, %v230
    %v279 = vpack.c.b16 %v234, %v231
    %v280 = vpack.c.b16 %v238, %v235
    %v281 = vpack.c.b16 %v239, %v236
    %v282 = vpack.c.b16 %v240, %v237
    %v283 = vpack.c.b16 %v244, %v241
    %v284 = vpack.c.b16 %v245, %v242
    %v285 = vpack.c.b16 %v246, %v243
    %v286 = vpack.c.b16 %v250, %v247
    %v287 = vpack.c.b16 %v251, %v248
    %v288 = vpack.c.b16 %v252, %v249
    %v289 = vpack.c.b16 %v256, %v253
    %v290 = vpack.c.b16 %v257, %v254
    %v291 = vpack.c.b16 %v258, %v255
    %v292 = vpack.c.b16 %v262, %v259
    %v293 = vpack.c.b16 %v263, %v260
    %v294 = vpack.c.b16 %v264, %v261
    %v295 = vpack.c.b16 %v268, %v265
    %v296 = vpack.c.b16 %v269, %v266
    %v297 = vpack.c.b16 %v270, %v267
    %v298 = vpack.c.b16 %v274, %v271
    %v299 = vpack.c.b16 %v275, %v272
    %v300 = vpack.c.b16 %v276, %v273
    %325 = vmatprep.subr.bf16.mxu0 %v299
    %326 = vmatpush1.bf16.msra.mxu0 %v298
    %327 = vmatprep.subr.bf16.mxu0 %v296
    %328 = vmatpush1.bf16.msra.mxu0 %v295
    %329 = vmatprep.subr.bf16.mxu0 %v293
    %330 = vmatpush1.bf16.msra.mxu0 %v292
    %331 = vmatprep.subr.bf16.mxu0 %v290
    %332 = vmatpush1.bf16.msra.mxu0 %v289
    %333 = vmatprep.subr.bf16.mxu0 %v287
    %334 = vmatpush1.bf16.msra.mxu0 %v286
    %335 = vmatprep.subr.bf16.mxu0 %v284
    %336 = vmatpush1.bf16.msra.mxu0 %v283
    %337 = vmatprep.subr.bf16.mxu0 %v281
    %338 = vmatpush1.bf16.msra.mxu0 %v280
    %339 = vmatprep.subr.bf16.mxu0 %v278
    %340 = vmatpush1.bf16.msra.mxu0 %v277
    %341 = vmatprep.subr.bf16.mxu0 0
    %342 = vmatpush2.bf16.msra.mxu0 0
    %343 = vmatprep.subr.bf16.mxu0 0
    %344 = vmatpush2.bf16.msra.mxu0 0
    %345 = vmatprep.subr.bf16.mxu0 0
    %346 = vmatpush2.bf16.msra.mxu0 0
    %347 = vmatprep.subr.bf16.mxu0 0
    %348 = vmatpush2.bf16.msra.mxu0 0
    %349 = vmatprep.subr.bf16.mxu0 0
    %350 = vmatpush2.bf16.msra.mxu0 0
    %351 = vmatprep.subr.bf16.mxu0 0
    %352 = vmatpush2.bf16.msra.mxu0 0
    %353 = vmatprep.subr.bf16.mxu0 0
    %354 = vmatpush2.bf16.msra.mxu0 0
    %355 = vmatprep.subr.bf16.mxu0 0
    %356 = vmatpush2.bf16.msra.mxu0 0
    %357 = vmatprep.mubr.bf16.mxu0 0
    %358 = vmatmul.mubr.bf16.gmra.mxu0 %v164
    %v359 = vpop.f32.mrf.mxu0
    %v360 = vadd.f32 0.0, %v359
    %v361 = vpop.f32.mrf.mxu0
    %v362 = vadd.f32 0.0, %v361
    %v363 = vpop.f32.mrf.mxu0
    %v364 = vadd.f32 0.0, %v363
    %v365 = vpop.f32.mrf.mxu0
    %v366 = vadd.f32 0.0, %v365
    %367 = vdwg.mxu0
    %368 = vmatprep.subr.bf16.mxu0 0
    %369 = vmatpush1.bf16.msra.mxu0 %v300
    %370 = vmatprep.subr.bf16.mxu0 0
    %371 = vmatpush1.bf16.msra.mxu0 %v297
    %372 = vmatprep.subr.bf16.mxu0 0
    %373 = vmatpush1.bf16.msra.mxu0 %v294
    %374 = vmatprep.subr.bf16.mxu0 0
    %375 = vmatpush1.bf16.msra.mxu0 %v291
    %376 = vmatprep.subr.bf16.mxu0 0
    %377 = vmatpush1.bf16.msra.mxu0 %v288
    %378 = vmatprep.subr.bf16.mxu0 0
    %379 = vmatpush1.bf16.msra.mxu0 %v285
    %380 = vmatprep.subr.bf16.mxu0 0
    %381 = vmatpush1.bf16.msra.mxu0 %v282
    %382 = vmatprep.subr.bf16.mxu0 0
    %383 = vmatpush1.bf16.msra.mxu0 %v279
    %384 = vmatprep.subr.bf16.mxu0 0
    %385 = vmatpush2.bf16.msra.mxu0 0
    %386 = vmatprep.subr.bf16.mxu0 0
    %387 = vmatpush2.bf16.msra.mxu0 0
    %388 = vmatprep.subr.bf16.mxu0 0
    %389 = vmatpush2.bf16.msra.mxu0 0
    %390 = vmatprep.subr.bf16.mxu0 0
    %391 = vmatpush2.bf16.msra.mxu0 0
    %392 = vmatprep.subr.bf16.mxu0 0
    %393 = vmatpush2.bf16.msra.mxu0 0
    %394 = vmatprep.subr.bf16.mxu0 0
    %395 = vmatpush2.bf16.msra.mxu0 0
    %396 = vmatprep.subr.bf16.mxu0 0
    %397 = vmatpush2.bf16.msra.mxu0 0
    %398 = vmatprep.subr.bf16.mxu0 0
    %399 = vmatpush2.bf16.msra.mxu0 0
    %400 = vmatprep.mubr.bf16.mxu0 0
    %401 = vmatmul.mubr.bf16.gmra.mxu0 %v164
    %v402 = vpop.f32.mrf.mxu0
    %v403 = vadd.f32 0.0, %v402
    %v404 = vpop.f32.mrf.mxu0
    %v405 = vpop.f32.mrf.mxu0
    %v406 = vadd.f32 0.0, %v405
    %v407 = vpop.f32.mrf.mxu0
    %408 = vdwg.mxu0
    %v409 = vlaneseq
    %v410 = vshrl.u32 %v409, 7
    %v411 = vsub.s32 0, %v410
    %v412 = vrot.slane %v162, %v411
    %v413 = vadd.f32 %v360, %v412
    %v414 = vadd.f32 %v364, %v412
    %v415 = vlaneseq
    %v416 = vshrl.u32 %v415, 7
    %v417 = vsub.s32 1, %v416
    %v418 = vrot.slane %v162, %v417
    %v419 = vadd.f32 %v362, %v418
    %v420 = vadd.f32 %v366, %v418
    %v421 = vlaneseq
    %v422 = vshrl.u32 %v421, 7
    %v423 = vsub.s32 2, %v422
    %v424 = vrot.slane %v162, %v423
    %v425 = vadd.f32 %v403, %v424
    %v426 = vadd.f32 %v406, %v424
    %vm427 = vcmask 261120
    %v429 = vsel %vm427, %v413, 0
    %v432 = vsel %vm427, %v419, 0
    %434 = vmatprep.subr.mxu0 0.0
    %435 = vmatpush1.xpose.msra.mxu0 0.0
    %436 = vmatprep.subr.mxu0 0.0
    %437 = vmatpush1.xpose.msra.mxu0 0.0
    %438 = vmatprep.subr.mxu0 0.0
    %439 = vmatpush1.xpose.msra.mxu0 0.0
    %440 = vmatprep.subr.mxu0 0.0
    %441 = vmatpush1.xpose.msra.mxu0 0.0
    %442 = vmatprep.subr.mxu0 0.0
    %443 = vmatpush1.xpose.msra.mxu0 0.0
    %444 = vmatprep.subr.mxu0 0.0
    %445 = vmatpush1.xpose.msra.mxu0 0.0
    %446 = vmatprep.subr.mxu0 0.0
    %447 = vmatpush1.xpose.msra.mxu0 0.0
    %448 = vmatprep.subr.mxu0 0.0
    %449 = vmatpush1.xpose.msra.mxu0 0.0
    %450 = vmatprep.subr.mxu0 0.0
    %451 = vmatpush1.xpose.msra.mxu0 0.0
    %452 = vmatprep.subr.mxu0 0.0
    %453 = vmatpush1.xpose.msra.mxu0 0.0
    %454 = vmatprep.subr.mxu0 0.0
    %455 = vmatpush1.xpose.msra.mxu0 0.0
    %456 = vmatprep.subr.mxu0 0.0
    %457 = vmatpush1.xpose.msra.mxu0 0.0
    %458 = vmatprep.subr.mxu0 0.0
    %459 = vmatpush1.xpose.msra.mxu0 0.0
    %460 = vmatprep.subr.mxu0 0.0
    %461 = vmatpush1.xpose.msra.mxu0 0.0
    %462 = vmatprep.subr.mxu0 0.0
    %463 = vmatpush1.xpose.msra.mxu0 0.0
    %464 = vmatprep.subr.mxu0 0.0
    %465 = vmatpush1.xpose.msra.mxu0 %v432
    %466 = vmatprep.subr.mxu0 0.0
    %467 = vmatpush2.xpose.msra.mxu0 0.0
    %468 = vmatprep.subr.mxu0 0.0
    %469 = vmatpush2.xpose.msra.mxu0 0.0
    %470 = vmatprep.subr.mxu0 0.0
    %471 = vmatpush2.xpose.msra.mxu0 0.0
    %472 = vmatprep.subr.mxu0 0.0
    %473 = vmatpush2.xpose.msra.mxu0 0.0
    %474 = vmatprep.subr.mxu0 0.0
    %475 = vmatpush2.xpose.msra.mxu0 0.0
    %476 = vmatprep.subr.mxu0 0.0
    %477 = vmatpush2.xpose.msra.mxu0 0.0
    %478 = vmatprep.subr.mxu0 0.0
    %479 = vmatpush2.xpose.msra.mxu0 0.0
    %480 = vmatprep.subr.mxu0 0.0
    %481 = vmatpush2.xpose.msra.mxu0 0.0
    %482 = vmatprep.subr.mxu0 0.0
    %483 = vmatpush2.xpose.msra.mxu0 0.0
    %484 = vmatprep.subr.mxu0 0.0
    %485 = vmatpush2.xpose.msra.mxu0 0.0
    %486 = vmatprep.subr.mxu0 0.0
    %487 = vmatpush2.xpose.msra.mxu0 0.0
    %488 = vmatprep.subr.mxu0 0.0
    %489 = vmatpush2.xpose.msra.mxu0 0.0
    %490 = vmatprep.subr.mxu0 0.0
    %491 = vmatpush2.xpose.msra.mxu0 0.0
    %492 = vmatprep.subr.mxu0 0.0
    %493 = vmatpush2.xpose.msra.mxu0 0.0
    %494 = vmatprep.subr.mxu0 0.0
    %495 = vmatpush2.xpose.msra.mxu0 0.0
    %496 = vmatprep.subr.mxu0 0.0
    %497 = vmatpush2.xpose.msra.mxu0 0.0
    %498 = vmatprep.mubr.f32.mxu0 0.0
    %499 = vmatmul.mubr.f32.gmra.mxu0 %v429
    %v500 = vpop.f32.mrf.mxu0
    %v501 = vadd.f32 0.0, %v500
    %v502 = vpop.f32.mrf.mxu0
    %503 = vdwg.mxu0
    %v505 = vsel %vm427, %v414, 0
    %v508 = vsel %vm427, %v420, 0
    %510 = vmatprep.subr.mxu0 0.0
    %511 = vmatpush1.xpose.msra.mxu0 0.0
    %512 = vmatprep.subr.mxu0 0.0
    %513 = vmatpush1.xpose.msra.mxu0 0.0
    %514 = vmatprep.subr.mxu0 0.0
    %515 = vmatpush1.xpose.msra.mxu0 0.0
    %516 = vmatprep.subr.mxu0 0.0
    %517 = vmatpush1.xpose.msra.mxu0 0.0
    %518 = vmatprep.subr.mxu0 0.0
    %519 = vmatpush1.xpose.msra.mxu0 0.0
    %520 = vmatprep.subr.mxu0 0.0
    %521 = vmatpush1.xpose.msra.mxu0 0.0
    %522 = vmatprep.subr.mxu0 0.0
    %523 = vmatpush1.xpose.msra.mxu0 0.0
    %524 = vmatprep.subr.mxu0 0.0
    %525 = vmatpush1.xpose.msra.mxu0 0.0
    %526 = vmatprep.subr.mxu0 0.0
    %527 = vmatpush1.xpose.msra.mxu0 0.0
    %528 = vmatprep.subr.mxu0 0.0
    %529 = vmatpush1.xpose.msra.mxu0 0.0
    %530 = vmatprep.subr.mxu0 0.0
    %531 = vmatpush1.xpose.msra.mxu0 0.0
    %532 = vmatprep.subr.mxu0 0.0
    %533 = vmatpush1.xpose.msra.mxu0 0.0
    %534 = vmatprep.subr.mxu0 0.0
    %535 = vmatpush1.xpose.msra.mxu0 0.0
    %536 = vmatprep.subr.mxu0 0.0
    %537 = vmatpush1.xpose.msra.mxu0 0.0
    %538 = vmatprep.subr.mxu0 0.0
    %539 = vmatpush1.xpose.msra.mxu0 0.0
    %540 = vmatprep.subr.mxu0 0.0
    %541 = vmatpush1.xpose.msra.mxu0 %v508
    %542 = vmatprep.subr.mxu0 0.0
    %543 = vmatpush2.xpose.msra.mxu0 0.0
    %544 = vmatprep.subr.mxu0 0.0
    %545 = vmatpush2.xpose.msra.mxu0 0.0
    %546 = vmatprep.subr.mxu0 0.0
    %547 = vmatpush2.xpose.msra.mxu0 0.0
    %548 = vmatprep.subr.mxu0 0.0
    %549 = vmatpush2.xpose.msra.mxu0 0.0
    %550 = vmatprep.subr.mxu0 0.0
    %551 = vmatpush2.xpose.msra.mxu0 0.0
    %552 = vmatprep.subr.mxu0 0.0
    %553 = vmatpush2.xpose.msra.mxu0 0.0
    %554 = vmatprep.subr.mxu0 0.0
    %555 = vmatpush2.xpose.msra.mxu0 0.0
    %556 = vmatprep.subr.mxu0 0.0
    %557 = vmatpush2.xpose.msra.mxu0 0.0
    %558 = vmatprep.subr.mxu0 0.0
    %559 = vmatpush2.xpose.msra.mxu0 0.0
    %560 = vmatprep.subr.mxu0 0.0
    %561 = vmatpush2.xpose.msra.mxu0 0.0
    %562 = vmatprep.subr.mxu0 0.0
    %563 = vmatpush2.xpose.msra.mxu0 0.0
    %564 = vmatprep.subr.mxu0 0.0
    %565 = vmatpush2.xpose.msra.mxu0 0.0
    %566 = vmatprep.subr.mxu0 0.0
    %567 = vmatpush2.xpose.msra.mxu0 0.0
    %568 = vmatprep.subr.mxu0 0.0
    %569 = vmatpush2.xpose.msra.mxu0 0.0
    %570 = vmatprep.subr.mxu0 0.0
    %571 = vmatpush2.xpose.msra.mxu0 0.0
    %572 = vmatprep.subr.mxu0 0.0
    %573 = vmatpush2.xpose.msra.mxu0 0.0
    %574 = vmatprep.mubr.f32.mxu0 0.0
    %575 = vmatmul.mubr.f32.gmra.mxu0 %v505
    %v576 = vpop.f32.mrf.mxu0
    %v577 = vadd.f32 0.0, %v576
    %v578 = vpop.f32.mrf.mxu0
    %579 = vdwg.mxu0
    %580 = vrot.lane.b32.xlu0 %v413, 96
    %v581 = vpop.permute.xlu0 %580
    %582 = vrot.lane.b32.xlu0 %v419, 96
    %v583 = vpop.permute.xlu0 %582
    %v584 = vsel %vm427, %v581, 0
    %v586 = vsel %vm427, %v583, 0
    %588 = vmatprep.subr.mxu0 0.0
    %589 = vmatpush1.xpose.msra.mxu0 0.0
    %590 = vmatprep.subr.mxu0 0.0
    %591 = vmatpush1.xpose.msra.mxu0 0.0
    %592 = vmatprep.subr.mxu0 0.0
    %593 = vmatpush1.xpose.msra.mxu0 0.0
    %594 = vmatprep.subr.mxu0 0.0
    %595 = vmatpush1.xpose.msra.mxu0 0.0
    %596 = vmatprep.subr.mxu0 0.0
    %597 = vmatpush1.xpose.msra.mxu0 0.0
    %598 = vmatprep.subr.mxu0 0.0
    %599 = vmatpush1.xpose.msra.mxu0 0.0
    %600 = vmatprep.subr.mxu0 0.0
    %601 = vmatpush1.xpose.msra.mxu0 0.0
    %602 = vmatprep.subr.mxu0 0.0
    %603 = vmatpush1.xpose.msra.mxu0 0.0
    %604 = vmatprep.subr.mxu0 0.0
    %605 = vmatpush1.xpose.msra.mxu0 0.0
    %606 = vmatprep.subr.mxu0 0.0
    %607 = vmatpush1.xpose.msra.mxu0 0.0
    %608 = vmatprep.subr.mxu0 0.0
    %609 = vmatpush1.xpose.msra.mxu0 0.0
    %610 = vmatprep.subr.mxu0 0.0
    %611 = vmatpush1.xpose.msra.mxu0 0.0
    %612 = vmatprep.subr.mxu0 0.0
    %613 = vmatpush1.xpose.msra.mxu0 0.0
    %614 = vmatprep.subr.mxu0 0.0
    %615 = vmatpush1.xpose.msra.mxu0 0.0
    %616 = vmatprep.subr.mxu0 0.0
    %617 = vmatpush1.xpose.msra.mxu0 0.0
    %618 = vmatprep.subr.mxu0 0.0
    %619 = vmatpush1.xpose.msra.mxu0 %v586
    %620 = vmatprep.subr.mxu0 0.0
    %621 = vmatpush2.xpose.msra.mxu0 0.0
    %622 = vmatprep.subr.mxu0 0.0
    %623 = vmatpush2.xpose.msra.mxu0 0.0
    %624 = vmatprep.subr.mxu0 0.0
    %625 = vmatpush2.xpose.msra.mxu0 0.0
    %626 = vmatprep.subr.mxu0 0.0
    %627 = vmatpush2.xpose.msra.mxu0 0.0
    %628 = vmatprep.subr.mxu0 0.0
    %629 = vmatpush2.xpose.msra.mxu0 0.0
    %630 = vmatprep.subr.mxu0 0.0
    %631 = vmatpush2.xpose.msra.mxu0 0.0
    %632 = vmatprep.subr.mxu0 0.0
    %633 = vmatpush2.xpose.msra.mxu0 0.0
    %634 = vmatprep.subr.mxu0 0.0
    %635 = vmatpush2.xpose.msra.mxu0 0.0
    %636 = vmatprep.subr.mxu0 0.0
    %637 = vmatpush2.xpose.msra.mxu0 0.0
    %638 = vmatprep.subr.mxu0 0.0
    %639 = vmatpush2.xpose.msra.mxu0 0.0
    %640 = vmatprep.subr.mxu0 0.0
    %641 = vmatpush2.xpose.msra.mxu0 0.0
    %642 = vmatprep.subr.mxu0 0.0
    %643 = vmatpush2.xpose.msra.mxu0 0.0
    %644 = vmatprep.subr.mxu0 0.0
    %645 = vmatpush2.xpose.msra.mxu0 0.0
    %646 = vmatprep.subr.mxu0 0.0
    %647 = vmatpush2.xpose.msra.mxu0 0.0
    %648 = vmatprep.subr.mxu0 0.0
    %649 = vmatpush2.xpose.msra.mxu0 0.0
    %650 = vmatprep.subr.mxu0 0.0
    %651 = vmatpush2.xpose.msra.mxu0 0.0
    %652 = vmatprep.mubr.f32.mxu0 0.0
    %653 = vmatmul.mubr.f32.gmra.mxu0 %v584
    %v654 = vpop.f32.mrf.mxu0
    %v655 = vadd.f32 0.0, %v654
    %v656 = vpop.f32.mrf.mxu0
    %657 = vdwg.mxu0
    %658 = vrot.lane.b32.xlu0 %v414, 96
    %v659 = vpop.permute.xlu0 %658
    %660 = vrot.lane.b32.xlu0 %v420, 96
    %v661 = vpop.permute.xlu0 %660
    %v662 = vsel %vm427, %v659, 0
    %v664 = vsel %vm427, %v661, 0
    %666 = vmatprep.subr.mxu0 0.0
    %667 = vmatpush1.xpose.msra.mxu0 0.0
    %668 = vmatprep.subr.mxu0 0.0
    %669 = vmatpush1.xpose.msra.mxu0 0.0
    %670 = vmatprep.subr.mxu0 0.0
    %671 = vmatpush1.xpose.msra.mxu0 0.0
    %672 = vmatprep.subr.mxu0 0.0
    %673 = vmatpush1.xpose.msra.mxu0 0.0
    %674 = vmatprep.subr.mxu0 0.0
    %675 = vmatpush1.xpose.msra.mxu0 0.0
    %676 = vmatprep.subr.mxu0 0.0
    %677 = vmatpush1.xpose.msra.mxu0 0.0
    %678 = vmatprep.subr.mxu0 0.0
    %679 = vmatpush1.xpose.msra.mxu0 0.0
    %680 = vmatprep.subr.mxu0 0.0
    %681 = vmatpush1.xpose.msra.mxu0 0.0
    %682 = vmatprep.subr.mxu0 0.0
    %683 = vmatpush1.xpose.msra.mxu0 0.0
    %684 = vmatprep.subr.mxu0 0.0
    %685 = vmatpush1.xpose.msra.mxu0 0.0
    %686 = vmatprep.subr.mxu0 0.0
    %687 = vmatpush1.xpose.msra.mxu0 0.0
    %688 = vmatprep.subr.mxu0 0.0
    %689 = vmatpush1.xpose.msra.mxu0 0.0
    %690 = vmatprep.subr.mxu0 0.0
    %691 = vmatpush1.xpose.msra.mxu0 0.0
    %692 = vmatprep.subr.mxu0 0.0
    %693 = vmatpush1.xpose.msra.mxu0 0.0
    %694 = vmatprep.subr.mxu0 0.0
    %695 = vmatpush1.xpose.msra.mxu0 0.0
    %696 = vmatprep.subr.mxu0 0.0
    %697 = vmatpush1.xpose.msra.mxu0 %v664
    %698 = vmatprep.subr.mxu0 0.0
    %699 = vmatpush2.xpose.msra.mxu0 0.0
    %700 = vmatprep.subr.mxu0 0.0
    %701 = vmatpush2.xpose.msra.mxu0 0.0
    %702 = vmatprep.subr.mxu0 0.0
    %703 = vmatpush2.xpose.msra.mxu0 0.0
    %704 = vmatprep.subr.mxu0 0.0
    %705 = vmatpush2.xpose.msra.mxu0 0.0
    %706 = vmatprep.subr.mxu0 0.0
    %707 = vmatpush2.xpose.msra.mxu0 0.0
    %708 = vmatprep.subr.mxu0 0.0
    %709 = vmatpush2.xpose.msra.mxu0 0.0
    %710 = vmatprep.subr.mxu0 0.0
    %711 = vmatpush2.xpose.msra.mxu0 0.0
    %712 = vmatprep.subr.mxu0 0.0
    %713 = vmatpush2.xpose.msra.mxu0 0.0
    %714 = vmatprep.subr.mxu0 0.0
    %715 = vmatpush2.xpose.msra.mxu0 0.0
    %716 = vmatprep.subr.mxu0 0.0
    %717 = vmatpush2.xpose.msra.mxu0 0.0
    %718 = vmatprep.subr.mxu0 0.0
    %719 = vmatpush2.xpose.msra.mxu0 0.0
    %720 = vmatprep.subr.mxu0 0.0
    %721 = vmatpush2.xpose.msra.mxu0 0.0
    %722 = vmatprep.subr.mxu0 0.0
    %723 = vmatpush2.xpose.msra.mxu0 0.0
    %724 = vmatprep.subr.mxu0 0.0
    %725 = vmatpush2.xpose.msra.mxu0 0.0
    %726 = vmatprep.subr.mxu0 0.0
    %727 = vmatpush2.xpose.msra.mxu0 0.0
    %728 = vmatprep.subr.mxu0 0.0
    %729 = vmatpush2.xpose.msra.mxu0 0.0
    %730 = vmatprep.mubr.f32.mxu0 0.0
    %731 = vmatmul.mubr.f32.gmra.mxu0 %v662
    %v732 = vpop.f32.mrf.mxu0
    %v733 = vadd.f32 0.0, %v732
    %v734 = vpop.f32.mrf.mxu0
    %735 = vdwg.mxu0
    %736 = vrot.lane.b32.xlu0 %v413, 64
    %v737 = vpop.permute.xlu0 %736
    %738 = vrot.lane.b32.xlu0 %v419, 64
    %v739 = vpop.permute.xlu0 %738
    %v740 = vsel %vm427, %v737, 0
    %v742 = vsel %vm427, %v739, 0
    %744 = vmatprep.subr.mxu0 0.0
    %745 = vmatpush1.xpose.msra.mxu0 0.0
    %746 = vmatprep.subr.mxu0 0.0
    %747 = vmatpush1.xpose.msra.mxu0 0.0
    %748 = vmatprep.subr.mxu0 0.0
    %749 = vmatpush1.xpose.msra.mxu0 0.0
    %750 = vmatprep.subr.mxu0 0.0
    %751 = vmatpush1.xpose.msra.mxu0 0.0
    %752 = vmatprep.subr.mxu0 0.0
    %753 = vmatpush1.xpose.msra.mxu0 0.0
    %754 = vmatprep.subr.mxu0 0.0
    %755 = vmatpush1.xpose.msra.mxu0 0.0
    %756 = vmatprep.subr.mxu0 0.0
    %757 = vmatpush1.xpose.msra.mxu0 0.0
    %758 = vmatprep.subr.mxu0 0.0
    %759 = vmatpush1.xpose.msra.mxu0 0.0
    %760 = vmatprep.subr.mxu0 0.0
    %761 = vmatpush1.xpose.msra.mxu0 0.0
    %762 = vmatprep.subr.mxu0 0.0
    %763 = vmatpush1.xpose.msra.mxu0 0.0
    %764 = vmatprep.subr.mxu0 0.0
    %765 = vmatpush1.xpose.msra.mxu0 0.0
    %766 = vmatprep.subr.mxu0 0.0
    %767 = vmatpush1.xpose.msra.mxu0 0.0
    %768 = vmatprep.subr.mxu0 0.0
    %769 = vmatpush1.xpose.msra.mxu0 0.0
    %770 = vmatprep.subr.mxu0 0.0
    %771 = vmatpush1.xpose.msra.mxu0 0.0
    %772 = vmatprep.subr.mxu0 0.0
    %773 = vmatpush1.xpose.msra.mxu0 0.0
    %774 = vmatprep.subr.mxu0 0.0
    %775 = vmatpush1.xpose.msra.mxu0 %v742
    %776 = vmatprep.subr.mxu0 0.0
    %777 = vmatpush2.xpose.msra.mxu0 0.0
    %778 = vmatprep.subr.mxu0 0.0
    %779 = vmatpush2.xpose.msra.mxu0 0.0
    %780 = vmatprep.subr.mxu0 0.0
    %781 = vmatpush2.xpose.msra.mxu0 0.0
    %782 = vmatprep.subr.mxu0 0.0
    %783 = vmatpush2.xpose.msra.mxu0 0.0
    %784 = vmatprep.subr.mxu0 0.0
    %785 = vmatpush2.xpose.msra.mxu0 0.0
    %786 = vmatprep.subr.mxu0 0.0
    %787 = vmatpush2.xpose.msra.mxu0 0.0
    %788 = vmatprep.subr.mxu0 0.0
    %789 = vmatpush2.xpose.msra.mxu0 0.0
    %790 = vmatprep.subr.mxu0 0.0
    %791 = vmatpush2.xpose.msra.mxu0 0.0
    %792 = vmatprep.subr.mxu0 0.0
    %793 = vmatpush2.xpose.msra.mxu0 0.0
    %794 = vmatprep.subr.mxu0 0.0
    %795 = vmatpush2.xpose.msra.mxu0 0.0
    %796 = vmatprep.subr.mxu0 0.0
    %797 = vmatpush2.xpose.msra.mxu0 0.0
    %798 = vmatprep.subr.mxu0 0.0
    %799 = vmatpush2.xpose.msra.mxu0 0.0
    %800 = vmatprep.subr.mxu0 0.0
    %801 = vmatpush2.xpose.msra.mxu0 0.0
    %802 = vmatprep.subr.mxu0 0.0
    %803 = vmatpush2.xpose.msra.mxu0 0.0
    %804 = vmatprep.subr.mxu0 0.0
    %805 = vmatpush2.xpose.msra.mxu0 0.0
    %806 = vmatprep.subr.mxu0 0.0
    %807 = vmatpush2.xpose.msra.mxu0 0.0
    %808 = vmatprep.mubr.f32.mxu0 0.0
    %809 = vmatmul.mubr.f32.gmra.mxu0 %v740
    %v810 = vpop.f32.mrf.mxu0
    %v811 = vadd.f32 0.0, %v810
    %v812 = vpop.f32.mrf.mxu0
    %813 = vdwg.mxu0
    %814 = vrot.lane.b32.xlu0 %v414, 64
    %v815 = vpop.permute.xlu0 %814
    %816 = vrot.lane.b32.xlu0 %v420, 64
    %v817 = vpop.permute.xlu0 %816
    %v818 = vsel %vm427, %v815, 0
    %v820 = vsel %vm427, %v817, 0
    %822 = vmatprep.subr.mxu0 0.0
    %823 = vmatpush1.xpose.msra.mxu0 0.0
    %824 = vmatprep.subr.mxu0 0.0
    %825 = vmatpush1.xpose.msra.mxu0 0.0
    %826 = vmatprep.subr.mxu0 0.0
    %827 = vmatpush1.xpose.msra.mxu0 0.0
    %828 = vmatprep.subr.mxu0 0.0
    %829 = vmatpush1.xpose.msra.mxu0 0.0
    %830 = vmatprep.subr.mxu0 0.0
    %831 = vmatpush1.xpose.msra.mxu0 0.0
    %832 = vmatprep.subr.mxu0 0.0
    %833 = vmatpush1.xpose.msra.mxu0 0.0
    %834 = vmatprep.subr.mxu0 0.0
    %835 = vmatpush1.xpose.msra.mxu0 0.0
    %836 = vmatprep.subr.mxu0 0.0
    %837 = vmatpush1.xpose.msra.mxu0 0.0
    %838 = vmatprep.subr.mxu0 0.0
    %839 = vmatpush1.xpose.msra.mxu0 0.0
    %840 = vmatprep.subr.mxu0 0.0
    %841 = vmatpush1.xpose.msra.mxu0 0.0
    %842 = vmatprep.subr.mxu0 0.0
    %843 = vmatpush1.xpose.msra.mxu0 0.0
    %844 = vmatprep.subr.mxu0 0.0
    %845 = vmatpush1.xpose.msra.mxu0 0.0
    %846 = vmatprep.subr.mxu0 0.0
    %847 = vmatpush1.xpose.msra.mxu0 0.0
    %848 = vmatprep.subr.mxu0 0.0
    %849 = vmatpush1.xpose.msra.mxu0 0.0
    %850 = vmatprep.subr.mxu0 0.0
    %851 = vmatpush1.xpose.msra.mxu0 0.0
    %852 = vmatprep.subr.mxu0 0.0
    %853 = vmatpush1.xpose.msra.mxu0 %v820
    %854 = vmatprep.subr.mxu0 0.0
    %855 = vmatpush2.xpose.msra.mxu0 0.0
    %856 = vmatprep.subr.mxu0 0.0
    %857 = vmatpush2.xpose.msra.mxu0 0.0
    %858 = vmatprep.subr.mxu0 0.0
    %859 = vmatpush2.xpose.msra.mxu0 0.0
    %860 = vmatprep.subr.mxu0 0.0
    %861 = vmatpush2.xpose.msra.mxu0 0.0
    %862 = vmatprep.subr.mxu0 0.0
    %863 = vmatpush2.xpose.msra.mxu0 0.0
    %864 = vmatprep.subr.mxu0 0.0
    %865 = vmatpush2.xpose.msra.mxu0 0.0
    %866 = vmatprep.subr.mxu0 0.0
    %867 = vmatpush2.xpose.msra.mxu0 0.0
    %868 = vmatprep.subr.mxu0 0.0
    %869 = vmatpush2.xpose.msra.mxu0 0.0
    %870 = vmatprep.subr.mxu0 0.0
    %871 = vmatpush2.xpose.msra.mxu0 0.0
    %872 = vmatprep.subr.mxu0 0.0
    %873 = vmatpush2.xpose.msra.mxu0 0.0
    %874 = vmatprep.subr.mxu0 0.0
    %875 = vmatpush2.xpose.msra.mxu0 0.0
    %876 = vmatprep.subr.mxu0 0.0
    %877 = vmatpush2.xpose.msra.mxu0 0.0
    %878 = vmatprep.subr.mxu0 0.0
    %879 = vmatpush2.xpose.msra.mxu0 0.0
    %880 = vmatprep.subr.mxu0 0.0
    %881 = vmatpush2.xpose.msra.mxu0 0.0
    %882 = vmatprep.subr.mxu0 0.0
    %883 = vmatpush2.xpose.msra.mxu0 0.0
    %884 = vmatprep.subr.mxu0 0.0
    %885 = vmatpush2.xpose.msra.mxu0 0.0
    %886 = vmatprep.mubr.f32.mxu0 0.0
    %887 = vmatmul.mubr.f32.gmra.mxu0 %v818
    %v888 = vpop.f32.mrf.mxu0
    %v889 = vadd.f32 0.0, %v888
    %v890 = vpop.f32.mrf.mxu0
    %891 = vdwg.mxu0
    %892 = vrot.lane.b32.xlu0 %v413, 32
    %v893 = vpop.permute.xlu0 %892
    %894 = vrot.lane.b32.xlu0 %v419, 32
    %v895 = vpop.permute.xlu0 %894
    %v896 = vsel %vm427, %v893, 0
    %v898 = vsel %vm427, %v895, 0
    %900 = vmatprep.subr.mxu0 0.0
    %901 = vmatpush1.xpose.msra.mxu0 0.0
    %902 = vmatprep.subr.mxu0 0.0
    %903 = vmatpush1.xpose.msra.mxu0 0.0
    %904 = vmatprep.subr.mxu0 0.0
    %905 = vmatpush1.xpose.msra.mxu0 0.0
    %906 = vmatprep.subr.mxu0 0.0
    %907 = vmatpush1.xpose.msra.mxu0 0.0
    %908 = vmatprep.subr.mxu0 0.0
    %909 = vmatpush1.xpose.msra.mxu0 0.0
    %910 = vmatprep.subr.mxu0 0.0
    %911 = vmatpush1.xpose.msra.mxu0 0.0
    %912 = vmatprep.subr.mxu0 0.0
    %913 = vmatpush1.xpose.msra.mxu0 0.0
    %914 = vmatprep.subr.mxu0 0.0
    %915 = vmatpush1.xpose.msra.mxu0 0.0
    %916 = vmatprep.subr.mxu0 0.0
    %917 = vmatpush1.xpose.msra.mxu0 0.0
    %918 = vmatprep.subr.mxu0 0.0
    %919 = vmatpush1.xpose.msra.mxu0 0.0
    %920 = vmatprep.subr.mxu0 0.0
    %921 = vmatpush1.xpose.msra.mxu0 0.0
    %922 = vmatprep.subr.mxu0 0.0
    %923 = vmatpush1.xpose.msra.mxu0 0.0
    %924 = vmatprep.subr.mxu0 0.0
    %925 = vmatpush1.xpose.msra.mxu0 0.0
    %926 = vmatprep.subr.mxu0 0.0
    %927 = vmatpush1.xpose.msra.mxu0 0.0
    %928 = vmatprep.subr.mxu0 0.0
    %929 = vmatpush1.xpose.msra.mxu0 0.0
    %930 = vmatprep.subr.mxu0 0.0
    %931 = vmatpush1.xpose.msra.mxu0 %v898
    %932 = vmatprep.subr.mxu0 0.0
    %933 = vmatpush2.xpose.msra.mxu0 0.0
    %934 = vmatprep.subr.mxu0 0.0
    %935 = vmatpush2.xpose.msra.mxu0 0.0
    %936 = vmatprep.subr.mxu0 0.0
    %937 = vmatpush2.xpose.msra.mxu0 0.0
    %938 = vmatprep.subr.mxu0 0.0
    %939 = vmatpush2.xpose.msra.mxu0 0.0
    %940 = vmatprep.subr.mxu0 0.0
    %941 = vmatpush2.xpose.msra.mxu0 0.0
    %942 = vmatprep.subr.mxu0 0.0
    %943 = vmatpush2.xpose.msra.mxu0 0.0
    %944 = vmatprep.subr.mxu0 0.0
    %945 = vmatpush2.xpose.msra.mxu0 0.0
    %946 = vmatprep.subr.mxu0 0.0
    %947 = vmatpush2.xpose.msra.mxu0 0.0
    %948 = vmatprep.subr.mxu0 0.0
    %949 = vmatpush2.xpose.msra.mxu0 0.0
    %950 = vmatprep.subr.mxu0 0.0
    %951 = vmatpush2.xpose.msra.mxu0 0.0
    %952 = vmatprep.subr.mxu0 0.0
    %953 = vmatpush2.xpose.msra.mxu0 0.0
    %954 = vmatprep.subr.mxu0 0.0
    %955 = vmatpush2.xpose.msra.mxu0 0.0
    %956 = vmatprep.subr.mxu0 0.0
    %957 = vmatpush2.xpose.msra.mxu0 0.0
    %958 = vmatprep.subr.mxu0 0.0
    %959 = vmatpush2.xpose.msra.mxu0 0.0
    %960 = vmatprep.subr.mxu0 0.0
    %961 = vmatpush2.xpose.msra.mxu0 0.0
    %962 = vmatprep.subr.mxu0 0.0
    %963 = vmatpush2.xpose.msra.mxu0 0.0
    %964 = vmatprep.mubr.f32.mxu0 0.0
    %965 = vmatmul.mubr.f32.gmra.mxu0 %v896
    %v966 = vpop.f32.mrf.mxu0
    %v967 = vadd.f32 0.0, %v966
    %v968 = vpop.f32.mrf.mxu0
    %969 = vdwg.mxu0
    %970 = vrot.lane.b32.xlu0 %v414, 32
    %v971 = vpop.permute.xlu0 %970
    %972 = vrot.lane.b32.xlu0 %v420, 32
    %v973 = vpop.permute.xlu0 %972
    %v974 = vsel %vm427, %v971, 0
    %v976 = vsel %vm427, %v973, 0
    %978 = vmatprep.subr.mxu0 0.0
    %979 = vmatpush1.xpose.msra.mxu0 0.0
    %980 = vmatprep.subr.mxu0 0.0
    %981 = vmatpush1.xpose.msra.mxu0 0.0
    %982 = vmatprep.subr.mxu0 0.0
    %983 = vmatpush1.xpose.msra.mxu0 0.0
    %984 = vmatprep.subr.mxu0 0.0
    %985 = vmatpush1.xpose.msra.mxu0 0.0
    %986 = vmatprep.subr.mxu0 0.0
    %987 = vmatpush1.xpose.msra.mxu0 0.0
    %988 = vmatprep.subr.mxu0 0.0
    %989 = vmatpush1.xpose.msra.mxu0 0.0
    %990 = vmatprep.subr.mxu0 0.0
    %991 = vmatpush1.xpose.msra.mxu0 0.0
    %992 = vmatprep.subr.mxu0 0.0
    %993 = vmatpush1.xpose.msra.mxu0 0.0
    %994 = vmatprep.subr.mxu0 0.0
    %995 = vmatpush1.xpose.msra.mxu0 0.0
    %996 = vmatprep.subr.mxu0 0.0
    %997 = vmatpush1.xpose.msra.mxu0 0.0
    %998 = vmatprep.subr.mxu0 0.0
    %999 = vmatpush1.xpose.msra.mxu0 0.0
    %1000 = vmatprep.subr.mxu0 0.0
    %1001 = vmatpush1.xpose.msra.mxu0 0.0
    %1002 = vmatprep.subr.mxu0 0.0
    %1003 = vmatpush1.xpose.msra.mxu0 0.0
    %1004 = vmatprep.subr.mxu0 0.0
    %1005 = vmatpush1.xpose.msra.mxu0 0.0
    %1006 = vmatprep.subr.mxu0 0.0
    %1007 = vmatpush1.xpose.msra.mxu0 0.0
    %1008 = vmatprep.subr.mxu0 0.0
    %1009 = vmatpush1.xpose.msra.mxu0 %v976
    %1010 = vmatprep.subr.mxu0 0.0
    %1011 = vmatpush2.xpose.msra.mxu0 0.0
    %1012 = vmatprep.subr.mxu0 0.0
    %1013 = vmatpush2.xpose.msra.mxu0 0.0
    %1014 = vmatprep.subr.mxu0 0.0
    %1015 = vmatpush2.xpose.msra.mxu0 0.0
    %1016 = vmatprep.subr.mxu0 0.0
    %1017 = vmatpush2.xpose.msra.mxu0 0.0
    %1018 = vmatprep.subr.mxu0 0.0
    %1019 = vmatpush2.xpose.msra.mxu0 0.0
    %1020 = vmatprep.subr.mxu0 0.0
    %1021 = vmatpush2.xpose.msra.mxu0 0.0
    %1022 = vmatprep.subr.mxu0 0.0
    %1023 = vmatpush2.xpose.msra.mxu0 0.0
    %1024 = vmatprep.subr.mxu0 0.0
    %1025 = vmatpush2.xpose.msra.mxu0 0.0
    %1026 = vmatprep.subr.mxu0 0.0
    %1027 = vmatpush2.xpose.msra.mxu0 0.0
    %1028 = vmatprep.subr.mxu0 0.0
    %1029 = vmatpush2.xpose.msra.mxu0 0.0
    %1030 = vmatprep.subr.mxu0 0.0
    %1031 = vmatpush2.xpose.msra.mxu0 0.0
    %1032 = vmatprep.subr.mxu0 0.0
    %1033 = vmatpush2.xpose.msra.mxu0 0.0
    %1034 = vmatprep.subr.mxu0 0.0
    %1035 = vmatpush2.xpose.msra.mxu0 0.0
    %1036 = vmatprep.subr.mxu0 0.0
    %1037 = vmatpush2.xpose.msra.mxu0 0.0
    %1038 = vmatprep.subr.mxu0 0.0
    %1039 = vmatpush2.xpose.msra.mxu0 0.0
    %1040 = vmatprep.subr.mxu0 0.0
    %1041 = vmatpush2.xpose.msra.mxu0 0.0
    %1042 = vmatprep.mubr.f32.mxu0 0.0
    %1043 = vmatmul.mubr.f32.gmra.mxu0 %v974
    %v1044 = vpop.f32.mrf.mxu0
    %v1045 = vadd.f32 0.0, %v1044
    %v1046 = vpop.f32.mrf.mxu0
    %1047 = vdwg.mxu0
    %v1048 = vmul.f32 %v501, 0.17677669
    %v1049 = vmul.f32 %v577, 0.17677669
    %v1050 = vmul.f32 %v655, 0.17677669
    %v1051 = vmul.f32 %v733, 0.17677669
    %v1052 = vmul.f32 %v811, 0.17677669
    %v1053 = vmul.f32 %v889, 0.17677669
    %v1054 = vmul.f32 %v967, 0.17677669
    %v1055 = vmul.f32 %v1045, 0.17677669
    %vm1056 = vcmask 64512
    %v1057 = vsel %vm1056, %v1048, -inf
    %1058 = vmax.xlane.f32.xlu0 %v1057
    %v1059 = vpop.xlane.xlu0 %1058
    %v1060 = vsel %vm1056, %v1049, -inf
    %1061 = vmax.xlane.f32.xlu0 %v1060
    %v1062 = vpop.xlane.xlu0 %1061
    %v1063 = vsel %vm1056, %v1050, -inf
    %1064 = vmax.xlane.f32.xlu0 %v1063
    %v1065 = vpop.xlane.xlu0 %1064
    %v1066 = vsel %vm1056, %v1051, -inf
    %1067 = vmax.xlane.f32.xlu0 %v1066
    %v1068 = vpop.xlane.xlu0 %1067
    %v1069 = vsel %vm1056, %v1052, -inf
    %1070 = vmax.xlane.f32.xlu0 %v1069
    %v1071 = vpop.xlane.xlu0 %1070
    %v1072 = vsel %vm1056, %v1053, -inf
    %1073 = vmax.xlane.f32.xlu0 %v1072
    %v1074 = vpop.xlane.xlu0 %1073
    %v1075 = vsel %vm1056, %v1054, -inf
    %1076 = vmax.xlane.f32.xlu0 %v1075
    %v1077 = vpop.xlane.xlu0 %1076
    %v1078 = vsel %vm1056, %v1055, -inf
    %1079 = vmax.xlane.f32.xlu0 %v1078
    %v1080 = vpop.xlane.xlu0 %1079
    %v1081 = vsub.f32 %v1048, %v1059
    %v1082 = vsub.f32 %v1049, %v1062
    %v1083 = vsub.f32 %v1050, %v1065
    %v1084 = vsub.f32 %v1051, %v1068
    %v1085 = vsub.f32 %v1052, %v1071
    %v1086 = vsub.f32 %v1053, %v1074
    %v1087 = vsub.f32 %v1054, %v1077
    %v1088 = vsub.f32 %v1055, %v1080
    %v1089 = vmul.f32 %v1081, 1.442695
    %v1090 = vpow.pop %v1089
    %v1091 = vmul.f32 %v1082, 1.442695
    %v1092 = vpow.pop %v1091
    %v1093 = vmul.f32 %v1083, 1.442695
    %v1094 = vpow.pop %v1093
    %v1095 = vmul.f32 %v1084, 1.442695
    %v1096 = vpow.pop %v1095
    %v1097 = vmul.f32 %v1085, 1.442695
    %v1098 = vpow.pop %v1097
    %v1099 = vmul.f32 %v1086, 1.442695
    %v1100 = vpow.pop %v1099
    %v1101 = vmul.f32 %v1087, 1.442695
    %v1102 = vpow.pop %v1101
    %v1103 = vmul.f32 %v1088, 1.442695
    %v1104 = vpow.pop %v1103
    %v1105 = vsel %vm1056, %v1090, 0.0
    %1106 = vadd.xlane.f32.xlu0 %v1105
    %v1107 = vpop.xlane.xlu0 %1106
    %v1108 = vsel %vm1056, %v1092, 0.0
    %1109 = vadd.xlane.f32.xlu0 %v1108
    %v1110 = vpop.xlane.xlu0 %1109
    %v1111 = vsel %vm1056, %v1094, 0.0
    %1112 = vadd.xlane.f32.xlu0 %v1111
    %v1113 = vpop.xlane.xlu0 %1112
    %v1114 = vsel %vm1056, %v1096, 0.0
    %1115 = vadd.xlane.f32.xlu0 %v1114
    %v1116 = vpop.xlane.xlu0 %1115
    %v1117 = vsel %vm1056, %v1098, 0.0
    %1118 = vadd.xlane.f32.xlu0 %v1117
    %v1119 = vpop.xlane.xlu0 %1118
    %v1120 = vsel %vm1056, %v1100, 0.0
    %1121 = vadd.xlane.f32.xlu0 %v1120
    %v1122 = vpop.xlane.xlu0 %1121
    %v1123 = vsel %vm1056, %v1102, 0.0
    %1124 = vadd.xlane.f32.xlu0 %v1123
    %v1125 = vpop.xlane.xlu0 %1124
    %v1126 = vsel %vm1056, %v1104, 0.0
    %1127 = vadd.xlane.f32.xlu0 %v1126
    %v1128 = vpop.xlane.xlu0 %1127
    %v1129 = vrcp.pop %v1107
    %v1130 = vrcp.pop %v1110
    %v1131 = vrcp.pop %v1113
    %v1132 = vrcp.pop %v1116
    %v1133 = vrcp.pop %v1119
    %v1134 = vrcp.pop %v1122
    %v1135 = vrcp.pop %v1125
    %v1136 = vrcp.pop %v1128
    %v1137 = vmul.f32 %v1090, %v1129
    %v1138 = vmul.f32 %v1092, %v1130
    %v1139 = vmul.f32 %v1094, %v1131
    %v1140 = vmul.f32 %v1096, %v1132
    %v1141 = vmul.f32 %v1098, %v1133
    %v1142 = vmul.f32 %v1100, %v1134
    %v1143 = vmul.f32 %v1102, %v1135
    %v1144 = vmul.f32 %v1104, %v1136
    %v1146 = vsel %vm1056, %v1137, 0
    %1148 = vmatprep.subr.mxu0 0.0
    %1149 = vmatpush1.msra.mxu0 0.0
    %1150 = vmatprep.subr.mxu0 0.0
    %1151 = vmatpush1.msra.mxu0 0.0
    %1152 = vmatprep.subr.mxu0 0.0
    %1153 = vmatpush1.msra.mxu0 0.0
    %1154 = vmatprep.subr.mxu0 0.0
    %1155 = vmatpush1.msra.mxu0 0.0
    %1156 = vmatprep.subr.mxu0 0.0
    %1157 = vmatpush1.msra.mxu0 0.0
    %1158 = vmatprep.subr.mxu0 0.0
    %1159 = vmatpush1.msra.mxu0 0.0
    %1160 = vmatprep.subr.mxu0 0.0
    %1161 = vmatpush1.msra.mxu0 0.0
    %1162 = vmatprep.subr.mxu0 0.0
    %1163 = vmatpush1.msra.mxu0 0.0
    %1164 = vmatprep.subr.mxu0 0.0
    %1165 = vmatpush1.msra.mxu0 0.0
    %1166 = vmatprep.subr.mxu0 0.0
    %1167 = vmatpush1.msra.mxu0 0.0
    %1168 = vmatprep.subr.mxu0 0.0
    %1169 = vmatpush1.msra.mxu0 0.0
    %1170 = vmatprep.subr.mxu0 0.0
    %1171 = vmatpush1.msra.mxu0 0.0
    %1172 = vmatprep.subr.mxu0 0.0
    %1173 = vmatpush1.msra.mxu0 0.0
    %1174 = vmatprep.subr.mxu0 0.0
    %1175 = vmatpush1.msra.mxu0 0.0
    %1176 = vmatprep.subr.mxu0 0.0
    %1177 = vmatpush1.msra.mxu0 0.0
    %1178 = vmatprep.subr.mxu0 0.0
    %1179 = vmatpush1.msra.mxu0 %v425
    %1180 = vmatprep.subr.mxu0 0.0
    %1181 = vmatpush2.msra.mxu0 0.0
    %1182 = vmatprep.subr.mxu0 0.0
    %1183 = vmatpush2.msra.mxu0 0.0
    %1184 = vmatprep.subr.mxu0 0.0
    %1185 = vmatpush2.msra.mxu0 0.0
    %1186 = vmatprep.subr.mxu0 0.0
    %1187 = vmatpush2.msra.mxu0 0.0
    %1188 = vmatprep.subr.mxu0 0.0
    %1189 = vmatpush2.msra.mxu0 0.0
    %1190 = vmatprep.subr.mxu0 0.0
    %1191 = vmatpush2.msra.mxu0 0.0
    %1192 = vmatprep.subr.mxu0 0.0
    %1193 = vmatpush2.msra.mxu0 0.0
    %1194 = vmatprep.subr.mxu0 0.0
    %1195 = vmatpush2.msra.mxu0 0.0
    %1196 = vmatprep.subr.mxu0 0.0
    %1197 = vmatpush2.msra.mxu0 0.0
    %1198 = vmatprep.subr.mxu0 0.0
    %1199 = vmatpush2.msra.mxu0 0.0
    %1200 = vmatprep.subr.mxu0 0.0
    %1201 = vmatpush2.msra.mxu0 0.0
    %1202 = vmatprep.subr.mxu0 0.0
    %1203 = vmatpush2.msra.mxu0 0.0
    %1204 = vmatprep.subr.mxu0 0.0
    %1205 = vmatpush2.msra.mxu0 0.0
    %1206 = vmatprep.subr.mxu0 0.0
    %1207 = vmatpush2.msra.mxu0 0.0
    %1208 = vmatprep.subr.mxu0 0.0
    %1209 = vmatpush2.msra.mxu0 0.0
    %1210 = vmatprep.subr.mxu0 0.0
    %1211 = vmatpush2.msra.mxu0 0.0
    %1212 = vmatprep.mubr.f32.mxu0 0.0
    %1213 = vmatmul.mubr.f32.gmra.mxu0 %v1146
    %v1214 = vpop.f32.mrf.mxu0
    %v1215 = vadd.f32 0.0, %v1214
    %v1216 = vpop.f32.mrf.mxu0
    %1217 = vdwg.mxu0
    %v1219 = vsel %vm1056, %v1138, 0
    %1221 = vmatprep.subr.mxu0 0.0
    %1222 = vmatpush1.msra.mxu0 0.0
    %1223 = vmatprep.subr.mxu0 0.0
    %1224 = vmatpush1.msra.mxu0 0.0
    %1225 = vmatprep.subr.mxu0 0.0
    %1226 = vmatpush1.msra.mxu0 0.0
    %1227 = vmatprep.subr.mxu0 0.0
    %1228 = vmatpush1.msra.mxu0 0.0
    %1229 = vmatprep.subr.mxu0 0.0
    %1230 = vmatpush1.msra.mxu0 0.0
    %1231 = vmatprep.subr.mxu0 0.0
    %1232 = vmatpush1.msra.mxu0 0.0
    %1233 = vmatprep.subr.mxu0 0.0
    %1234 = vmatpush1.msra.mxu0 0.0
    %1235 = vmatprep.subr.mxu0 0.0
    %1236 = vmatpush1.msra.mxu0 0.0
    %1237 = vmatprep.subr.mxu0 0.0
    %1238 = vmatpush1.msra.mxu0 0.0
    %1239 = vmatprep.subr.mxu0 0.0
    %1240 = vmatpush1.msra.mxu0 0.0
    %1241 = vmatprep.subr.mxu0 0.0
    %1242 = vmatpush1.msra.mxu0 0.0
    %1243 = vmatprep.subr.mxu0 0.0
    %1244 = vmatpush1.msra.mxu0 0.0
    %1245 = vmatprep.subr.mxu0 0.0
    %1246 = vmatpush1.msra.mxu0 0.0
    %1247 = vmatprep.subr.mxu0 0.0
    %1248 = vmatpush1.msra.mxu0 0.0
    %1249 = vmatprep.subr.mxu0 0.0
    %1250 = vmatpush1.msra.mxu0 0.0
    %1251 = vmatprep.subr.mxu0 0.0
    %1252 = vmatpush1.msra.mxu0 %v426
    %1253 = vmatprep.subr.mxu0 0.0
    %1254 = vmatpush2.msra.mxu0 0.0
    %1255 = vmatprep.subr.mxu0 0.0
    %1256 = vmatpush2.msra.mxu0 0.0
    %1257 = vmatprep.subr.mxu0 0.0
    %1258 = vmatpush2.msra.mxu0 0.0
    %1259 = vmatprep.subr.mxu0 0.0
    %1260 = vmatpush2.msra.mxu0 0.0
    %1261 = vmatprep.subr.mxu0 0.0
    %1262 = vmatpush2.msra.mxu0 0.0
    %1263 = vmatprep.subr.mxu0 0.0
    %1264 = vmatpush2.msra.mxu0 0.0
    %1265 = vmatprep.subr.mxu0 0.0
    %1266 = vmatpush2.msra.mxu0 0.0
    %1267 = vmatprep.subr.mxu0 0.0
    %1268 = vmatpush2.msra.mxu0 0.0
    %1269 = vmatprep.subr.mxu0 0.0
    %1270 = vmatpush2.msra.mxu0 0.0
    %1271 = vmatprep.subr.mxu0 0.0
    %1272 = vmatpush2.msra.mxu0 0.0
    %1273 = vmatprep.subr.mxu0 0.0
    %1274 = vmatpush2.msra.mxu0 0.0
    %1275 = vmatprep.subr.mxu0 0.0
    %1276 = vmatpush2.msra.mxu0 0.0
    %1277 = vmatprep.subr.mxu0 0.0
    %1278 = vmatpush2.msra.mxu0 0.0
    %1279 = vmatprep.subr.mxu0 0.0
    %1280 = vmatpush2.msra.mxu0 0.0
    %1281 = vmatprep.subr.mxu0 0.0
    %1282 = vmatpush2.msra.mxu0 0.0
    %1283 = vmatprep.subr.mxu0 0.0
    %1284 = vmatpush2.msra.mxu0 0.0
    %1285 = vmatprep.mubr.f32.mxu0 0.0
    %1286 = vmatmul.mubr.f32.gmra.mxu0 %v1219
    %v1287 = vpop.f32.mrf.mxu0
    %v1288 = vadd.f32 0.0, %v1287
    %v1289 = vpop.f32.mrf.mxu0
    %1290 = vdwg.mxu0
    %v1291 = vpack.c.bf16 %v1288, %v1215
    %v1292 = vld [vmem:[#allocation4] sm:$0xf]
    %v1293 = vld [vmem:[#allocation4 + $0x4] sm:$0xf]
    %v1294 = vld [vmem:[#allocation4 + $0x8] sm:$0xf]
    %v1295 = vld [vmem:[#allocation4 + $0xc] sm:$0xf]
    %1297 = vrot.lane.b32.xlu0 %v425, 96
    %v1298 = vpop.permute.xlu0 %1297
    %v1301 = vsel %vm1056, %v1139, 0
    %1303 = vmatprep.subr.mxu0 0.0
    %1304 = vmatpush1.msra.mxu0 0.0
    %1305 = vmatprep.subr.mxu0 0.0
    %1306 = vmatpush1.msra.mxu0 0.0
    %1307 = vmatprep.subr.mxu0 0.0
    %1308 = vmatpush1.msra.mxu0 0.0
    %1309 = vmatprep.subr.mxu0 0.0
    %1310 = vmatpush1.msra.mxu0 0.0
    %1311 = vmatprep.subr.mxu0 0.0
    %1312 = vmatpush1.msra.mxu0 0.0
    %1313 = vmatprep.subr.mxu0 0.0
    %1314 = vmatpush1.msra.mxu0 0.0
    %1315 = vmatprep.subr.mxu0 0.0
    %1316 = vmatpush1.msra.mxu0 0.0
    %1317 = vmatprep.subr.mxu0 0.0
    %1318 = vmatpush1.msra.mxu0 0.0
    %1319 = vmatprep.subr.mxu0 0.0
    %1320 = vmatpush1.msra.mxu0 0.0
    %1321 = vmatprep.subr.mxu0 0.0
    %1322 = vmatpush1.msra.mxu0 0.0
    %1323 = vmatprep.subr.mxu0 0.0
    %1324 = vmatpush1.msra.mxu0 0.0
    %1325 = vmatprep.subr.mxu0 0.0
    %1326 = vmatpush1.msra.mxu0 0.0
    %1327 = vmatprep.subr.mxu0 0.0
    %1328 = vmatpush1.msra.mxu0 0.0
    %1329 = vmatprep.subr.mxu0 0.0
    %1330 = vmatpush1.msra.mxu0 0.0
    %1331 = vmatprep.subr.mxu0 0.0
    %1332 = vmatpush1.msra.mxu0 0.0
    %1333 = vmatprep.subr.mxu0 0.0
    %1334 = vmatpush1.msra.mxu0 %v1298
    %1335 = vmatprep.subr.mxu0 0.0
    %1336 = vmatpush2.msra.mxu0 0.0
    %1337 = vmatprep.subr.mxu0 0.0
    %1338 = vmatpush2.msra.mxu0 0.0
    %1339 = vmatprep.subr.mxu0 0.0
    %1340 = vmatpush2.msra.mxu0 0.0
    %1341 = vmatprep.subr.mxu0 0.0
    %1342 = vmatpush2.msra.mxu0 0.0
    %1343 = vmatprep.subr.mxu0 0.0
    %1344 = vmatpush2.msra.mxu0 0.0
    %1345 = vmatprep.subr.mxu0 0.0
    %1346 = vmatpush2.msra.mxu0 0.0
    %1347 = vmatprep.subr.mxu0 0.0
    %1348 = vmatpush2.msra.mxu0 0.0
    %1349 = vmatprep.subr.mxu0 0.0
    %1350 = vmatpush2.msra.mxu0 0.0
    %1351 = vmatprep.subr.mxu0 0.0
    %1352 = vmatpush2.msra.mxu0 0.0
    %1353 = vmatprep.subr.mxu0 0.0
    %1354 = vmatpush2.msra.mxu0 0.0
    %1355 = vmatprep.subr.mxu0 0.0
    %1356 = vmatpush2.msra.mxu0 0.0
    %1357 = vmatprep.subr.mxu0 0.0
    %1358 = vmatpush2.msra.mxu0 0.0
    %1359 = vmatprep.subr.mxu0 0.0
    %1360 = vmatpush2.msra.mxu0 0.0
    %1361 = vmatprep.subr.mxu0 0.0
    %1362 = vmatpush2.msra.mxu0 0.0
    %1363 = vmatprep.subr.mxu0 0.0
    %1364 = vmatpush2.msra.mxu0 0.0
    %1365 = vmatprep.subr.mxu0 0.0
    %1366 = vmatpush2.msra.mxu0 0.0
    %1367 = vmatprep.mubr.f32.mxu0 0.0
    %1368 = vmatmul.mubr.f32.gmra.mxu0 %v1301
    %v1369 = vpop.f32.mrf.mxu0
    %v1370 = vadd.f32 0.0, %v1369
    %v1371 = vpop.f32.mrf.mxu0
    %1372 = vdwg.mxu0
    %1374 = vrot.lane.b32.xlu0 %v426, 96
    %v1375 = vpop.permute.xlu0 %1374
    %v1378 = vsel %vm1056, %v1140, 0
    %1380 = vmatprep.subr.mxu0 0.0
    %1381 = vmatpush1.msra.mxu0 0.0
    %1382 = vmatprep.subr.mxu0 0.0
    %1383 = vmatpush1.msra.mxu0 0.0
    %1384 = vmatprep.subr.mxu0 0.0
    %1385 = vmatpush1.msra.mxu0 0.0
    %1386 = vmatprep.subr.mxu0 0.0
    %1387 = vmatpush1.msra.mxu0 0.0
    %1388 = vmatprep.subr.mxu0 0.0
    %1389 = vmatpush1.msra.mxu0 0.0
    %1390 = vmatprep.subr.mxu0 0.0
    %1391 = vmatpush1.msra.mxu0 0.0
    %1392 = vmatprep.subr.mxu0 0.0
    %1393 = vmatpush1.msra.mxu0 0.0
    %1394 = vmatprep.subr.mxu0 0.0
    %1395 = vmatpush1.msra.mxu0 0.0
    %1396 = vmatprep.subr.mxu0 0.0
    %1397 = vmatpush1.msra.mxu0 0.0
    %1398 = vmatprep.subr.mxu0 0.0
    %1399 = vmatpush1.msra.mxu0 0.0
    %1400 = vmatprep.subr.mxu0 0.0
    %1401 = vmatpush1.msra.mxu0 0.0
    %1402 = vmatprep.subr.mxu0 0.0
    %1403 = vmatpush1.msra.mxu0 0.0
    %1404 = vmatprep.subr.mxu0 0.0
    %1405 = vmatpush1.msra.mxu0 0.0
    %1406 = vmatprep.subr.mxu0 0.0
    %1407 = vmatpush1.msra.mxu0 0.0
    %1408 = vmatprep.subr.mxu0 0.0
    %1409 = vmatpush1.msra.mxu0 0.0
    %1410 = vmatprep.subr.mxu0 0.0
    %1411 = vmatpush1.msra.mxu0 %v1375
    %1412 = vmatprep.subr.mxu0 0.0
    %1413 = vmatpush2.msra.mxu0 0.0
    %1414 = vmatprep.subr.mxu0 0.0
    %1415 = vmatpush2.msra.mxu0 0.0
    %1416 = vmatprep.subr.mxu0 0.0
    %1417 = vmatpush2.msra.mxu0 0.0
    %1418 = vmatprep.subr.mxu0 0.0
    %1419 = vmatpush2.msra.mxu0 0.0
    %1420 = vmatprep.subr.mxu0 0.0
    %1421 = vmatpush2.msra.mxu0 0.0
    %1422 = vmatprep.subr.mxu0 0.0
    %1423 = vmatpush2.msra.mxu0 0.0
    %1424 = vmatprep.subr.mxu0 0.0
    %1425 = vmatpush2.msra.mxu0 0.0
    %1426 = vmatprep.subr.mxu0 0.0
    %1427 = vmatpush2.msra.mxu0 0.0
    %1428 = vmatprep.subr.mxu0 0.0
    %1429 = vmatpush2.msra.mxu0 0.0
    %1430 = vmatprep.subr.mxu0 0.0
    %1431 = vmatpush2.msra.mxu0 0.0
    %1432 = vmatprep.subr.mxu0 0.0
    %1433 = vmatpush2.msra.mxu0 0.0
    %1434 = vmatprep.subr.mxu0 0.0
    %1435 = vmatpush2.msra.mxu0 0.0
    %1436 = vmatprep.subr.mxu0 0.0
    %1437 = vmatpush2.msra.mxu0 0.0
    %1438 = vmatprep.subr.mxu0 0.0
    %1439 = vmatpush2.msra.mxu0 0.0
    %1440 = vmatprep.subr.mxu0 0.0
    %1441 = vmatpush2.msra.mxu0 0.0
    %1442 = vmatprep.subr.mxu0 0.0
    %1443 = vmatpush2.msra.mxu0 0.0
    %1444 = vmatprep.mubr.f32.mxu0 0.0
    %1445 = vmatmul.mubr.f32.gmra.mxu0 %v1378
    %v1446 = vpop.f32.mrf.mxu0
    %v1447 = vadd.f32 0.0, %v1446
    %v1448 = vpop.f32.mrf.mxu0
    %1449 = vdwg.mxu0
    %v1450 = vpack.c.bf16 %v1447, %v1370
    %s1451 = scalar_lea.vmem [#allocation4], 16
    %v1452 = vld [vmem:[%s1451] sm:$0xf]
    %v1453 = vld [vmem:[%s1451 + $0x4] sm:$0xf]
    %v1454 = vld [vmem:[%s1451 + $0x8] sm:$0xf]
    %v1455 = vld [vmem:[%s1451 + $0xc] sm:$0xf]
    %v1460 = vunpack.c.l.b16 %v1452
    %v1461 = vunpack.c.l.b16 %v1453
    %v1462 = vunpack.c.l.b16 %v1454
    %v1463 = vunpack.c.l.b16 %v1455
    %v1464 = vpack.c.b16 %v1461, %v1460
    %v1465 = vpack.c.b16 %v1463, %v1462
    %v1469 = vsel %vm427, %v1450, 0
    %1471 = vmatprep.subr.bf16.mxu0 0
    %1472 = vmatpush1.bf16.msra.mxu0 0
    %1473 = vmatprep.subr.bf16.mxu0 0
    %1474 = vmatpush1.bf16.msra.mxu0 0
    %1475 = vmatprep.subr.bf16.mxu0 0
    %1476 = vmatpush1.bf16.msra.mxu0 0
    %1477 = vmatprep.subr.bf16.mxu0 0
    %1478 = vmatpush1.bf16.msra.mxu0 0
    %1479 = vmatprep.subr.bf16.mxu0 0
    %1480 = vmatpush1.bf16.msra.mxu0 0
    %1481 = vmatprep.subr.bf16.mxu0 0
    %1482 = vmatpush1.bf16.msra.mxu0 0
    %1483 = vmatprep.subr.bf16.mxu0 0
    %1484 = vmatpush1.bf16.msra.mxu0 %v1465
    %1485 = vmatprep.subr.bf16.mxu0 0
    %1486 = vmatpush1.bf16.msra.mxu0 %v1464
    %1487 = vmatprep.subr.bf16.mxu0 0
    %1488 = vmatpush2.bf16.msra.mxu0 0
    %1489 = vmatprep.subr.bf16.mxu0 0
    %1490 = vmatpush2.bf16.msra.mxu0 0
    %1491 = vmatprep.subr.bf16.mxu0 0
    %1492 = vmatpush2.bf16.msra.mxu0 0
    %1493 = vmatprep.subr.bf16.mxu0 0
    %1494 = vmatpush2.bf16.msra.mxu0 0
    %1495 = vmatprep.subr.bf16.mxu0 0
    %1496 = vmatpush2.bf16.msra.mxu0 0
    %1497 = vmatprep.subr.bf16.mxu0 0
    %1498 = vmatpush2.bf16.msra.mxu0 0
    %1499 = vmatprep.subr.bf16.mxu0 0
    %1500 = vmatpush2.bf16.msra.mxu0 0
    %1501 = vmatprep.subr.bf16.mxu0 0
    %1502 = vmatpush2.bf16.msra.mxu0 0
    %1503 = vmatprep.mubr.bf16.mxu0 0
    %1504 = vmatmul.mubr.bf16.gmra.mxu0 %v1469
    %v1505 = vpop.f32.mrf.mxu0
    %v1506 = vadd.f32 0.0, %v1505
    %v1507 = vpop.f32.mrf.mxu0
    %v1508 = vpop.f32.mrf.mxu0
    %v1509 = vadd.f32 0.0, %v1508
    %v1510 = vpop.f32.mrf.mxu0
    %1511 = vdwg.mxu0
    %v1516 = vunpack.c.l.b16 %v1292
    %v1517 = vunpack.c.l.b16 %v1293
    %v1518 = vunpack.c.l.b16 %v1294
    %v1519 = vunpack.c.l.b16 %v1295
    %v1520 = vpack.c.b16 %v1517, %v1516
    %v1521 = vpack.c.b16 %v1519, %v1518
    %v1525 = vsel %vm427, %v1291, 0
    %1527 = vmatprep.subr.bf16.mxu0 0
    %1528 = vmatpush1.bf16.msra.mxu0 0
    %1529 = vmatprep.subr.bf16.mxu0 0
    %1530 = vmatpush1.bf16.msra.mxu0 0
    %1531 = vmatprep.subr.bf16.mxu0 0
    %1532 = vmatpush1.bf16.msra.mxu0 0
    %1533 = vmatprep.subr.bf16.mxu0 0
    %1534 = vmatpush1.bf16.msra.mxu0 0
    %1535 = vmatprep.subr.bf16.mxu0 0
    %1536 = vmatpush1.bf16.msra.mxu0 0
    %1537 = vmatprep.subr.bf16.mxu0 0
    %1538 = vmatpush1.bf16.msra.mxu0 0
    %1539 = vmatprep.subr.bf16.mxu0 0
    %1540 = vmatpush1.bf16.msra.mxu0 %v1521
    %1541 = vmatprep.subr.bf16.mxu0 0
    %1542 = vmatpush1.bf16.msra.mxu0 %v1520
    %1543 = vmatprep.subr.bf16.mxu0 0
    %1544 = vmatpush2.bf16.msra.mxu0 0
    %1545 = vmatprep.subr.bf16.mxu0 0
    %1546 = vmatpush2.bf16.msra.mxu0 0
    %1547 = vmatprep.subr.bf16.mxu0 0
    %1548 = vmatpush2.bf16.msra.mxu0 0
    %1549 = vmatprep.subr.bf16.mxu0 0
    %1550 = vmatpush2.bf16.msra.mxu0 0
    %1551 = vmatprep.subr.bf16.mxu0 0
    %1552 = vmatpush2.bf16.msra.mxu0 0
    %1553 = vmatprep.subr.bf16.mxu0 0
    %1554 = vmatpush2.bf16.msra.mxu0 0
    %1555 = vmatprep.subr.bf16.mxu0 0
    %1556 = vmatpush2.bf16.msra.mxu0 0
    %1557 = vmatprep.subr.bf16.mxu0 0
    %1558 = vmatpush2.bf16.msra.mxu0 0
    %1559 = vmatprep.mubr.bf16.mxu0 0
    %1560 = vmatmul.mubr.bf16.gmra.mxu0 %v1525
    %v1561 = vpop.f32.mrf.mxu0
    %v1562 = vadd.f32 %v1506, %v1561
    %v1563 = vpop.f32.mrf.mxu0
    %v1564 = vpop.f32.mrf.mxu0
    %v1565 = vadd.f32 %v1509, %v1564
    %v1566 = vpop.f32.mrf.mxu0
    %1567 = vdwg.mxu0
    %1568 = vrot.lane.b32.xlu0 %v425, 64
    %v1569 = vpop.permute.xlu0 %1568
    %v1572 = vsel %vm1056, %v1141, 0
    %1574 = vmatprep.subr.mxu0 0.0
    %1575 = vmatpush1.msra.mxu0 0.0
    %1576 = vmatprep.subr.mxu0 0.0
    %1577 = vmatpush1.msra.mxu0 0.0
    %1578 = vmatprep.subr.mxu0 0.0
    %1579 = vmatpush1.msra.mxu0 0.0
    %1580 = vmatprep.subr.mxu0 0.0
    %1581 = vmatpush1.msra.mxu0 0.0
    %1582 = vmatprep.subr.mxu0 0.0
    %1583 = vmatpush1.msra.mxu0 0.0
    %1584 = vmatprep.subr.mxu0 0.0
    %1585 = vmatpush1.msra.mxu0 0.0
    %1586 = vmatprep.subr.mxu0 0.0
    %1587 = vmatpush1.msra.mxu0 0.0
    %1588 = vmatprep.subr.mxu0 0.0
    %1589 = vmatpush1.msra.mxu0 0.0
    %1590 = vmatprep.subr.mxu0 0.0
    %1591 = vmatpush1.msra.mxu0 0.0
    %1592 = vmatprep.subr.mxu0 0.0
    %1593 = vmatpush1.msra.mxu0 0.0
    %1594 = vmatprep.subr.mxu0 0.0
    %1595 = vmatpush1.msra.mxu0 0.0
    %1596 = vmatprep.subr.mxu0 0.0
    %1597 = vmatpush1.msra.mxu0 0.0
    %1598 = vmatprep.subr.mxu0 0.0
    %1599 = vmatpush1.msra.mxu0 0.0
    %1600 = vmatprep.subr.mxu0 0.0
    %1601 = vmatpush1.msra.mxu0 0.0
    %1602 = vmatprep.subr.mxu0 0.0
    %1603 = vmatpush1.msra.mxu0 0.0
    %1604 = vmatprep.subr.mxu0 0.0
    %1605 = vmatpush1.msra.mxu0 %v1569
    %1606 = vmatprep.subr.mxu0 0.0
    %1607 = vmatpush2.msra.mxu0 0.0
    %1608 = vmatprep.subr.mxu0 0.0
    %1609 = vmatpush2.msra.mxu0 0.0
    %1610 = vmatprep.subr.mxu0 0.0
    %1611 = vmatpush2.msra.mxu0 0.0
    %1612 = vmatprep.subr.mxu0 0.0
    %1613 = vmatpush2.msra.mxu0 0.0
    %1614 = vmatprep.subr.mxu0 0.0
    %1615 = vmatpush2.msra.mxu0 0.0
    %1616 = vmatprep.subr.mxu0 0.0
    %1617 = vmatpush2.msra.mxu0 0.0
    %1618 = vmatprep.subr.mxu0 0.0
    %1619 = vmatpush2.msra.mxu0 0.0
    %1620 = vmatprep.subr.mxu0 0.0
    %1621 = vmatpush2.msra.mxu0 0.0
    %1622 = vmatprep.subr.mxu0 0.0
    %1623 = vmatpush2.msra.mxu0 0.0
    %1624 = vmatprep.subr.mxu0 0.0
    %1625 = vmatpush2.msra.mxu0 0.0
    %1626 = vmatprep.subr.mxu0 0.0
    %1627 = vmatpush2.msra.mxu0 0.0
    %1628 = vmatprep.subr.mxu0 0.0
    %1629 = vmatpush2.msra.mxu0 0.0
    %1630 = vmatprep.subr.mxu0 0.0
    %1631 = vmatpush2.msra.mxu0 0.0
    %1632 = vmatprep.subr.mxu0 0.0
    %1633 = vmatpush2.msra.mxu0 0.0
    %1634 = vmatprep.subr.mxu0 0.0
    %1635 = vmatpush2.msra.mxu0 0.0
    %1636 = vmatprep.subr.mxu0 0.0
    %1637 = vmatpush2.msra.mxu0 0.0
    %1638 = vmatprep.mubr.f32.mxu0 0.0
    %1639 = vmatmul.mubr.f32.gmra.mxu0 %v1572
    %v1640 = vpop.f32.mrf.mxu0
    %v1641 = vadd.f32 0.0, %v1640
    %v1642 = vpop.f32.mrf.mxu0
    %1643 = vdwg.mxu0
    %1644 = vrot.lane.b32.xlu0 %v426, 64
    %v1645 = vpop.permute.xlu0 %1644
    %v1648 = vsel %vm1056, %v1142, 0
    %1650 = vmatprep.subr.mxu0 0.0
    %1651 = vmatpush1.msra.mxu0 0.0
    %1652 = vmatprep.subr.mxu0 0.0
    %1653 = vmatpush1.msra.mxu0 0.0
    %1654 = vmatprep.subr.mxu0 0.0
    %1655 = vmatpush1.msra.mxu0 0.0
    %1656 = vmatprep.subr.mxu0 0.0
    %1657 = vmatpush1.msra.mxu0 0.0
    %1658 = vmatprep.subr.mxu0 0.0
    %1659 = vmatpush1.msra.mxu0 0.0
    %1660 = vmatprep.subr.mxu0 0.0
    %1661 = vmatpush1.msra.mxu0 0.0
    %1662 = vmatprep.subr.mxu0 0.0
    %1663 = vmatpush1.msra.mxu0 0.0
    %1664 = vmatprep.subr.mxu0 0.0
    %1665 = vmatpush1.msra.mxu0 0.0
    %1666 = vmatprep.subr.mxu0 0.0
    %1667 = vmatpush1.msra.mxu0 0.0
    %1668 = vmatprep.subr.mxu0 0.0
    %1669 = vmatpush1.msra.mxu0 0.0
    %1670 = vmatprep.subr.mxu0 0.0
    %1671 = vmatpush1.msra.mxu0 0.0
    %1672 = vmatprep.subr.mxu0 0.0
    %1673 = vmatpush1.msra.mxu0 0.0
    %1674 = vmatprep.subr.mxu0 0.0
    %1675 = vmatpush1.msra.mxu0 0.0
    %1676 = vmatprep.subr.mxu0 0.0
    %1677 = vmatpush1.msra.mxu0 0.0
    %1678 = vmatprep.subr.mxu0 0.0
    %1679 = vmatpush1.msra.mxu0 0.0
    %1680 = vmatprep.subr.mxu0 0.0
    %1681 = vmatpush1.msra.mxu0 %v1645
    %1682 = vmatprep.subr.mxu0 0.0
    %1683 = vmatpush2.msra.mxu0 0.0
    %1684 = vmatprep.subr.mxu0 0.0
    %1685 = vmatpush2.msra.mxu0 0.0
    %1686 = vmatprep.subr.mxu0 0.0
    %1687 = vmatpush2.msra.mxu0 0.0
    %1688 = vmatprep.subr.mxu0 0.0
    %1689 = vmatpush2.msra.mxu0 0.0
    %1690 = vmatprep.subr.mxu0 0.0
    %1691 = vmatpush2.msra.mxu0 0.0
    %1692 = vmatprep.subr.mxu0 0.0
    %1693 = vmatpush2.msra.mxu0 0.0
    %1694 = vmatprep.subr.mxu0 0.0
    %1695 = vmatpush2.msra.mxu0 0.0
    %1696 = vmatprep.subr.mxu0 0.0
    %1697 = vmatpush2.msra.mxu0 0.0
    %1698 = vmatprep.subr.mxu0 0.0
    %1699 = vmatpush2.msra.mxu0 0.0
    %1700 = vmatprep.subr.mxu0 0.0
    %1701 = vmatpush2.msra.mxu0 0.0
    %1702 = vmatprep.subr.mxu0 0.0
    %1703 = vmatpush2.msra.mxu0 0.0
    %1704 = vmatprep.subr.mxu0 0.0
    %1705 = vmatpush2.msra.mxu0 0.0
    %1706 = vmatprep.subr.mxu0 0.0
    %1707 = vmatpush2.msra.mxu0 0.0
    %1708 = vmatprep.subr.mxu0 0.0
    %1709 = vmatpush2.msra.mxu0 0.0
    %1710 = vmatprep.subr.mxu0 0.0
    %1711 = vmatpush2.msra.mxu0 0.0
    %1712 = vmatprep.subr.mxu0 0.0
    %1713 = vmatpush2.msra.mxu0 0.0
    %1714 = vmatprep.mubr.f32.mxu0 0.0
    %1715 = vmatmul.mubr.f32.gmra.mxu0 %v1648
    %v1716 = vpop.f32.mrf.mxu0
    %v1717 = vadd.f32 0.0, %v1716
    %v1718 = vpop.f32.mrf.mxu0
    %1719 = vdwg.mxu0
    %v1720 = vpack.c.bf16 %v1717, %v1641
    %s1721 = scalar_lea.vmem [#allocation4], 32
    %v1722 = vld [vmem:[%s1721] sm:$0xf]
    %v1723 = vld [vmem:[%s1721 + $0x4] sm:$0xf]
    %v1724 = vld [vmem:[%s1721 + $0x8] sm:$0xf]
    %v1725 = vld [vmem:[%s1721 + $0xc] sm:$0xf]
    %v1730 = vunpack.c.l.b16 %v1722
    %v1731 = vunpack.c.l.b16 %v1723
    %v1732 = vunpack.c.l.b16 %v1724
    %v1733 = vunpack.c.l.b16 %v1725
    %v1734 = vpack.c.b16 %v1731, %v1730
    %v1735 = vpack.c.b16 %v1733, %v1732
    %v1739 = vsel %vm427, %v1720, 0
    %1741 = vmatprep.subr.bf16.mxu0 0
    %1742 = vmatpush1.bf16.msra.mxu0 0
    %1743 = vmatprep.subr.bf16.mxu0 0
    %1744 = vmatpush1.bf16.msra.mxu0 0
    %1745 = vmatprep.subr.bf16.mxu0 0
    %1746 = vmatpush1.bf16.msra.mxu0 0
    %1747 = vmatprep.subr.bf16.mxu0 0
    %1748 = vmatpush1.bf16.msra.mxu0 0
    %1749 = vmatprep.subr.bf16.mxu0 0
    %1750 = vmatpush1.bf16.msra.mxu0 0
    %1751 = vmatprep.subr.bf16.mxu0 0
    %1752 = vmatpush1.bf16.msra.mxu0 0
    %1753 = vmatprep.subr.bf16.mxu0 0
    %1754 = vmatpush1.bf16.msra.mxu0 %v1735
    %1755 = vmatprep.subr.bf16.mxu0 0
    %1756 = vmatpush1.bf16.msra.mxu0 %v1734
    %1757 = vmatprep.subr.bf16.mxu0 0
    %1758 = vmatpush2.bf16.msra.mxu0 0
    %1759 = vmatprep.subr.bf16.mxu0 0
    %1760 = vmatpush2.bf16.msra.mxu0 0
    %1761 = vmatprep.subr.bf16.mxu0 0
    %1762 = vmatpush2.bf16.msra.mxu0 0
    %1763 = vmatprep.subr.bf16.mxu0 0
    %1764 = vmatpush2.bf16.msra.mxu0 0
    %1765 = vmatprep.subr.bf16.mxu0 0
    %1766 = vmatpush2.bf16.msra.mxu0 0
    %1767 = vmatprep.subr.bf16.mxu0 0
    %1768 = vmatpush2.bf16.msra.mxu0 0
    %1769 = vmatprep.subr.bf16.mxu0 0
    %1770 = vmatpush2.bf16.msra.mxu0 0
    %1771 = vmatprep.subr.bf16.mxu0 0
    %1772 = vmatpush2.bf16.msra.mxu0 0
    %1773 = vmatprep.mubr.bf16.mxu0 0
    %1774 = vmatmul.mubr.bf16.gmra.mxu0 %v1739
    %v1775 = vpop.f32.mrf.mxu0
    %v1776 = vadd.f32 0.0, %v1775
    %v1777 = vpop.f32.mrf.mxu0
    %v1778 = vpop.f32.mrf.mxu0
    %v1779 = vadd.f32 0.0, %v1778
    %v1780 = vpop.f32.mrf.mxu0
    %1781 = vdwg.mxu0
    %v1782 = vadd.f32 %v1562, %v1776
    %v1783 = vadd.f32 %v1565, %v1779
    %1784 = vrot.lane.b32.xlu0 %v425, 32
    %v1785 = vpop.permute.xlu0 %1784
    %v1788 = vsel %vm1056, %v1143, 0
    %1790 = vmatprep.subr.mxu0 0.0
    %1791 = vmatpush1.msra.mxu0 0.0
    %1792 = vmatprep.subr.mxu0 0.0
    %1793 = vmatpush1.msra.mxu0 0.0
    %1794 = vmatprep.subr.mxu0 0.0
    %1795 = vmatpush1.msra.mxu0 0.0
    %1796 = vmatprep.subr.mxu0 0.0
    %1797 = vmatpush1.msra.mxu0 0.0
    %1798 = vmatprep.subr.mxu0 0.0
    %1799 = vmatpush1.msra.mxu0 0.0
    %1800 = vmatprep.subr.mxu0 0.0
    %1801 = vmatpush1.msra.mxu0 0.0
    %1802 = vmatprep.subr.mxu0 0.0
    %1803 = vmatpush1.msra.mxu0 0.0
    %1804 = vmatprep.subr.mxu0 0.0
    %1805 = vmatpush1.msra.mxu0 0.0
    %1806 = vmatprep.subr.mxu0 0.0
    %1807 = vmatpush1.msra.mxu0 0.0
    %1808 = vmatprep.subr.mxu0 0.0
    %1809 = vmatpush1.msra.mxu0 0.0
    %1810 = vmatprep.subr.mxu0 0.0
    %1811 = vmatpush1.msra.mxu0 0.0
    %1812 = vmatprep.subr.mxu0 0.0
    %1813 = vmatpush1.msra.mxu0 0.0
    %1814 = vmatprep.subr.mxu0 0.0
    %1815 = vmatpush1.msra.mxu0 0.0
    %1816 = vmatprep.subr.mxu0 0.0
    %1817 = vmatpush1.msra.mxu0 0.0
    %1818 = vmatprep.subr.mxu0 0.0
    %1819 = vmatpush1.msra.mxu0 0.0
    %1820 = vmatprep.subr.mxu0 0.0
    %1821 = vmatpush1.msra.mxu0 %v1785
    %1822 = vmatprep.subr.mxu0 0.0
    %1823 = vmatpush2.msra.mxu0 0.0
    %1824 = vmatprep.subr.mxu0 0.0
    %1825 = vmatpush2.msra.mxu0 0.0
    %1826 = vmatprep.subr.mxu0 0.0
    %1827 = vmatpush2.msra.mxu0 0.0
    %1828 = vmatprep.subr.mxu0 0.0
    %1829 = vmatpush2.msra.mxu0 0.0
    %1830 = vmatprep.subr.mxu0 0.0
    %1831 = vmatpush2.msra.mxu0 0.0
    %1832 = vmatprep.subr.mxu0 0.0
    %1833 = vmatpush2.msra.mxu0 0.0
    %1834 = vmatprep.subr.mxu0 0.0
    %1835 = vmatpush2.msra.mxu0 0.0
    %1836 = vmatprep.subr.mxu0 0.0
    %1837 = vmatpush2.msra.mxu0 0.0
    %1838 = vmatprep.subr.mxu0 0.0
    %1839 = vmatpush2.msra.mxu0 0.0
    %1840 = vmatprep.subr.mxu0 0.0
    %1841 = vmatpush2.msra.mxu0 0.0
    %1842 = vmatprep.subr.mxu0 0.0
    %1843 = vmatpush2.msra.mxu0 0.0
    %1844 = vmatprep.subr.mxu0 0.0
    %1845 = vmatpush2.msra.mxu0 0.0
    %1846 = vmatprep.subr.mxu0 0.0
    %1847 = vmatpush2.msra.mxu0 0.0
    %1848 = vmatprep.subr.mxu0 0.0
    %1849 = vmatpush2.msra.mxu0 0.0
    %1850 = vmatprep.subr.mxu0 0.0
    %1851 = vmatpush2.msra.mxu0 0.0
    %1852 = vmatprep.subr.mxu0 0.0
    %1853 = vmatpush2.msra.mxu0 0.0
    %1854 = vmatprep.mubr.f32.mxu0 0.0
    %1855 = vmatmul.mubr.f32.gmra.mxu0 %v1788
    %v1856 = vpop.f32.mrf.mxu0
    %v1857 = vadd.f32 0.0, %v1856
    %v1858 = vpop.f32.mrf.mxu0
    %1859 = vdwg.mxu0
    %1860 = vrot.lane.b32.xlu0 %v426, 32
    %v1861 = vpop.permute.xlu0 %1860
    %v1864 = vsel %vm1056, %v1144, 0
    %1866 = vmatprep.subr.mxu0 0.0
    %1867 = vmatpush1.msra.mxu0 0.0
    %1868 = vmatprep.subr.mxu0 0.0
    %1869 = vmatpush1.msra.mxu0 0.0
    %1870 = vmatprep.subr.mxu0 0.0
    %1871 = vmatpush1.msra.mxu0 0.0
    %1872 = vmatprep.subr.mxu0 0.0
    %1873 = vmatpush1.msra.mxu0 0.0
    %1874 = vmatprep.subr.mxu0 0.0
    %1875 = vmatpush1.msra.mxu0 0.0
    %1876 = vmatprep.subr.mxu0 0.0
    %1877 = vmatpush1.msra.mxu0 0.0
    %1878 = vmatprep.subr.mxu0 0.0
    %1879 = vmatpush1.msra.mxu0 0.0
    %1880 = vmatprep.subr.mxu0 0.0
    %1881 = vmatpush1.msra.mxu0 0.0
    %1882 = vmatprep.subr.mxu0 0.0
    %1883 = vmatpush1.msra.mxu0 0.0
    %1884 = vmatprep.subr.mxu0 0.0
    %1885 = vmatpush1.msra.mxu0 0.0
    %1886 = vmatprep.subr.mxu0 0.0
    %1887 = vmatpush1.msra.mxu0 0.0
    %1888 = vmatprep.subr.mxu0 0.0
    %1889 = vmatpush1.msra.mxu0 0.0
    %1890 = vmatprep.subr.mxu0 0.0
    %1891 = vmatpush1.msra.mxu0 0.0
    %1892 = vmatprep.subr.mxu0 0.0
    %1893 = vmatpush1.msra.mxu0 0.0
    %1894 = vmatprep.subr.mxu0 0.0
    %1895 = vmatpush1.msra.mxu0 0.0
    %1896 = vmatprep.subr.mxu0 0.0
    %1897 = vmatpush1.msra.mxu0 %v1861
    %1898 = vmatprep.subr.mxu0 0.0
    %1899 = vmatpush2.msra.mxu0 0.0
    %1900 = vmatprep.subr.mxu0 0.0
    %1901 = vmatpush2.msra.mxu0 0.0
    %1902 = vmatprep.subr.mxu0 0.0
    %1903 = vmatpush2.msra.mxu0 0.0
    %1904 = vmatprep.subr.mxu0 0.0
    %1905 = vmatpush2.msra.mxu0 0.0
    %1906 = vmatprep.subr.mxu0 0.0
    %1907 = vmatpush2.msra.mxu0 0.0
    %1908 = vmatprep.subr.mxu0 0.0
    %1909 = vmatpush2.msra.mxu0 0.0
    %1910 = vmatprep.subr.mxu0 0.0
    %1911 = vmatpush2.msra.mxu0 0.0
    %1912 = vmatprep.subr.mxu0 0.0
    %1913 = vmatpush2.msra.mxu0 0.0
    %1914 = vmatprep.subr.mxu0 0.0
    %1915 = vmatpush2.msra.mxu0 0.0
    %1916 = vmatprep.subr.mxu0 0.0
    %1917 = vmatpush2.msra.mxu0 0.0
    %1918 = vmatprep.subr.mxu0 0.0
    %1919 = vmatpush2.msra.mxu0 0.0
    %1920 = vmatprep.subr.mxu0 0.0
    %1921 = vmatpush2.msra.mxu0 0.0
    %1922 = vmatprep.subr.mxu0 0.0
    %1923 = vmatpush2.msra.mxu0 0.0
    %1924 = vmatprep.subr.mxu0 0.0
    %1925 = vmatpush2.msra.mxu0 0.0
    %1926 = vmatprep.subr.mxu0 0.0
    %1927 = vmatpush2.msra.mxu0 0.0
    %1928 = vmatprep.subr.mxu0 0.0
    %1929 = vmatpush2.msra.mxu0 0.0
    %1930 = vmatprep.mubr.f32.mxu0 0.0
    %1931 = vmatmul.mubr.f32.gmra.mxu0 %v1864
    %v1932 = vpop.f32.mrf.mxu0
    %v1933 = vadd.f32 0.0, %v1932
    %v1934 = vpop.f32.mrf.mxu0
    %1935 = vdwg.mxu0
    %v1936 = vpack.c.bf16 %v1933, %v1857
    %s1937 = scalar_lea.vmem [#allocation4], 48
    %v1938 = vld [vmem:[%s1937] sm:$0xf]
    %v1939 = vld [vmem:[%s1937 + $0x4] sm:$0xf]
    %v1940 = vld [vmem:[%s1937 + $0x8] sm:$0xf]
    %v1941 = vld [vmem:[%s1937 + $0xc] sm:$0xf]
    %v1946 = vunpack.c.l.b16 %v1938
    %v1947 = vunpack.c.l.b16 %v1939
    %v1948 = vunpack.c.l.b16 %v1940
    %v1949 = vunpack.c.l.b16 %v1941
    %v1950 = vpack.c.b16 %v1947, %v1946
    %v1951 = vpack.c.b16 %v1949, %v1948
    %v1955 = vsel %vm427, %v1936, 0
    %1957 = vmatprep.subr.bf16.mxu0 0
    %1958 = vmatpush1.bf16.msra.mxu0 0
    %1959 = vmatprep.subr.bf16.mxu0 0
    %1960 = vmatpush1.bf16.msra.mxu0 0
    %1961 = vmatprep.subr.bf16.mxu0 0
    %1962 = vmatpush1.bf16.msra.mxu0 0
    %1963 = vmatprep.subr.bf16.mxu0 0
    %1964 = vmatpush1.bf16.msra.mxu0 0
    %1965 = vmatprep.subr.bf16.mxu0 0
    %1966 = vmatpush1.bf16.msra.mxu0 0
    %1967 = vmatprep.subr.bf16.mxu0 0
    %1968 = vmatpush1.bf16.msra.mxu0 0
    %1969 = vmatprep.subr.bf16.mxu0 0
    %1970 = vmatpush1.bf16.msra.mxu0 %v1951
    %1971 = vmatprep.subr.bf16.mxu0 0
    %1972 = vmatpush1.bf16.msra.mxu0 %v1950
    %1973 = vmatprep.subr.bf16.mxu0 0
    %1974 = vmatpush2.bf16.msra.mxu0 0
    %1975 = vmatprep.subr.bf16.mxu0 0
    %1976 = vmatpush2.bf16.msra.mxu0 0
    %1977 = vmatprep.subr.bf16.mxu0 0
    %1978 = vmatpush2.bf16.msra.mxu0 0
    %1979 = vmatprep.subr.bf16.mxu0 0
    %1980 = vmatpush2.bf16.msra.mxu0 0
    %1981 = vmatprep.subr.bf16.mxu0 0
    %1982 = vmatpush2.bf16.msra.mxu0 0
    %1983 = vmatprep.subr.bf16.mxu0 0
    %1984 = vmatpush2.bf16.msra.mxu0 0
    %1985 = vmatprep.subr.bf16.mxu0 0
    %1986 = vmatpush2.bf16.msra.mxu0 0
    %1987 = vmatprep.subr.bf16.mxu0 0
    %1988 = vmatpush2.bf16.msra.mxu0 0
    %1989 = vmatprep.mubr.bf16.mxu0 0
    %1990 = vmatmul.mubr.bf16.gmra.mxu0 %v1955
    %v1991 = vpop.f32.mrf.mxu0
    %v1992 = vadd.f32 0.0, %v1991
    %v1993 = vpop.f32.mrf.mxu0
    %v1994 = vpop.f32.mrf.mxu0
    %v1995 = vadd.f32 0.0, %v1994
    %v1996 = vpop.f32.mrf.mxu0
    %1997 = vdwg.mxu0
    %v1998 = vadd.f32 %v1782, %v1992
    %v1999 = vadd.f32 %v1783, %v1995
    %v2000 = vlaneseq
    %v2001 = vshrl.u32 %v2000, 7
    %v2002 = vsub.s32 3, %v2001
    %v2003 = vrot.slane %v162, %v2002
    %v2004 = vadd.f32 %v1998, %v2003
    %v2005 = vadd.f32 %v1999, %v2003
    %v2006 = vadd.f32 %v156, %v2004
    %v2007 = vadd.f32 %v159, %v2005
    %2008 = vadd.xlane.f32.xlu0 %v2006
    %v2009 = vpop.xlane.xlu0 %2008
    %2010 = vadd.xlane.f32.xlu0 %v2007
    %v2011 = vpop.xlane.xlu0 %2010
    %v2012 = vmul.f32 %v2009, 0.0078125
    %v2013 = vmul.f32 %v2011, 0.0078125
    %v2014 = vmul.f32 %v2006, %v2006
    %v2015 = vmul.f32 %v2007, %v2007
    %2016 = vadd.xlane.f32.xlu0 %v2014
    %v2017 = vpop.xlane.xlu0 %2016
    %2018 = vadd.xlane.f32.xlu0 %v2015
    %v2019 = vpop.xlane.xlu0 %2018
    %v2020 = vmul.f32 %v2017, 0.0078125
    %v2021 = vmul.f32 %v2019, 0.0078125
    %v2022 = vmul.f32 %v2012, %v2012
    %v2023 = vmul.f32 %v2013, %v2013
    %v2024 = vsub.f32 %v2020, %v2022
    %v2025 = vsub.f32 %v2021, %v2023
    %v2026 = vsub.f32 %v2006, %v2012
    %v2027 = vsub.f32 %v2007, %v2013
    %v2028 = vadd.f32 %v2024, 1e-05
    %v2029 = vadd.f32 %v2025, 1e-05
    %v2030 = vrsqrt.pop %v2028
    %v2031 = vrsqrt.pop %v2029
    %v2032 = vmul.f32 %v2026, %v2030
    %v2033 = vmul.f32 %v2027, %v2031
    %v2034 = vlaneseq
    %v2035 = vshrl.u32 %v2034, 7
    %v2036 = vsub.s32 4, %v2035
    %v2037 = vrot.slane %v162, %v2036
    %v2038 = vmul.f32 %v2032, %v2037
    %v2039 = vmul.f32 %v2033, %v2037
    %v2040 = vlaneseq
    %v2041 = vshrl.u32 %v2040, 7
    %v2042 = vsub.s32 5, %v2041
    %v2043 = vrot.slane %v162, %v2042
    %v2044 = vadd.f32 %v2038, %v2043
    %v2045 = vadd.f32 %v2039, %v2043
    %v2046 = vpack.c.bf16 %v2045, %v2044
    %v2047 = vld [vmem:[#allocation6] sm:$0xf]
    %v2048 = vld [vmem:[#allocation6 + $0x4] sm:$0xf]
    %v2049 = vld [vmem:[#allocation6 + $0x8] sm:$0xf]
    %v2050 = vld [vmem:[#allocation6 + $0xc] sm:$0xf]
    %v2051 = vld [vmem:[#allocation6 + $0x10] sm:$0xf]
    %v2052 = vld [vmem:[#allocation6 + $0x14] sm:$0xf]
    %v2053 = vld [vmem:[#allocation6 + $0x18] sm:$0xf]
    %v2054 = vld [vmem:[#allocation6 + $0x1c] sm:$0xf]
    %v2055 = vld [vmem:[#allocation6 + $0x20] sm:$0xf]
    %v2056 = vld [vmem:[#allocation6 + $0x24] sm:$0xf]
    %v2057 = vld [vmem:[#allocation6 + $0x28] sm:$0xf]
    %v2058 = vld [vmem:[#allocation6 + $0x2c] sm:$0xf]
    %v2059 = vld [vmem:[#allocation6 + $0x30] sm:$0xf]
    %v2060 = vld [vmem:[#allocation6 + $0x34] sm:$0xf]
    %v2061 = vld [vmem:[#allocation6 + $0x38] sm:$0xf]
    %v2062 = vld [vmem:[#allocation6 + $0x3c] sm:$0xf]
    %v2063 = vlaneseq
    %v2064 = vshrl.u32 %v2063, 7
    %v2065 = vsub.s32 6, %v2064
    %v2066 = vrot.slane %v162, %v2065
    %v2083 = vunpack.c.l.b16 %v2047
    %v2084 = vunpack.c.l.b16 %v2048
    %v2085 = vunpack.c.l.b16 %v2049
    %v2086 = vunpack.c.l.b16 %v2050
    %v2087 = vunpack.c.l.b16 %v2051
    %v2088 = vunpack.c.l.b16 %v2052
    %v2089 = vunpack.c.l.b16 %v2053
    %v2090 = vunpack.c.l.b16 %v2054
    %v2091 = vunpack.c.l.b16 %v2055
    %v2092 = vunpack.c.l.b16 %v2056
    %v2093 = vunpack.c.l.b16 %v2057
    %v2094 = vunpack.c.l.b16 %v2058
    %v2095 = vunpack.c.l.b16 %v2059
    %v2096 = vunpack.c.l.b16 %v2060
    %v2097 = vunpack.c.l.b16 %v2061
    %v2098 = vunpack.c.l.b16 %v2062
    %v2099 = vpack.c.b16 %v2084, %v2083
    %v2100 = vpack.c.b16 %v2086, %v2085
    %v2101 = vpack.c.b16 %v2088, %v2087
    %v2102 = vpack.c.b16 %v2090, %v2089
    %v2103 = vpack.c.b16 %v2092, %v2091
    %v2104 = vpack.c.b16 %v2094, %v2093
    %v2105 = vpack.c.b16 %v2096, %v2095
    %v2106 = vpack.c.b16 %v2098, %v2097
    %2115 = vmatprep.subr.bf16.mxu0 0
    %2116 = vmatpush1.bf16.msra.mxu0 %v2106
    %2117 = vmatprep.subr.bf16.mxu0 0
    %2118 = vmatpush1.bf16.msra.mxu0 %v2105
    %2119 = vmatprep.subr.bf16.mxu0 0
    %2120 = vmatpush1.bf16.msra.mxu0 %v2104
    %2121 = vmatprep.subr.bf16.mxu0 0
    %2122 = vmatpush1.bf16.msra.mxu0 %v2103
    %2123 = vmatprep.subr.bf16.mxu0 0
    %2124 = vmatpush1.bf16.msra.mxu0 %v2102
    %2125 = vmatprep.subr.bf16.mxu0 0
    %2126 = vmatpush1.bf16.msra.mxu0 %v2101
    %2127 = vmatprep.subr.bf16.mxu0 0
    %2128 = vmatpush1.bf16.msra.mxu0 %v2100
    %2129 = vmatprep.subr.bf16.mxu0 0
    %2130 = vmatpush1.bf16.msra.mxu0 %v2099
    %2131 = vmatprep.subr.bf16.mxu0 0
    %2132 = vmatpush2.bf16.msra.mxu0 0
    %2133 = vmatprep.subr.bf16.mxu0 0
    %2134 = vmatpush2.bf16.msra.mxu0 0
    %2135 = vmatprep.subr.bf16.mxu0 0
    %2136 = vmatpush2.bf16.msra.mxu0 0
    %2137 = vmatprep.subr.bf16.mxu0 0
    %2138 = vmatpush2.bf16.msra.mxu0 0
    %2139 = vmatprep.subr.bf16.mxu0 0
    %2140 = vmatpush2.bf16.msra.mxu0 0
    %2141 = vmatprep.subr.bf16.mxu0 0
    %2142 = vmatpush2.bf16.msra.mxu0 0
    %2143 = vmatprep.subr.bf16.mxu0 0
    %2144 = vmatpush2.bf16.msra.mxu0 0
    %2145 = vmatprep.subr.bf16.mxu0 0
    %2146 = vmatpush2.bf16.msra.mxu0 0
    %2147 = vmatprep.mubr.bf16.mxu0 0
    %2148 = vmatmul.mubr.bf16.gmra.mxu0 %v2046
    %v2149 = vpop.f32.mrf.mxu0
    %v2150 = vadd.f32 %v2066, %v2149
    %v2151 = vpop.f32.mrf.mxu0
    %v2152 = vpop.f32.mrf.mxu0
    %v2153 = vadd.f32 %v2066, %v2152
    %v2154 = vpop.f32.mrf.mxu0
    %2155 = vdwg.mxu0
    %v2156 = vmax.f32 %v2150, 0.0
    %v2157 = vmax.f32 %v2153, 0.0
    %v2158 = vpack.c.bf16 %v2157, %v2156
    %v2159 = vld [vmem:[#allocation7] sm:$0xf]
    %v2160 = vld [vmem:[#allocation7 + $0x4] sm:$0xf]
    %v2161 = vld [vmem:[#allocation7 + $0x8] sm:$0xf]
    %v2162 = vld [vmem:[#allocation7 + $0xc] sm:$0xf]
    %v2163 = vld [vmem:[#allocation7 + $0x10] sm:$0xf]
    %v2164 = vld [vmem:[#allocation7 + $0x14] sm:$0xf]
    %v2165 = vld [vmem:[#allocation7 + $0x18] sm:$0xf]
    %v2166 = vld [vmem:[#allocation7 + $0x1c] sm:$0xf]
    %v2167 = vld [vmem:[#allocation7 + $0x20] sm:$0xf]
    %v2168 = vld [vmem:[#allocation7 + $0x24] sm:$0xf]
    %v2169 = vld [vmem:[#allocation7 + $0x28] sm:$0xf]
    %v2170 = vld [vmem:[#allocation7 + $0x2c] sm:$0xf]
    %v2171 = vld [vmem:[#allocation7 + $0x30] sm:$0xf]
    %v2172 = vld [vmem:[#allocation7 + $0x34] sm:$0xf]
    %v2173 = vld [vmem:[#allocation7 + $0x38] sm:$0xf]
    %v2174 = vld [vmem:[#allocation7 + $0x3c] sm:$0xf]
    %v2175 = vlaneseq
    %v2176 = vshrl.u32 %v2175, 7
    %v2177 = vsub.s32 7, %v2176
    %v2178 = vrot.slane %v162, %v2177
    %v2195 = vunpack.c.l.b16 %v2159
    %v2196 = vunpack.c.l.b16 %v2160
    %v2197 = vunpack.c.l.b16 %v2161
    %v2198 = vunpack.c.l.b16 %v2162
    %v2199 = vunpack.c.l.b16 %v2163
    %v2200 = vunpack.c.l.b16 %v2164
    %v2201 = vunpack.c.l.b16 %v2165
    %v2202 = vunpack.c.l.b16 %v2166
    %v2203 = vunpack.c.l.b16 %v2167
    %v2204 = vunpack.c.l.b16 %v2168
    %v2205 = vunpack.c.l.b16 %v2169
    %v2206 = vunpack.c.l.b16 %v2170
    %v2207 = vunpack.c.l.b16 %v2171
    %v2208 = vunpack.c.l.b16 %v2172
    %v2209 = vunpack.c.l.b16 %v2173
    %v2210 = vunpack.c.l.b16 %v2174
    %v2211 = vpack.c.b16 %v2196, %v2195
    %v2212 = vpack.c.b16 %v2198, %v2197
    %v2213 = vpack.c.b16 %v2200, %v2199
    %v2214 = vpack.c.b16 %v2202, %v2201
    %v2215 = vpack.c.b16 %v2204, %v2203
    %v2216 = vpack.c.b16 %v2206, %v2205
    %v2217 = vpack.c.b16 %v2208, %v2207
    %v2218 = vpack.c.b16 %v2210, %v2209
    %2227 = vmatprep.subr.bf16.mxu0 0
    %2228 = vmatpush1.bf16.msra.mxu0 %v2218
    %2229 = vmatprep.subr.bf16.mxu0 0
    %2230 = vmatpush1.bf16.msra.mxu0 %v2217
    %2231 = vmatprep.subr.bf16.mxu0 0
    %2232 = vmatpush1.bf16.msra.mxu0 %v2216
    %2233 = vmatprep.subr.bf16.mxu0 0
    %2234 = vmatpush1.bf16.msra.mxu0 %v2215
    %2235 = vmatprep.subr.bf16.mxu0 0
    %2236 = vmatpush1.bf16.msra.mxu0 %v2214
    %2237 = vmatprep.subr.bf16.mxu0 0
    %2238 = vmatpush1.bf16.msra.mxu0 %v2213
    %2239 = vmatprep.subr.bf16.mxu0 0
    %2240 = vmatpush1.bf16.msra.mxu0 %v2212
    %2241 = vmatprep.subr.bf16.mxu0 0
    %2242 = vmatpush1.bf16.msra.mxu0 %v2211
    %2243 = vmatprep.subr.bf16.mxu0 0
    %2244 = vmatpush2.bf16.msra.mxu0 0
    %2245 = vmatprep.subr.bf16.mxu0 0
    %2246 = vmatpush2.bf16.msra.mxu0 0
    %2247 = vmatprep.subr.bf16.mxu0 0
    %2248 = vmatpush2.bf16.msra.mxu0 0
    %2249 = vmatprep.subr.bf16.mxu0 0
    %2250 = vmatpush2.bf16.msra.mxu0 0
    %2251 = vmatprep.subr.bf16.mxu0 0
    %2252 = vmatpush2.bf16.msra.mxu0 0
    %2253 = vmatprep.subr.bf16.mxu0 0
    %2254 = vmatpush2.bf16.msra.mxu0 0
    %2255 = vmatprep.subr.bf16.mxu0 0
    %2256 = vmatpush2.bf16.msra.mxu0 0
    %2257 = vmatprep.subr.bf16.mxu0 0
    %2258 = vmatpush2.bf16.msra.mxu0 0
    %2259 = vmatprep.mubr.bf16.mxu0 0
    %2260 = vmatmul.mubr.bf16.gmra.mxu0 %v2158
    %v2261 = vpop.f32.mrf.mxu0
    %v2262 = vadd.f32 %v2178, %v2261
    %v2263 = vpop.f32.mrf.mxu0
    %v2264 = vpop.f32.mrf.mxu0
    %v2265 = vadd.f32 %v2178, %v2264
    %v2266 = vpop.f32.mrf.mxu0
    %2267 = vdwg.mxu0
    %v2268 = vadd.f32 %v2044, %v2262
    %v2269 = vadd.f32 %v2045, %v2265
    %2270 = vadd.xlane.f32.xlu0 %v2268
    %v2271 = vpop.xlane.xlu0 %2270
    %2272 = vadd.xlane.f32.xlu0 %v2269
    %v2273 = vpop.xlane.xlu0 %2272
    %v2274 = vmul.f32 %v2271, 0.0078125
    %v2275 = vmul.f32 %v2273, 0.0078125
    %v2276 = vmul.f32 %v2268, %v2268
    %v2277 = vmul.f32 %v2269, %v2269
    %2278 = vadd.xlane.f32.xlu0 %v2276
    %v2279 = vpop.xlane.xlu0 %2278
    %2280 = vadd.xlane.f32.xlu0 %v2277
    %v2281 = vpop.xlane.xlu0 %2280
    %v2282 = vmul.f32 %v2279, 0.0078125
    %v2283 = vmul.f32 %v2281, 0.0078125
    %v2284 = vmul.f32 %v2274, %v2274
    %v2285 = vmul.f32 %v2275, %v2275
    %v2286 = vsub.f32 %v2282, %v2284
    %v2287 = vsub.f32 %v2283, %v2285
    %v2288 = vsub.f32 %v2268, %v2274
    %v2289 = vsub.f32 %v2269, %v2275
    %v2290 = vadd.f32 %v2286, 1e-05
    %v2291 = vadd.f32 %v2287, 1e-05
    %v2292 = vrsqrt.pop %v2290
    %v2293 = vrsqrt.pop %v2291
    %v2294 = vmul.f32 %v2288, %v2292
    %v2295 = vmul.f32 %v2289, %v2293
    %v2296 = vlaneseq
    %v2297 = vshrl.u32 %v2296, 7
    %v2298 = vsub.s32 0, %v2297
    %v2299 = vrot.slane %v163, %v2298
    %v2300 = vmul.f32 %v2294, %v2299
    %v2301 = vmul.f32 %v2295, %v2299
    %v2302 = vlaneseq
    %v2303 = vshrl.u32 %v2302, 7
    %v2304 = vsub.s32 1, %v2303
    %v2305 = vrot.slane %v163, %v2304
    %v2306 = vadd.f32 %v2300, %v2305
    %v2307 = vadd.f32 %v2301, %v2305
    %s2308 = scalar_lea.vmem %s7, 16
    %v2309 = vld [vmem:[%s2308] sm:$0xff]
    %v2310 = vld [vmem:[%s2308 + $0x8] sm:$0x3]
    %v2311 = vpack.c.bf16 %v2307, %v2306
    %s2312 = scalar_lea.vmem [#allocation2], 192
    %v2313 = vld [vmem:[%s2312] sm:$0xff]
    %v2314 = vld [vmem:[%s2312 + $0x8] sm:$0xf]
    %v2315 = vld [vmem:[%s2312 + $0xc] sm:$0xff]
    %v2316 = vld [vmem:[%s2312 + $0x14] sm:$0xf]
    %v2317 = vld [vmem:[%s2312 + $0x18] sm:$0xff]
    %v2318 = vld [vmem:[%s2312 + $0x20] sm:$0xf]
    %v2319 = vld [vmem:[%s2312 + $0x24] sm:$0xff]
    %v2320 = vld [vmem:[%s2312 + $0x2c] sm:$0xf]
    %v2321 = vld [vmem:[%s2312 + $0x30] sm:$0xff]
    %v2322 = vld [vmem:[%s2312 + $0x38] sm:$0xf]
    %v2323 = vld [vmem:[%s2312 + $0x3c] sm:$0xff]
    %v2324 = vld [vmem:[%s2312 + $0x44] sm:$0xf]
    %v2325 = vld [vmem:[%s2312 + $0x48] sm:$0xff]
    %v2326 = vld [vmem:[%s2312 + $0x50] sm:$0xf]
    %v2327 = vld [vmem:[%s2312 + $0x54] sm:$0xff]
    %v2328 = vld [vmem:[%s2312 + $0x5c] sm:$0xf]
    %v2329 = vld [vmem:[%s2312 + $0x60] sm:$0xff]
    %v2330 = vld [vmem:[%s2312 + $0x68] sm:$0xf]
    %v2331 = vld [vmem:[%s2312 + $0x6c] sm:$0xff]
    %v2332 = vld [vmem:[%s2312 + $0x74] sm:$0xf]
    %v2333 = vld [vmem:[%s2312 + $0x78] sm:$0xff]
    %v2334 = vld [vmem:[%s2312 + $0x80] sm:$0xf]
    %v2335 = vld [vmem:[%s2312 + $0x84] sm:$0xff]
    %v2336 = vld [vmem:[%s2312 + $0x8c] sm:$0xf]
    %v2337 = vld [vmem:[%s2312 + $0x90] sm:$0xff]
    %v2338 = vld [vmem:[%s2312 + $0x98] sm:$0xf]
    %v2339 = vld [vmem:[%s2312 + $0x9c] sm:$0xff]
    %v2340 = vld [vmem:[%s2312 + $0xa4] sm:$0xf]
    %v2341 = vld [vmem:[%s2312 + $0xa8] sm:$0xff]
    %v2342 = vld [vmem:[%s2312 + $0xb0] sm:$0xf]
    %v2343 = vld [vmem:[%s2312 + $0xb4] sm:$0xff]
    %v2344 = vld [vmem:[%s2312 + $0xbc] sm:$0xf]
    %v2377 = vunpack.c.l.b16 %v2313
    %v2378 = vunpack.c.h.b16 %v2313
    %v2379 = vunpack.c.l.b16 %v2314
    %v2380 = vunpack.c.l.b16 %v2315
    %v2381 = vunpack.c.h.b16 %v2315
    %v2382 = vunpack.c.l.b16 %v2316
    %v2383 = vunpack.c.l.b16 %v2317
    %v2384 = vunpack.c.h.b16 %v2317
    %v2385 = vunpack.c.l.b16 %v2318
    %v2386 = vunpack.c.l.b16 %v2319
    %v2387 = vunpack.c.h.b16 %v2319
    %v2388 = vunpack.c.l.b16 %v2320
    %v2389 = vunpack.c.l.b16 %v2321
    %v2390 = vunpack.c.h.b16 %v2321
    %v2391 = vunpack.c.l.b16 %v2322
    %v2392 = vunpack.c.l.b16 %v2323
    %v2393 = vunpack.c.h.b16 %v2323
    %v2394 = vunpack.c.l.b16 %v2324
    %v2395 = vunpack.c.l.b16 %v2325
    %v2396 = vunpack.c.h.b16 %v2325
    %v2397 = vunpack.c.l.b16 %v2326
    %v2398 = vunpack.c.l.b16 %v2327
    %v2399 = vunpack.c.h.b16 %v2327
    %v2400 = vunpack.c.l.b16 %v2328
    %v2401 = vunpack.c.l.b16 %v2329
    %v2402 = vunpack.c.h.b16 %v2329
    %v2403 = vunpack.c.l.b16 %v2330
    %v2404 = vunpack.c.l.b16 %v2331
    %v2405 = vunpack.c.h.b16 %v2331
    %v2406 = vunpack.c.l.b16 %v2332
    %v2407 = vunpack.c.l.b16 %v2333
    %v2408 = vunpack.c.h.b16 %v2333
    %v2409 = vunpack.c.l.b16 %v2334
    %v2410 = vunpack.c.l.b16 %v2335
    %v2411 = vunpack.c.h.b16 %v2335
    %v2412 = vunpack.c.l.b16 %v2336
    %v2413 = vunpack.c.l.b16 %v2337
    %v2414 = vunpack.c.h.b16 %v2337
    %v2415 = vunpack.c.l.b16 %v2338
    %v2416 = vunpack.c.l.b16 %v2339
    %v2417 = vunpack.c.h.b16 %v2339
    %v2418 = vunpack.c.l.b16 %v2340
    %v2419 = vunpack.c.l.b16 %v2341
    %v2420 = vunpack.c.h.b16 %v2341
    %v2421 = vunpack.c.l.b16 %v2342
    %v2422 = vunpack.c.l.b16 %v2343
    %v2423 = vunpack.c.h.b16 %v2343
    %v2424 = vunpack.c.l.b16 %v2344
    %v2425 = vpack.c.b16 %v2380, %v2377
    %v2426 = vpack.c.b16 %v2381, %v2378
    %v2427 = vpack.c.b16 %v2382, %v2379
    %v2428 = vpack.c.b16 %v2386, %v2383
    %v2429 = vpack.c.b16 %v2387, %v2384
    %v2430 = vpack.c.b16 %v2388, %v2385
    %v2431 = vpack.c.b16 %v2392, %v2389
    %v2432 = vpack.c.b16 %v2393, %v2390
    %v2433 = vpack.c.b16 %v2394, %v2391
    %v2434 = vpack.c.b16 %v2398, %v2395
    %v2435 = vpack.c.b16 %v2399, %v2396
    %v2436 = vpack.c.b16 %v2400, %v2397
    %v2437 = vpack.c.b16 %v2404, %v2401
    %v2438 = vpack.c.b16 %v2405, %v2402
    %v2439 = vpack.c.b16 %v2406, %v2403
    %v2440 = vpack.c.b16 %v2410, %v2407
    %v2441 = vpack.c.b16 %v2411, %v2408
    %v2442 = vpack.c.b16 %v2412, %v2409
    %v2443 = vpack.c.b16 %v2416, %v2413
    %v2444 = vpack.c.b16 %v2417, %v2414
    %v2445 = vpack.c.b16 %v2418, %v2415
    %v2446 = vpack.c.b16 %v2422, %v2419
    %v2447 = vpack.c.b16 %v2423, %v2420
    %v2448 = vpack.c.b16 %v2424, %v2421
    %2473 = vmatprep.subr.bf16.mxu0 %v2447
    %2474 = vmatpush1.bf16.msra.mxu0 %v2446
    %2475 = vmatprep.subr.bf16.mxu0 %v2444
    %2476 = vmatpush1.bf16.msra.mxu0 %v2443
    %2477 = vmatprep.subr.bf16.mxu0 %v2441
    %2478 = vmatpush1.bf16.msra.mxu0 %v2440
    %2479 = vmatprep.subr.bf16.mxu0 %v2438
    %2480 = vmatpush1.bf16.msra.mxu0 %v2437
    %2481 = vmatprep.subr.bf16.mxu0 %v2435
    %2482 = vmatpush1.bf16.msra.mxu0 %v2434
    %2483 = vmatprep.subr.bf16.mxu0 %v2432
    %2484 = vmatpush1.bf16.msra.mxu0 %v2431
    %2485 = vmatprep.subr.bf16.mxu0 %v2429
    %2486 = vmatpush1.bf16.msra.mxu0 %v2428
    %2487 = vmatprep.subr.bf16.mxu0 %v2426
    %2488 = vmatpush1.bf16.msra.mxu0 %v2425
    %2489 = vmatprep.subr.bf16.mxu0 0
    %2490 = vmatpush2.bf16.msra.mxu0 0
    %2491 = vmatprep.subr.bf16.mxu0 0
    %2492 = vmatpush2.bf16.msra.mxu0 0
    %2493 = vmatprep.subr.bf16.mxu0 0
    %2494 = vmatpush2.bf16.msra.mxu0 0
    %2495 = vmatprep.subr.bf16.mxu0 0
    %2496 = vmatpush2.bf16.msra.mxu0 0
    %2497 = vmatprep.subr.bf16.mxu0 0
    %2498 = vmatpush2.bf16.msra.mxu0 0
    %2499 = vmatprep.subr.bf16.mxu0 0
    %2500 = vmatpush2.bf16.msra.mxu0 0
    %2501 = vmatprep.subr.bf16.mxu0 0
    %2502 = vmatpush2.bf16.msra.mxu0 0
    %2503 = vmatprep.subr.bf16.mxu0 0
    %2504 = vmatpush2.bf16.msra.mxu0 0
    %2505 = vmatprep.mubr.bf16.mxu0 0
    %2506 = vmatmul.mubr.bf16.gmra.mxu0 %v2311
    %v2507 = vpop.f32.mrf.mxu0
    %v2508 = vadd.f32 0.0, %v2507
    %v2509 = vpop.f32.mrf.mxu0
    %v2510 = vadd.f32 0.0, %v2509
    %v2511 = vpop.f32.mrf.mxu0
    %v2512 = vadd.f32 0.0, %v2511
    %v2513 = vpop.f32.mrf.mxu0
    %v2514 = vadd.f32 0.0, %v2513
    %2515 = vdwg.mxu0
    %2516 = vmatprep.subr.bf16.mxu0 0
    %2517 = vmatpush1.bf16.msra.mxu0 %v2448
    %2518 = vmatprep.subr.bf16.mxu0 0
    %2519 = vmatpush1.bf16.msra.mxu0 %v2445
    %2520 = vmatprep.subr.bf16.mxu0 0
    %2521 = vmatpush1.bf16.msra.mxu0 %v2442
    %2522 = vmatprep.subr.bf16.mxu0 0
    %2523 = vmatpush1.bf16.msra.mxu0 %v2439
    %2524 = vmatprep.subr.bf16.mxu0 0
    %2525 = vmatpush1.bf16.msra.mxu0 %v2436
    %2526 = vmatprep.subr.bf16.mxu0 0
    %2527 = vmatpush1.bf16.msra.mxu0 %v2433
    %2528 = vmatprep.subr.bf16.mxu0 0
    %2529 = vmatpush1.bf16.msra.mxu0 %v2430
    %2530 = vmatprep.subr.bf16.mxu0 0
    %2531 = vmatpush1.bf16.msra.mxu0 %v2427
    %2532 = vmatprep.subr.bf16.mxu0 0
    %2533 = vmatpush2.bf16.msra.mxu0 0
    %2534 = vmatprep.subr.bf16.mxu0 0
    %2535 = vmatpush2.bf16.msra.mxu0 0
    %2536 = vmatprep.subr.bf16.mxu0 0
    %2537 = vmatpush2.bf16.msra.mxu0 0
    %2538 = vmatprep.subr.bf16.mxu0 0
    %2539 = vmatpush2.bf16.msra.mxu0 0
    %2540 = vmatprep.subr.bf16.mxu0 0
    %2541 = vmatpush2.bf16.msra.mxu0 0
    %2542 = vmatprep.subr.bf16.mxu0 0
    %2543 = vmatpush2.bf16.msra.mxu0 0
    %2544 = vmatprep.subr.bf16.mxu0 0
    %2545 = vmatpush2.bf16.msra.mxu0 0
    %2546 = vmatprep.subr.bf16.mxu0 0
    %2547 = vmatpush2.bf16.msra.mxu0 0
    %2548 = vmatprep.mubr.bf16.mxu0 0
    %2549 = vmatmul.mubr.bf16.gmra.mxu0 %v2311
    %v2550 = vpop.f32.mrf.mxu0
    %v2551 = vadd.f32 0.0, %v2550
    %v2552 = vpop.f32.mrf.mxu0
    %v2553 = vpop.f32.mrf.mxu0
    %v2554 = vadd.f32 0.0, %v2553
    %v2555 = vpop.f32.mrf.mxu0
    %2556 = vdwg.mxu0
    %v2557 = vlaneseq
    %v2558 = vshrl.u32 %v2557, 7
    %v2559 = vsub.s32 0, %v2558
    %v2560 = vrot.slane %v2309, %v2559
    %v2561 = vadd.f32 %v2508, %v2560
    %v2562 = vadd.f32 %v2512, %v2560
    %v2563 = vlaneseq
    %v2564 = vshrl.u32 %v2563, 7
    %v2565 = vsub.s32 1, %v2564
    %v2566 = vrot.slane %v2309, %v2565
    %v2567 = vadd.f32 %v2510, %v2566
    %v2568 = vadd.f32 %v2514, %v2566
    %v2569 = vlaneseq
    %v2570 = vshrl.u32 %v2569, 7
    %v2571 = vsub.s32 2, %v2570
    %v2572 = vrot.slane %v2309, %v2571
    %v2573 = vadd.f32 %v2551, %v2572
    %v2574 = vadd.f32 %v2554, %v2572
    %v2576 = vsel %vm427, %v2561, 0
    %v2579 = vsel %vm427, %v2567, 0
    %2581 = vmatprep.subr.mxu0 0.0
    %2582 = vmatpush1.xpose.msra.mxu0 0.0
    %2583 = vmatprep.subr.mxu0 0.0
    %2584 = vmatpush1.xpose.msra.mxu0 0.0
    %2585 = vmatprep.subr.mxu0 0.0
    %2586 = vmatpush1.xpose.msra.mxu0 0.0
    %2587 = vmatprep.subr.mxu0 0.0
    %2588 = vmatpush1.xpose.msra.mxu0 0.0
    %2589 = vmatprep.subr.mxu0 0.0
    %2590 = vmatpush1.xpose.msra.mxu0 0.0
    %2591 = vmatprep.subr.mxu0 0.0
    %2592 = vmatpush1.xpose.msra.mxu0 0.0
    %2593 = vmatprep.subr.mxu0 0.0
    %2594 = vmatpush1.xpose.msra.mxu0 0.0
    %2595 = vmatprep.subr.mxu0 0.0
    %2596 = vmatpush1.xpose.msra.mxu0 0.0
    %2597 = vmatprep.subr.mxu0 0.0
    %2598 = vmatpush1.xpose.msra.mxu0 0.0
    %2599 = vmatprep.subr.mxu0 0.0
    %2600 = vmatpush1.xpose.msra.mxu0 0.0
    %2601 = vmatprep.subr.mxu0 0.0
    %2602 = vmatpush1.xpose.msra.mxu0 0.0
    %2603 = vmatprep.subr.mxu0 0.0
    %2604 = vmatpush1.xpose.msra.mxu0 0.0
    %2605 = vmatprep.subr.mxu0 0.0
    %2606 = vmatpush1.xpose.msra.mxu0 0.0
    %2607 = vmatprep.subr.mxu0 0.0
    %2608 = vmatpush1.xpose.msra.mxu0 0.0
    %2609 = vmatprep.subr.mxu0 0.0
    %2610 = vmatpush1.xpose.msra.mxu0 0.0
    %2611 = vmatprep.subr.mxu0 0.0
    %2612 = vmatpush1.xpose.msra.mxu0 %v2579
    %2613 = vmatprep.subr.mxu0 0.0
    %2614 = vmatpush2.xpose.msra.mxu0 0.0
    %2615 = vmatprep.subr.mxu0 0.0
    %2616 = vmatpush2.xpose.msra.mxu0 0.0
    %2617 = vmatprep.subr.mxu0 0.0
    %2618 = vmatpush2.xpose.msra.mxu0 0.0
    %2619 = vmatprep.subr.mxu0 0.0
    %2620 = vmatpush2.xpose.msra.mxu0 0.0
    %2621 = vmatprep.subr.mxu0 0.0
    %2622 = vmatpush2.xpose.msra.mxu0 0.0
    %2623 = vmatprep.subr.mxu0 0.0
    %2624 = vmatpush2.xpose.msra.mxu0 0.0
    %2625 = vmatprep.subr.mxu0 0.0
    %2626 = vmatpush2.xpose.msra.mxu0 0.0
    %2627 = vmatprep.subr.mxu0 0.0
    %2628 = vmatpush2.xpose.msra.mxu0 0.0
    %2629 = vmatprep.subr.mxu0 0.0
    %2630 = vmatpush2.xpose.msra.mxu0 0.0
    %2631 = vmatprep.subr.mxu0 0.0
    %2632 = vmatpush2.xpose.msra.mxu0 0.0
    %2633 = vmatprep.subr.mxu0 0.0
    %2634 = vmatpush2.xpose.msra.mxu0 0.0
    %2635 = vmatprep.subr.mxu0 0.0
    %2636 = vmatpush2.xpose.msra.mxu0 0.0
    %2637 = vmatprep.subr.mxu0 0.0
    %2638 = vmatpush2.xpose.msra.mxu0 0.0
    %2639 = vmatprep.subr.mxu0 0.0
    %2640 = vmatpush2.xpose.msra.mxu0 0.0
    %2641 = vmatprep.subr.mxu0 0.0
    %2642 = vmatpush2.xpose.msra.mxu0 0.0
    %2643 = vmatprep.subr.mxu0 0.0
    %2644 = vmatpush2.xpose.msra.mxu0 0.0
    %2645 = vmatprep.mubr.f32.mxu0 0.0
    %2646 = vmatmul.mubr.f32.gmra.mxu0 %v2576
    %v2647 = vpop.f32.mrf.mxu0
    %v2648 = vadd.f32 0.0, %v2647
    %v2649 = vpop.f32.mrf.mxu0
    %2650 = vdwg.mxu0
    %v2652 = vsel %vm427, %v2562, 0
    %v2655 = vsel %vm427, %v2568, 0
    %2657 = vmatprep.subr.mxu0 0.0
    %2658 = vmatpush1.xpose.msra.mxu0 0.0
    %2659 = vmatprep.subr.mxu0 0.0
    %2660 = vmatpush1.xpose.msra.mxu0 0.0
    %2661 = vmatprep.subr.mxu0 0.0
    %2662 = vmatpush1.xpose.msra.mxu0 0.0
    %2663 = vmatprep.subr.mxu0 0.0
    %2664 = vmatpush1.xpose.msra.mxu0 0.0
    %2665 = vmatprep.subr.mxu0 0.0
    %2666 = vmatpush1.xpose.msra.mxu0 0.0
    %2667 = vmatprep.subr.mxu0 0.0
    %2668 = vmatpush1.xpose.msra.mxu0 0.0
    %2669 = vmatprep.subr.mxu0 0.0
    %2670 = vmatpush1.xpose.msra.mxu0 0.0
    %2671 = vmatprep.subr.mxu0 0.0
    %2672 = vmatpush1.xpose.msra.mxu0 0.0
    %2673 = vmatprep.subr.mxu0 0.0
    %2674 = vmatpush1.xpose.msra.mxu0 0.0
    %2675 = vmatprep.subr.mxu0 0.0
    %2676 = vmatpush1.xpose.msra.mxu0 0.0
    %2677 = vmatprep.subr.mxu0 0.0
    %2678 = vmatpush1.xpose.msra.mxu0 0.0
    %2679 = vmatprep.subr.mxu0 0.0
    %2680 = vmatpush1.xpose.msra.mxu0 0.0
    %2681 = vmatprep.subr.mxu0 0.0
    %2682 = vmatpush1.xpose.msra.mxu0 0.0
    %2683 = vmatprep.subr.mxu0 0.0
    %2684 = vmatpush1.xpose.msra.mxu0 0.0
    %2685 = vmatprep.subr.mxu0 0.0
    %2686 = vmatpush1.xpose.msra.mxu0 0.0
    %2687 = vmatprep.subr.mxu0 0.0
    %2688 = vmatpush1.xpose.msra.mxu0 %v2655
    %2689 = vmatprep.subr.mxu0 0.0
    %2690 = vmatpush2.xpose.msra.mxu0 0.0
    %2691 = vmatprep.subr.mxu0 0.0
    %2692 = vmatpush2.xpose.msra.mxu0 0.0
    %2693 = vmatprep.subr.mxu0 0.0
    %2694 = vmatpush2.xpose.msra.mxu0 0.0
    %2695 = vmatprep.subr.mxu0 0.0
    %2696 = vmatpush2.xpose.msra.mxu0 0.0
    %2697 = vmatprep.subr.mxu0 0.0
    %2698 = vmatpush2.xpose.msra.mxu0 0.0
    %2699 = vmatprep.subr.mxu0 0.0
    %2700 = vmatpush2.xpose.msra.mxu0 0.0
    %2701 = vmatprep.subr.mxu0 0.0
    %2702 = vmatpush2.xpose.msra.mxu0 0.0
    %2703 = vmatprep.subr.mxu0 0.0
    %2704 = vmatpush2.xpose.msra.mxu0 0.0
    %2705 = vmatprep.subr.mxu0 0.0
    %2706 = vmatpush2.xpose.msra.mxu0 0.0
    %2707 = vmatprep.subr.mxu0 0.0
    %2708 = vmatpush2.xpose.msra.mxu0 0.0
    %2709 = vmatprep.subr.mxu0 0.0
    %2710 = vmatpush2.xpose.msra.mxu0 0.0
    %2711 = vmatprep.subr.mxu0 0.0
    %2712 = vmatpush2.xpose.msra.mxu0 0.0
    %2713 = vmatprep.subr.mxu0 0.0
    %2714 = vmatpush2.xpose.msra.mxu0 0.0
    %2715 = vmatprep.subr.mxu0 0.0
    %2716 = vmatpush2.xpose.msra.mxu0 0.0
    %2717 = vmatprep.subr.mxu0 0.0
    %2718 = vmatpush2.xpose.msra.mxu0 0.0
    %2719 = vmatprep.subr.mxu0 0.0
    %2720 = vmatpush2.xpose.msra.mxu0 0.0
    %2721 = vmatprep.mubr.f32.mxu0 0.0
    %2722 = vmatmul.mubr.f32.gmra.mxu0 %v2652
    %v2723 = vpop.f32.mrf.mxu0
    %v2724 = vadd.f32 0.0, %v2723
    %v2725 = vpop.f32.mrf.mxu0
    %2726 = vdwg.mxu0
    %2727 = vrot.lane.b32.xlu0 %v2561, 96
    %v2728 = vpop.permute.xlu0 %2727
    %2729 = vrot.lane.b32.xlu0 %v2567, 96
    %v2730 = vpop.permute.xlu0 %2729
    %v2731 = vsel %vm427, %v2728, 0
    %v2733 = vsel %vm427, %v2730, 0
    %2735 = vmatprep.subr.mxu0 0.0
    %2736 = vmatpush1.xpose.msra.mxu0 0.0
    %2737 = vmatprep.subr.mxu0 0.0
    %2738 = vmatpush1.xpose.msra.mxu0 0.0
    %2739 = vmatprep.subr.mxu0 0.0
    %2740 = vmatpush1.xpose.msra.mxu0 0.0
    %2741 = vmatprep.subr.mxu0 0.0
    %2742 = vmatpush1.xpose.msra.mxu0 0.0
    %2743 = vmatprep.subr.mxu0 0.0
    %2744 = vmatpush1.xpose.msra.mxu0 0.0
    %2745 = vmatprep.subr.mxu0 0.0
    %2746 = vmatpush1.xpose.msra.mxu0 0.0
    %2747 = vmatprep.subr.mxu0 0.0
    %2748 = vmatpush1.xpose.msra.mxu0 0.0
    %2749 = vmatprep.subr.mxu0 0.0
    %2750 = vmatpush1.xpose.msra.mxu0 0.0
    %2751 = vmatprep.subr.mxu0 0.0
    %2752 = vmatpush1.xpose.msra.mxu0 0.0
    %2753 = vmatprep.subr.mxu0 0.0
    %2754 = vmatpush1.xpose.msra.mxu0 0.0
    %2755 = vmatprep.subr.mxu0 0.0
    %2756 = vmatpush1.xpose.msra.mxu0 0.0
    %2757 = vmatprep.subr.mxu0 0.0
    %2758 = vmatpush1.xpose.msra.mxu0 0.0
    %2759 = vmatprep.subr.mxu0 0.0
    %2760 = vmatpush1.xpose.msra.mxu0 0.0
    %2761 = vmatprep.subr.mxu0 0.0
    %2762 = vmatpush1.xpose.msra.mxu0 0.0
    %2763 = vmatprep.subr.mxu0 0.0
    %2764 = vmatpush1.xpose.msra.mxu0 0.0
    %2765 = vmatprep.subr.mxu0 0.0
    %2766 = vmatpush1.xpose.msra.mxu0 %v2733
    %2767 = vmatprep.subr.mxu0 0.0
    %2768 = vmatpush2.xpose.msra.mxu0 0.0
    %2769 = vmatprep.subr.mxu0 0.0
    %2770 = vmatpush2.xpose.msra.mxu0 0.0
    %2771 = vmatprep.subr.mxu0 0.0
    %2772 = vmatpush2.xpose.msra.mxu0 0.0
    %2773 = vmatprep.subr.mxu0 0.0
    %2774 = vmatpush2.xpose.msra.mxu0 0.0
    %2775 = vmatprep.subr.mxu0 0.0
    %2776 = vmatpush2.xpose.msra.mxu0 0.0
    %2777 = vmatprep.subr.mxu0 0.0
    %2778 = vmatpush2.xpose.msra.mxu0 0.0
    %2779 = vmatprep.subr.mxu0 0.0
    %2780 = vmatpush2.xpose.msra.mxu0 0.0
    %2781 = vmatprep.subr.mxu0 0.0
    %2782 = vmatpush2.xpose.msra.mxu0 0.0
    %2783 = vmatprep.subr.mxu0 0.0
    %2784 = vmatpush2.xpose.msra.mxu0 0.0
    %2785 = vmatprep.subr.mxu0 0.0
    %2786 = vmatpush2.xpose.msra.mxu0 0.0
    %2787 = vmatprep.subr.mxu0 0.0
    %2788 = vmatpush2.xpose.msra.mxu0 0.0
    %2789 = vmatprep.subr.mxu0 0.0
    %2790 = vmatpush2.xpose.msra.mxu0 0.0
    %2791 = vmatprep.subr.mxu0 0.0
    %2792 = vmatpush2.xpose.msra.mxu0 0.0
    %2793 = vmatprep.subr.mxu0 0.0
    %2794 = vmatpush2.xpose.msra.mxu0 0.0
    %2795 = vmatprep.subr.mxu0 0.0
    %2796 = vmatpush2.xpose.msra.mxu0 0.0
    %2797 = vmatprep.subr.mxu0 0.0
    %2798 = vmatpush2.xpose.msra.mxu0 0.0
    %2799 = vmatprep.mubr.f32.mxu0 0.0
    %2800 = vmatmul.mubr.f32.gmra.mxu0 %v2731
    %v2801 = vpop.f32.mrf.mxu0
    %v2802 = vadd.f32 0.0, %v2801
    %v2803 = vpop.f32.mrf.mxu0
    %2804 = vdwg.mxu0
    %2805 = vrot.lane.b32.xlu0 %v2562, 96
    %v2806 = vpop.permute.xlu0 %2805
    %2807 = vrot.lane.b32.xlu0 %v2568, 96
    %v2808 = vpop.permute.xlu0 %2807
    %v2809 = vsel %vm427, %v2806, 0
    %v2811 = vsel %vm427, %v2808, 0
    %2813 = vmatprep.subr.mxu0 0.0
    %2814 = vmatpush1.xpose.msra.mxu0 0.0
    %2815 = vmatprep.subr.mxu0 0.0
    %2816 = vmatpush1.xpose.msra.mxu0 0.0
    %2817 = vmatprep.subr.mxu0 0.0
    %2818 = vmatpush1.xpose.msra.mxu0 0.0
    %2819 = vmatprep.subr.mxu0 0.0
    %2820 = vmatpush1.xpose.msra.mxu0 0.0
    %2821 = vmatprep.subr.mxu0 0.0
    %2822 = vmatpush1.xpose.msra.mxu0 0.0
    %2823 = vmatprep.subr.mxu0 0.0
    %2824 = vmatpush1.xpose.msra.mxu0 0.0
    %2825 = vmatprep.subr.mxu0 0.0
    %2826 = vmatpush1.xpose.msra.mxu0 0.0
    %2827 = vmatprep.subr.mxu0 0.0
    %2828 = vmatpush1.xpose.msra.mxu0 0.0
    %2829 = vmatprep.subr.mxu0 0.0
    %2830 = vmatpush1.xpose.msra.mxu0 0.0
    %2831 = vmatprep.subr.mxu0 0.0
    %2832 = vmatpush1.xpose.msra.mxu0 0.0
    %2833 = vmatprep.subr.mxu0 0.0
    %2834 = vmatpush1.xpose.msra.mxu0 0.0
    %2835 = vmatprep.subr.mxu0 0.0
    %2836 = vmatpush1.xpose.msra.mxu0 0.0
    %2837 = vmatprep.subr.mxu0 0.0
    %2838 = vmatpush1.xpose.msra.mxu0 0.0
    %2839 = vmatprep.subr.mxu0 0.0
    %2840 = vmatpush1.xpose.msra.mxu0 0.0
    %2841 = vmatprep.subr.mxu0 0.0
    %2842 = vmatpush1.xpose.msra.mxu0 0.0
    %2843 = vmatprep.subr.mxu0 0.0
    %2844 = vmatpush1.xpose.msra.mxu0 %v2811
    %2845 = vmatprep.subr.mxu0 0.0
    %2846 = vmatpush2.xpose.msra.mxu0 0.0
    %2847 = vmatprep.subr.mxu0 0.0
    %2848 = vmatpush2.xpose.msra.mxu0 0.0
    %2849 = vmatprep.subr.mxu0 0.0
    %2850 = vmatpush2.xpose.msra.mxu0 0.0
    %2851 = vmatprep.subr.mxu0 0.0
    %2852 = vmatpush2.xpose.msra.mxu0 0.0
    %2853 = vmatprep.subr.mxu0 0.0
    %2854 = vmatpush2.xpose.msra.mxu0 0.0
    %2855 = vmatprep.subr.mxu0 0.0
    %2856 = vmatpush2.xpose.msra.mxu0 0.0
    %2857 = vmatprep.subr.mxu0 0.0
    %2858 = vmatpush2.xpose.msra.mxu0 0.0
    %2859 = vmatprep.subr.mxu0 0.0
    %2860 = vmatpush2.xpose.msra.mxu0 0.0
    %2861 = vmatprep.subr.mxu0 0.0
    %2862 = vmatpush2.xpose.msra.mxu0 0.0
    %2863 = vmatprep.subr.mxu0 0.0
    %2864 = vmatpush2.xpose.msra.mxu0 0.0
    %2865 = vmatprep.subr.mxu0 0.0
    %2866 = vmatpush2.xpose.msra.mxu0 0.0
    %2867 = vmatprep.subr.mxu0 0.0
    %2868 = vmatpush2.xpose.msra.mxu0 0.0
    %2869 = vmatprep.subr.mxu0 0.0
    %2870 = vmatpush2.xpose.msra.mxu0 0.0
    %2871 = vmatprep.subr.mxu0 0.0
    %2872 = vmatpush2.xpose.msra.mxu0 0.0
    %2873 = vmatprep.subr.mxu0 0.0
    %2874 = vmatpush2.xpose.msra.mxu0 0.0
    %2875 = vmatprep.subr.mxu0 0.0
    %2876 = vmatpush2.xpose.msra.mxu0 0.0
    %2877 = vmatprep.mubr.f32.mxu0 0.0
    %2878 = vmatmul.mubr.f32.gmra.mxu0 %v2809
    %v2879 = vpop.f32.mrf.mxu0
    %v2880 = vadd.f32 0.0, %v2879
    %v2881 = vpop.f32.mrf.mxu0
    %2882 = vdwg.mxu0
    %2883 = vrot.lane.b32.xlu0 %v2561, 64
    %v2884 = vpop.permute.xlu0 %2883
    %2885 = vrot.lane.b32.xlu0 %v2567, 64
    %v2886 = vpop.permute.xlu0 %2885
    %v2887 = vsel %vm427, %v2884, 0
    %v2889 = vsel %vm427, %v2886, 0
    %2891 = vmatprep.subr.mxu0 0.0
    %2892 = vmatpush1.xpose.msra.mxu0 0.0
    %2893 = vmatprep.subr.mxu0 0.0
    %2894 = vmatpush1.xpose.msra.mxu0 0.0
    %2895 = vmatprep.subr.mxu0 0.0
    %2896 = vmatpush1.xpose.msra.mxu0 0.0
    %2897 = vmatprep.subr.mxu0 0.0
    %2898 = vmatpush1.xpose.msra.mxu0 0.0
    %2899 = vmatprep.subr.mxu0 0.0
    %2900 = vmatpush1.xpose.msra.mxu0 0.0
    %2901 = vmatprep.subr.mxu0 0.0
    %2902 = vmatpush1.xpose.msra.mxu0 0.0
    %2903 = vmatprep.subr.mxu0 0.0
    %2904 = vmatpush1.xpose.msra.mxu0 0.0
    %2905 = vmatprep.subr.mxu0 0.0
    %2906 = vmatpush1.xpose.msra.mxu0 0.0
    %2907 = vmatprep.subr.mxu0 0.0
    %2908 = vmatpush1.xpose.msra.mxu0 0.0
    %2909 = vmatprep.subr.mxu0 0.0
    %2910 = vmatpush1.xpose.msra.mxu0 0.0
    %2911 = vmatprep.subr.mxu0 0.0
    %2912 = vmatpush1.xpose.msra.mxu0 0.0
    %2913 = vmatprep.subr.mxu0 0.0
    %2914 = vmatpush1.xpose.msra.mxu0 0.0
    %2915 = vmatprep.subr.mxu0 0.0
    %2916 = vmatpush1.xpose.msra.mxu0 0.0
    %2917 = vmatprep.subr.mxu0 0.0
    %2918 = vmatpush1.xpose.msra.mxu0 0.0
    %2919 = vmatprep.subr.mxu0 0.0
    %2920 = vmatpush1.xpose.msra.mxu0 0.0
    %2921 = vmatprep.subr.mxu0 0.0
    %2922 = vmatpush1.xpose.msra.mxu0 %v2889
    %2923 = vmatprep.subr.mxu0 0.0
    %2924 = vmatpush2.xpose.msra.mxu0 0.0
    %2925 = vmatprep.subr.mxu0 0.0
    %2926 = vmatpush2.xpose.msra.mxu0 0.0
    %2927 = vmatprep.subr.mxu0 0.0
    %2928 = vmatpush2.xpose.msra.mxu0 0.0
    %2929 = vmatprep.subr.mxu0 0.0
    %2930 = vmatpush2.xpose.msra.mxu0 0.0
    %2931 = vmatprep.subr.mxu0 0.0
    %2932 = vmatpush2.xpose.msra.mxu0 0.0
    %2933 = vmatprep.subr.mxu0 0.0
    %2934 = vmatpush2.xpose.msra.mxu0 0.0
    %2935 = vmatprep.subr.mxu0 0.0
    %2936 = vmatpush2.xpose.msra.mxu0 0.0
    %2937 = vmatprep.subr.mxu0 0.0
    %2938 = vmatpush2.xpose.msra.mxu0 0.0
    %2939 = vmatprep.subr.mxu0 0.0
    %2940 = vmatpush2.xpose.msra.mxu0 0.0
    %2941 = vmatprep.subr.mxu0 0.0
    %2942 = vmatpush2.xpose.msra.mxu0 0.0
    %2943 = vmatprep.subr.mxu0 0.0
    %2944 = vmatpush2.xpose.msra.mxu0 0.0
    %2945 = vmatprep.subr.mxu0 0.0
    %2946 = vmatpush2.xpose.msra.mxu0 0.0
    %2947 = vmatprep.subr.mxu0 0.0
    %2948 = vmatpush2.xpose.msra.mxu0 0.0
    %2949 = vmatprep.subr.mxu0 0.0
    %2950 = vmatpush2.xpose.msra.mxu0 0.0
    %2951 = vmatprep.subr.mxu0 0.0
    %2952 = vmatpush2.xpose.msra.mxu0 0.0
    %2953 = vmatprep.subr.mxu0 0.0
    %2954 = vmatpush2.xpose.msra.mxu0 0.0
    %2955 = vmatprep.mubr.f32.mxu0 0.0
    %2956 = vmatmul.mubr.f32.gmra.mxu0 %v2887
    %v2957 = vpop.f32.mrf.mxu0
    %v2958 = vadd.f32 0.0, %v2957
    %v2959 = vpop.f32.mrf.mxu0
    %2960 = vdwg.mxu0
    %2961 = vrot.lane.b32.xlu0 %v2562, 64
    %v2962 = vpop.permute.xlu0 %2961
    %2963 = vrot.lane.b32.xlu0 %v2568, 64
    %v2964 = vpop.permute.xlu0 %2963
    %v2965 = vsel %vm427, %v2962, 0
    %v2967 = vsel %vm427, %v2964, 0
    %2969 = vmatprep.subr.mxu0 0.0
    %2970 = vmatpush1.xpose.msra.mxu0 0.0
    %2971 = vmatprep.subr.mxu0 0.0
    %2972 = vmatpush1.xpose.msra.mxu0 0.0
    %2973 = vmatprep.subr.mxu0 0.0
    %2974 = vmatpush1.xpose.msra.mxu0 0.0
    %2975 = vmatprep.subr.mxu0 0.0
    %2976 = vmatpush1.xpose.msra.mxu0 0.0
    %2977 = vmatprep.subr.mxu0 0.0
    %2978 = vmatpush1.xpose.msra.mxu0 0.0
    %2979 = vmatprep.subr.mxu0 0.0
    %2980 = vmatpush1.xpose.msra.mxu0 0.0
    %2981 = vmatprep.subr.mxu0 0.0
    %2982 = vmatpush1.xpose.msra.mxu0 0.0
    %2983 = vmatprep.subr.mxu0 0.0
    %2984 = vmatpush1.xpose.msra.mxu0 0.0
    %2985 = vmatprep.subr.mxu0 0.0
    %2986 = vmatpush1.xpose.msra.mxu0 0.0
    %2987 = vmatprep.subr.mxu0 0.0
    %2988 = vmatpush1.xpose.msra.mxu0 0.0
    %2989 = vmatprep.subr.mxu0 0.0
    %2990 = vmatpush1.xpose.msra.mxu0 0.0
    %2991 = vmatprep.subr.mxu0 0.0
    %2992 = vmatpush1.xpose.msra.mxu0 0.0
    %2993 = vmatprep.subr.mxu0 0.0
    %2994 = vmatpush1.xpose.msra.mxu0 0.0
    %2995 = vmatprep.subr.mxu0 0.0
    %2996 = vmatpush1.xpose.msra.mxu0 0.0
    %2997 = vmatprep.subr.mxu0 0.0
    %2998 = vmatpush1.xpose.msra.mxu0 0.0
    %2999 = vmatprep.subr.mxu0 0.0
    %3000 = vmatpush1.xpose.msra.mxu0 %v2967
    %3001 = vmatprep.subr.mxu0 0.0
    %3002 = vmatpush2.xpose.msra.mxu0 0.0
    %3003 = vmatprep.subr.mxu0 0.0
    %3004 = vmatpush2.xpose.msra.mxu0 0.0
    %3005 = vmatprep.subr.mxu0 0.0
    %3006 = vmatpush2.xpose.msra.mxu0 0.0
    %3007 = vmatprep.subr.mxu0 0.0
    %3008 = vmatpush2.xpose.msra.mxu0 0.0
    %3009 = vmatprep.subr.mxu0 0.0
    %3010 = vmatpush2.xpose.msra.mxu0 0.0
    %3011 = vmatprep.subr.mxu0 0.0
    %3012 = vmatpush2.xpose.msra.mxu0 0.0
    %3013 = vmatprep.subr.mxu0 0.0
    %3014 = vmatpush2.xpose.msra.mxu0 0.0
    %3015 = vmatprep.subr.mxu0 0.0
    %3016 = vmatpush2.xpose.msra.mxu0 0.0
    %3017 = vmatprep.subr.mxu0 0.0
    %3018 = vmatpush2.xpose.msra.mxu0 0.0
    %3019 = vmatprep.subr.mxu0 0.0
    %3020 = vmatpush2.xpose.msra.mxu0 0.0
    %3021 = vmatprep.subr.mxu0 0.0
    %3022 = vmatpush2.xpose.msra.mxu0 0.0
    %3023 = vmatprep.subr.mxu0 0.0
    %3024 = vmatpush2.xpose.msra.mxu0 0.0
    %3025 = vmatprep.subr.mxu0 0.0
    %3026 = vmatpush2.xpose.msra.mxu0 0.0
    %3027 = vmatprep.subr.mxu0 0.0
    %3028 = vmatpush2.xpose.msra.mxu0 0.0
    %3029 = vmatprep.subr.mxu0 0.0
    %3030 = vmatpush2.xpose.msra.mxu0 0.0
    %3031 = vmatprep.subr.mxu0 0.0
    %3032 = vmatpush2.xpose.msra.mxu0 0.0
    %3033 = vmatprep.mubr.f32.mxu0 0.0
    %3034 = vmatmul.mubr.f32.gmra.mxu0 %v2965
    %v3035 = vpop.f32.mrf.mxu0
    %v3036 = vadd.f32 0.0, %v3035
    %v3037 = vpop.f32.mrf.mxu0
    %3038 = vdwg.mxu0
    %3039 = vrot.lane.b32.xlu0 %v2561, 32
    %v3040 = vpop.permute.xlu0 %3039
    %3041 = vrot.lane.b32.xlu0 %v2567, 32
    %v3042 = vpop.permute.xlu0 %3041
    %v3043 = vsel %vm427, %v3040, 0
    %v3045 = vsel %vm427, %v3042, 0
    %3047 = vmatprep.subr.mxu0 0.0
    %3048 = vmatpush1.xpose.msra.mxu0 0.0
    %3049 = vmatprep.subr.mxu0 0.0
    %3050 = vmatpush1.xpose.msra.mxu0 0.0
    %3051 = vmatprep.subr.mxu0 0.0
    %3052 = vmatpush1.xpose.msra.mxu0 0.0
    %3053 = vmatprep.subr.mxu0 0.0
    %3054 = vmatpush1.xpose.msra.mxu0 0.0
    %3055 = vmatprep.subr.mxu0 0.0
    %3056 = vmatpush1.xpose.msra.mxu0 0.0
    %3057 = vmatprep.subr.mxu0 0.0
    %3058 = vmatpush1.xpose.msra.mxu0 0.0
    %3059 = vmatprep.subr.mxu0 0.0
    %3060 = vmatpush1.xpose.msra.mxu0 0.0
    %3061 = vmatprep.subr.mxu0 0.0
    %3062 = vmatpush1.xpose.msra.mxu0 0.0
    %3063 = vmatprep.subr.mxu0 0.0
    %3064 = vmatpush1.xpose.msra.mxu0 0.0
    %3065 = vmatprep.subr.mxu0 0.0
    %3066 = vmatpush1.xpose.msra.mxu0 0.0
    %3067 = vmatprep.subr.mxu0 0.0
    %3068 = vmatpush1.xpose.msra.mxu0 0.0
    %3069 = vmatprep.subr.mxu0 0.0
    %3070 = vmatpush1.xpose.msra.mxu0 0.0
    %3071 = vmatprep.subr.mxu0 0.0
    %3072 = vmatpush1.xpose.msra.mxu0 0.0
    %3073 = vmatprep.subr.mxu0 0.0
    %3074 = vmatpush1.xpose.msra.mxu0 0.0
    %3075 = vmatprep.subr.mxu0 0.0
    %3076 = vmatpush1.xpose.msra.mxu0 0.0
    %3077 = vmatprep.subr.mxu0 0.0
    %3078 = vmatpush1.xpose.msra.mxu0 %v3045
    %3079 = vmatprep.subr.mxu0 0.0
    %3080 = vmatpush2.xpose.msra.mxu0 0.0
    %3081 = vmatprep.subr.mxu0 0.0
    %3082 = vmatpush2.xpose.msra.mxu0 0.0
    %3083 = vmatprep.subr.mxu0 0.0
    %3084 = vmatpush2.xpose.msra.mxu0 0.0
    %3085 = vmatprep.subr.mxu0 0.0
    %3086 = vmatpush2.xpose.msra.mxu0 0.0
    %3087 = vmatprep.subr.mxu0 0.0
    %3088 = vmatpush2.xpose.msra.mxu0 0.0
    %3089 = vmatprep.subr.mxu0 0.0
    %3090 = vmatpush2.xpose.msra.mxu0 0.0
    %3091 = vmatprep.subr.mxu0 0.0
    %3092 = vmatpush2.xpose.msra.mxu0 0.0
    %3093 = vmatprep.subr.mxu0 0.0
    %3094 = vmatpush2.xpose.msra.mxu0 0.0
    %3095 = vmatprep.subr.mxu0 0.0
    %3096 = vmatpush2.xpose.msra.mxu0 0.0
    %3097 = vmatprep.subr.mxu0 0.0
    %3098 = vmatpush2.xpose.msra.mxu0 0.0
    %3099 = vmatprep.subr.mxu0 0.0
    %3100 = vmatpush2.xpose.msra.mxu0 0.0
    %3101 = vmatprep.subr.mxu0 0.0
    %3102 = vmatpush2.xpose.msra.mxu0 0.0
    %3103 = vmatprep.subr.mxu0 0.0
    %3104 = vmatpush2.xpose.msra.mxu0 0.0
    %3105 = vmatprep.subr.mxu0 0.0
    %3106 = vmatpush2.xpose.msra.mxu0 0.0
    %3107 = vmatprep.subr.mxu0 0.0
    %3108 = vmatpush2.xpose.msra.mxu0 0.0
    %3109 = vmatprep.subr.mxu0 0.0
    %3110 = vmatpush2.xpose.msra.mxu0 0.0
    %3111 = vmatprep.mubr.f32.mxu0 0.0
    %3112 = vmatmul.mubr.f32.gmra.mxu0 %v3043
    %v3113 = vpop.f32.mrf.mxu0
    %v3114 = vadd.f32 0.0, %v3113
    %v3115 = vpop.f32.mrf.mxu0
    %3116 = vdwg.mxu0
    %3117 = vrot.lane.b32.xlu0 %v2562, 32
    %v3118 = vpop.permute.xlu0 %3117
    %3119 = vrot.lane.b32.xlu0 %v2568, 32
    %v3120 = vpop.permute.xlu0 %3119
    %v3121 = vsel %vm427, %v3118, 0
    %v3123 = vsel %vm427, %v3120, 0
    %3125 = vmatprep.subr.mxu0 0.0
    %3126 = vmatpush1.xpose.msra.mxu0 0.0
    %3127 = vmatprep.subr.mxu0 0.0
    %3128 = vmatpush1.xpose.msra.mxu0 0.0
    %3129 = vmatprep.subr.mxu0 0.0
    %3130 = vmatpush1.xpose.msra.mxu0 0.0
    %3131 = vmatprep.subr.mxu0 0.0
    %3132 = vmatpush1.xpose.msra.mxu0 0.0
    %3133 = vmatprep.subr.mxu0 0.0
    %3134 = vmatpush1.xpose.msra.mxu0 0.0
    %3135 = vmatprep.subr.mxu0 0.0
    %3136 = vmatpush1.xpose.msra.mxu0 0.0
    %3137 = vmatprep.subr.mxu0 0.0
    %3138 = vmatpush1.xpose.msra.mxu0 0.0
    %3139 = vmatprep.subr.mxu0 0.0
    %3140 = vmatpush1.xpose.msra.mxu0 0.0
    %3141 = vmatprep.subr.mxu0 0.0
    %3142 = vmatpush1.xpose.msra.mxu0 0.0
    %3143 = vmatprep.subr.mxu0 0.0
    %3144 = vmatpush1.xpose.msra.mxu0 0.0
    %3145 = vmatprep.subr.mxu0 0.0
    %3146 = vmatpush1.xpose.msra.mxu0 0.0
    %3147 = vmatprep.subr.mxu0 0.0
    %3148 = vmatpush1.xpose.msra.mxu0 0.0
    %3149 = vmatprep.subr.mxu0 0.0
    %3150 = vmatpush1.xpose.msra.mxu0 0.0
    %3151 = vmatprep.subr.mxu0 0.0
    %3152 = vmatpush1.xpose.msra.mxu0 0.0
    %3153 = vmatprep.subr.mxu0 0.0
    %3154 = vmatpush1.xpose.msra.mxu0 0.0
    %3155 = vmatprep.subr.mxu0 0.0
    %3156 = vmatpush1.xpose.msra.mxu0 %v3123
    %3157 = vmatprep.subr.mxu0 0.0
    %3158 = vmatpush2.xpose.msra.mxu0 0.0
    %3159 = vmatprep.subr.mxu0 0.0
    %3160 = vmatpush2.xpose.msra.mxu0 0.0
    %3161 = vmatprep.subr.mxu0 0.0
    %3162 = vmatpush2.xpose.msra.mxu0 0.0
    %3163 = vmatprep.subr.mxu0 0.0
    %3164 = vmatpush2.xpose.msra.mxu0 0.0
    %3165 = vmatprep.subr.mxu0 0.0
    %3166 = vmatpush2.xpose.msra.mxu0 0.0
    %3167 = vmatprep.subr.mxu0 0.0
    %3168 = vmatpush2.xpose.msra.mxu0 0.0
    %3169 = vmatprep.subr.mxu0 0.0
    %3170 = vmatpush2.xpose.msra.mxu0 0.0
    %3171 = vmatprep.subr.mxu0 0.0
    %3172 = vmatpush2.xpose.msra.mxu0 0.0
    %3173 = vmatprep.subr.mxu0 0.0
    %3174 = vmatpush2.xpose.msra.mxu0 0.0
    %3175 = vmatprep.subr.mxu0 0.0
    %3176 = vmatpush2.xpose.msra.mxu0 0.0
    %3177 = vmatprep.subr.mxu0 0.0
    %3178 = vmatpush2.xpose.msra.mxu0 0.0
    %3179 = vmatprep.subr.mxu0 0.0
    %3180 = vmatpush2.xpose.msra.mxu0 0.0
    %3181 = vmatprep.subr.mxu0 0.0
    %3182 = vmatpush2.xpose.msra.mxu0 0.0
    %3183 = vmatprep.subr.mxu0 0.0
    %3184 = vmatpush2.xpose.msra.mxu0 0.0
    %3185 = vmatprep.subr.mxu0 0.0
    %3186 = vmatpush2.xpose.msra.mxu0 0.0
    %3187 = vmatprep.subr.mxu0 0.0
    %3188 = vmatpush2.xpose.msra.mxu0 0.0
    %3189 = vmatprep.mubr.f32.mxu0 0.0
    %3190 = vmatmul.mubr.f32.gmra.mxu0 %v3121
    %v3191 = vpop.f32.mrf.mxu0
    %v3192 = vadd.f32 0.0, %v3191
    %v3193 = vpop.f32.mrf.mxu0
    %3194 = vdwg.mxu0
    %v3195 = vmul.f32 %v2648, 0.17677669
    %v3196 = vmul.f32 %v2724, 0.17677669
    %v3197 = vmul.f32 %v2802, 0.17677669
    %v3198 = vmul.f32 %v2880, 0.17677669
    %v3199 = vmul.f32 %v2958, 0.17677669
    %v3200 = vmul.f32 %v3036, 0.17677669
    %v3201 = vmul.f32 %v3114, 0.17677669
    %v3202 = vmul.f32 %v3192, 0.17677669
    %v3203 = vsel %vm1056, %v3195, -inf
    %3204 = vmax.xlane.f32.xlu0 %v3203
    %v3205 = vpop.xlane.xlu0 %3204
    %v3206 = vsel %vm1056, %v3196, -inf
    %3207 = vmax.xlane.f32.xlu0 %v3206
    %v3208 = vpop.xlane.xlu0 %3207
    %v3209 = vsel %vm1056, %v3197, -inf
    %3210 = vmax.xlane.f32.xlu0 %v3209
    %v3211 = vpop.xlane.xlu0 %3210
    %v3212 = vsel %vm1056, %v3198, -inf
    %3213 = vmax.xlane.f32.xlu0 %v3212
    %v3214 = vpop.xlane.xlu0 %3213
    %v3215 = vsel %vm1056, %v3199, -inf
    %3216 = vmax.xlane.f32.xlu0 %v3215
    %v3217 = vpop.xlane.xlu0 %3216
    %v3218 = vsel %vm1056, %v3200, -inf
    %3219 = vmax.xlane.f32.xlu0 %v3218
    %v3220 = vpop.xlane.xlu0 %3219
    %v3221 = vsel %vm1056, %v3201, -inf
    %3222 = vmax.xlane.f32.xlu0 %v3221
    %v3223 = vpop.xlane.xlu0 %3222
    %v3224 = vsel %vm1056, %v3202, -inf
    %3225 = vmax.xlane.f32.xlu0 %v3224
    %v3226 = vpop.xlane.xlu0 %3225
    %v3227 = vsub.f32 %v3195, %v3205
    %v3228 = vsub.f32 %v3196, %v3208
    %v3229 = vsub.f32 %v3197, %v3211
    %v3230 = vsub.f32 %v3198, %v3214
    %v3231 = vsub.f32 %v3199, %v3217
    %v3232 = vsub.f32 %v3200, %v3220
    %v3233 = vsub.f32 %v3201, %v3223
    %v3234 = vsub.f32 %v3202, %v3226
    %v3235 = vmul.f32 %v3227, 1.442695
    %v3236 = vpow.pop %v3235
    %v3237 = vmul.f32 %v3228, 1.442695
    %v3238 = vpow.pop %v3237
    %v3239 = vmul.f32 %v3229, 1.442695
    %v3240 = vpow.pop %v3239
    %v3241 = vmul.f32 %v3230, 1.442695
    %v3242 = vpow.pop %v3241
    %v3243 = vmul.f32 %v3231, 1.442695
    %v3244 = vpow.pop %v3243
    %v3245 = vmul.f32 %v3232, 1.442695
    %v3246 = vpow.pop %v3245
    %v3247 = vmul.f32 %v3233, 1.442695
    %v3248 = vpow.pop %v3247
    %v3249 = vmul.f32 %v3234, 1.442695
    %v3250 = vpow.pop %v3249
    %v3251 = vsel %vm1056, %v3236, 0.0
    %3252 = vadd.xlane.f32.xlu0 %v3251
    %v3253 = vpop.xlane.xlu0 %3252
    %v3254 = vsel %vm1056, %v3238, 0.0
    %3255 = vadd.xlane.f32.xlu0 %v3254
    %v3256 = vpop.xlane.xlu0 %3255
    %v3257 = vsel %vm1056, %v3240, 0.0
    %3258 = vadd.xlane.f32.xlu0 %v3257
    %v3259 = vpop.xlane.xlu0 %3258
    %v3260 = vsel %vm1056, %v3242, 0.0
    %3261 = vadd.xlane.f32.xlu0 %v3260
    %v3262 = vpop.xlane.xlu0 %3261
    %v3263 = vsel %vm1056, %v3244, 0.0
    %3264 = vadd.xlane.f32.xlu0 %v3263
    %v3265 = vpop.xlane.xlu0 %3264
    %v3266 = vsel %vm1056, %v3246, 0.0
    %3267 = vadd.xlane.f32.xlu0 %v3266
    %v3268 = vpop.xlane.xlu0 %3267
    %v3269 = vsel %vm1056, %v3248, 0.0
    %3270 = vadd.xlane.f32.xlu0 %v3269
    %v3271 = vpop.xlane.xlu0 %3270
    %v3272 = vsel %vm1056, %v3250, 0.0
    %3273 = vadd.xlane.f32.xlu0 %v3272
    %v3274 = vpop.xlane.xlu0 %3273
    %v3275 = vrcp.pop %v3253
    %v3276 = vrcp.pop %v3256
    %v3277 = vrcp.pop %v3259
    %v3278 = vrcp.pop %v3262
    %v3279 = vrcp.pop %v3265
    %v3280 = vrcp.pop %v3268
    %v3281 = vrcp.pop %v3271
    %v3282 = vrcp.pop %v3274
    %v3283 = vmul.f32 %v3236, %v3275
    %v3284 = vmul.f32 %v3238, %v3276
    %v3285 = vmul.f32 %v3240, %v3277
    %v3286 = vmul.f32 %v3242, %v3278
    %v3287 = vmul.f32 %v3244, %v3279
    %v3288 = vmul.f32 %v3246, %v3280
    %v3289 = vmul.f32 %v3248, %v3281
    %v3290 = vmul.f32 %v3250, %v3282
    %v3292 = vsel %vm1056, %v3283, 0
    %3294 = vmatprep.subr.mxu0 0.0
    %3295 = vmatpush1.msra.mxu0 0.0
    %3296 = vmatprep.subr.mxu0 0.0
    %3297 = vmatpush1.msra.mxu0 0.0
    %3298 = vmatprep.subr.mxu0 0.0
    %3299 = vmatpush1.msra.mxu0 0.0
    %3300 = vmatprep.subr.mxu0 0.0
    %3301 = vmatpush1.msra.mxu0 0.0
    %3302 = vmatprep.subr.mxu0 0.0
    %3303 = vmatpush1.msra.mxu0 0.0
    %3304 = vmatprep.subr.mxu0 0.0
    %3305 = vmatpush1.msra.mxu0 0.0
    %3306 = vmatprep.subr.mxu0 0.0
    %3307 = vmatpush1.msra.mxu0 0.0
    %3308 = vmatprep.subr.mxu0 0.0
    %3309 = vmatpush1.msra.mxu0 0.0
    %3310 = vmatprep.subr.mxu0 0.0
    %3311 = vmatpush1.msra.mxu0 0.0
    %3312 = vmatprep.subr.mxu0 0.0
    %3313 = vmatpush1.msra.mxu0 0.0
    %3314 = vmatprep.subr.mxu0 0.0
    %3315 = vmatpush1.msra.mxu0 0.0
    %3316 = vmatprep.subr.mxu0 0.0
    %3317 = vmatpush1.msra.mxu0 0.0
    %3318 = vmatprep.subr.mxu0 0.0
    %3319 = vmatpush1.msra.mxu0 0.0
    %3320 = vmatprep.subr.mxu0 0.0
    %3321 = vmatpush1.msra.mxu0 0.0
    %3322 = vmatprep.subr.mxu0 0.0
    %3323 = vmatpush1.msra.mxu0 0.0
    %3324 = vmatprep.subr.mxu0 0.0
    %3325 = vmatpush1.msra.mxu0 %v2573
    %3326 = vmatprep.subr.mxu0 0.0
    %3327 = vmatpush2.msra.mxu0 0.0
    %3328 = vmatprep.subr.mxu0 0.0
    %3329 = vmatpush2.msra.mxu0 0.0
    %3330 = vmatprep.subr.mxu0 0.0
    %3331 = vmatpush2.msra.mxu0 0.0
    %3332 = vmatprep.subr.mxu0 0.0
    %3333 = vmatpush2.msra.mxu0 0.0
    %3334 = vmatprep.subr.mxu0 0.0
    %3335 = vmatpush2.msra.mxu0 0.0
    %3336 = vmatprep.subr.mxu0 0.0
    %3337 = vmatpush2.msra.mxu0 0.0
    %3338 = vmatprep.subr.mxu0 0.0
    %3339 = vmatpush2.msra.mxu0 0.0
    %3340 = vmatprep.subr.mxu0 0.0
    %3341 = vmatpush2.msra.mxu0 0.0
    %3342 = vmatprep.subr.mxu0 0.0
    %3343 = vmatpush2.msra.mxu0 0.0
    %3344 = vmatprep.subr.mxu0 0.0
    %3345 = vmatpush2.msra.mxu0 0.0
    %3346 = vmatprep.subr.mxu0 0.0
    %3347 = vmatpush2.msra.mxu0 0.0
    %3348 = vmatprep.subr.mxu0 0.0
    %3349 = vmatpush2.msra.mxu0 0.0
    %3350 = vmatprep.subr.mxu0 0.0
    %3351 = vmatpush2.msra.mxu0 0.0
    %3352 = vmatprep.subr.mxu0 0.0
    %3353 = vmatpush2.msra.mxu0 0.0
    %3354 = vmatprep.subr.mxu0 0.0
    %3355 = vmatpush2.msra.mxu0 0.0
    %3356 = vmatprep.subr.mxu0 0.0
    %3357 = vmatpush2.msra.mxu0 0.0
    %3358 = vmatprep.mubr.f32.mxu0 0.0
    %3359 = vmatmul.mubr.f32.gmra.mxu0 %v3292
    %v3360 = vpop.f32.mrf.mxu0
    %v3361 = vadd.f32 0.0, %v3360
    %v3362 = vpop.f32.mrf.mxu0
    %3363 = vdwg.mxu0
    %v3365 = vsel %vm1056, %v3284, 0
    %3367 = vmatprep.subr.mxu0 0.0
    %3368 = vmatpush1.msra.mxu0 0.0
    %3369 = vmatprep.subr.mxu0 0.0
    %3370 = vmatpush1.msra.mxu0 0.0
    %3371 = vmatprep.subr.mxu0 0.0
    %3372 = vmatpush1.msra.mxu0 0.0
    %3373 = vmatprep.subr.mxu0 0.0
    %3374 = vmatpush1.msra.mxu0 0.0
    %3375 = vmatprep.subr.mxu0 0.0
    %3376 = vmatpush1.msra.mxu0 0.0
    %3377 = vmatprep.subr.mxu0 0.0
    %3378 = vmatpush1.msra.mxu0 0.0
    %3379 = vmatprep.subr.mxu0 0.0
    %3380 = vmatpush1.msra.mxu0 0.0
    %3381 = vmatprep.subr.mxu0 0.0
    %3382 = vmatpush1.msra.mxu0 0.0
    %3383 = vmatprep.subr.mxu0 0.0
    %3384 = vmatpush1.msra.mxu0 0.0
    %3385 = vmatprep.subr.mxu0 0.0
    %3386 = vmatpush1.msra.mxu0 0.0
    %3387 = vmatprep.subr.mxu0 0.0
    %3388 = vmatpush1.msra.mxu0 0.0
    %3389 = vmatprep.subr.mxu0 0.0
    %3390 = vmatpush1.msra.mxu0 0.0
    %3391 = vmatprep.subr.mxu0 0.0
    %3392 = vmatpush1.msra.mxu0 0.0
    %3393 = vmatprep.subr.mxu0 0.0
    %3394 = vmatpush1.msra.mxu0 0.0
    %3395 = vmatprep.subr.mxu0 0.0
    %3396 = vmatpush1.msra.mxu0 0.0
    %3397 = vmatprep.subr.mxu0 0.0
    %3398 = vmatpush1.msra.mxu0 %v2574
    %3399 = vmatprep.subr.mxu0 0.0
    %3400 = vmatpush2.msra.mxu0 0.0
    %3401 = vmatprep.subr.mxu0 0.0
    %3402 = vmatpush2.msra.mxu0 0.0
    %3403 = vmatprep.subr.mxu0 0.0
    %3404 = vmatpush2.msra.mxu0 0.0
    %3405 = vmatprep.subr.mxu0 0.0
    %3406 = vmatpush2.msra.mxu0 0.0
    %3407 = vmatprep.subr.mxu0 0.0
    %3408 = vmatpush2.msra.mxu0 0.0
    %3409 = vmatprep.subr.mxu0 0.0
    %3410 = vmatpush2.msra.mxu0 0.0
    %3411 = vmatprep.subr.mxu0 0.0
    %3412 = vmatpush2.msra.mxu0 0.0
    %3413 = vmatprep.subr.mxu0 0.0
    %3414 = vmatpush2.msra.mxu0 0.0
    %3415 = vmatprep.subr.mxu0 0.0
    %3416 = vmatpush2.msra.mxu0 0.0
    %3417 = vmatprep.subr.mxu0 0.0
    %3418 = vmatpush2.msra.mxu0 0.0
    %3419 = vmatprep.subr.mxu0 0.0
    %3420 = vmatpush2.msra.mxu0 0.0
    %3421 = vmatprep.subr.mxu0 0.0
    %3422 = vmatpush2.msra.mxu0 0.0
    %3423 = vmatprep.subr.mxu0 0.0
    %3424 = vmatpush2.msra.mxu0 0.0
    %3425 = vmatprep.subr.mxu0 0.0
    %3426 = vmatpush2.msra.mxu0 0.0
    %3427 = vmatprep.subr.mxu0 0.0
    %3428 = vmatpush2.msra.mxu0 0.0
    %3429 = vmatprep.subr.mxu0 0.0
    %3430 = vmatpush2.msra.mxu0 0.0
    %3431 = vmatprep.mubr.f32.mxu0 0.0
    %3432 = vmatmul.mubr.f32.gmra.mxu0 %v3365
    %v3433 = vpop.f32.mrf.mxu0
    %v3434 = vadd.f32 0.0, %v3433
    %v3435 = vpop.f32.mrf.mxu0
    %3436 = vdwg.mxu0
    %v3437 = vpack.c.bf16 %v3434, %v3361
    %s3438 = scalar_lea.vmem [#allocation4], 64
    %v3439 = vld [vmem:[%s3438] sm:$0xf]
    %v3440 = vld [vmem:[%s3438 + $0x4] sm:$0xf]
    %v3441 = vld [vmem:[%s3438 + $0x8] sm:$0xf]
    %v3442 = vld [vmem:[%s3438 + $0xc] sm:$0xf]
    %3444 = vrot.lane.b32.xlu0 %v2573, 96
    %v3445 = vpop.permute.xlu0 %3444
    %v3448 = vsel %vm1056, %v3285, 0
    %3450 = vmatprep.subr.mxu0 0.0
    %3451 = vmatpush1.msra.mxu0 0.0
    %3452 = vmatprep.subr.mxu0 0.0
    %3453 = vmatpush1.msra.mxu0 0.0
    %3454 = vmatprep.subr.mxu0 0.0
    %3455 = vmatpush1.msra.mxu0 0.0
    %3456 = vmatprep.subr.mxu0 0.0
    %3457 = vmatpush1.msra.mxu0 0.0
    %3458 = vmatprep.subr.mxu0 0.0
    %3459 = vmatpush1.msra.mxu0 0.0
    %3460 = vmatprep.subr.mxu0 0.0
    %3461 = vmatpush1.msra.mxu0 0.0
    %3462 = vmatprep.subr.mxu0 0.0
    %3463 = vmatpush1.msra.mxu0 0.0
    %3464 = vmatprep.subr.mxu0 0.0
    %3465 = vmatpush1.msra.mxu0 0.0
    %3466 = vmatprep.subr.mxu0 0.0
    %3467 = vmatpush1.msra.mxu0 0.0
    %3468 = vmatprep.subr.mxu0 0.0
    %3469 = vmatpush1.msra.mxu0 0.0
    %3470 = vmatprep.subr.mxu0 0.0
    %3471 = vmatpush1.msra.mxu0 0.0
    %3472 = vmatprep.subr.mxu0 0.0
    %3473 = vmatpush1.msra.mxu0 0.0
    %3474 = vmatprep.subr.mxu0 0.0
    %3475 = vmatpush1.msra.mxu0 0.0
    %3476 = vmatprep.subr.mxu0 0.0
    %3477 = vmatpush1.msra.mxu0 0.0
    %3478 = vmatprep.subr.mxu0 0.0
    %3479 = vmatpush1.msra.mxu0 0.0
    %3480 = vmatprep.subr.mxu0 0.0
    %3481 = vmatpush1.msra.mxu0 %v3445
    %3482 = vmatprep.subr.mxu0 0.0
    %3483 = vmatpush2.msra.mxu0 0.0
    %3484 = vmatprep.subr.mxu0 0.0
    %3485 = vmatpush2.msra.mxu0 0.0
    %3486 = vmatprep.subr.mxu0 0.0
    %3487 = vmatpush2.msra.mxu0 0.0
    %3488 = vmatprep.subr.mxu0 0.0
    %3489 = vmatpush2.msra.mxu0 0.0
    %3490 = vmatprep.subr.mxu0 0.0
    %3491 = vmatpush2.msra.mxu0 0.0
    %3492 = vmatprep.subr.mxu0 0.0
    %3493 = vmatpush2.msra.mxu0 0.0
    %3494 = vmatprep.subr.mxu0 0.0
    %3495 = vmatpush2.msra.mxu0 0.0
    %3496 = vmatprep.subr.mxu0 0.0
    %3497 = vmatpush2.msra.mxu0 0.0
    %3498 = vmatprep.subr.mxu0 0.0
    %3499 = vmatpush2.msra.mxu0 0.0
    %3500 = vmatprep.subr.mxu0 0.0
    %3501 = vmatpush2.msra.mxu0 0.0
    %3502 = vmatprep.subr.mxu0 0.0
    %3503 = vmatpush2.msra.mxu0 0.0
    %3504 = vmatprep.subr.mxu0 0.0
    %3505 = vmatpush2.msra.mxu0 0.0
    %3506 = vmatprep.subr.mxu0 0.0
    %3507 = vmatpush2.msra.mxu0 0.0
    %3508 = vmatprep.subr.mxu0 0.0
    %3509 = vmatpush2.msra.mxu0 0.0
    %3510 = vmatprep.subr.mxu0 0.0
    %3511 = vmatpush2.msra.mxu0 0.0
    %3512 = vmatprep.subr.mxu0 0.0
    %3513 = vmatpush2.msra.mxu0 0.0
    %3514 = vmatprep.mubr.f32.mxu0 0.0
    %3515 = vmatmul.mubr.f32.gmra.mxu0 %v3448
    %v3516 = vpop.f32.mrf.mxu0
    %v3517 = vadd.f32 0.0, %v3516
    %v3518 = vpop.f32.mrf.mxu0
    %3519 = vdwg.mxu0
    %3521 = vrot.lane.b32.xlu0 %v2574, 96
    %v3522 = vpop.permute.xlu0 %3521
    %v3525 = vsel %vm1056, %v3286, 0
    %3527 = vmatprep.subr.mxu0 0.0
    %3528 = vmatpush1.msra.mxu0 0.0
    %3529 = vmatprep.subr.mxu0 0.0
    %3530 = vmatpush1.msra.mxu0 0.0
    %3531 = vmatprep.subr.mxu0 0.0
    %3532 = vmatpush1.msra.mxu0 0.0
    %3533 = vmatprep.subr.mxu0 0.0
    %3534 = vmatpush1.msra.mxu0 0.0
    %3535 = vmatprep.subr.mxu0 0.0
    %3536 = vmatpush1.msra.mxu0 0.0
    %3537 = vmatprep.subr.mxu0 0.0
    %3538 = vmatpush1.msra.mxu0 0.0
    %3539 = vmatprep.subr.mxu0 0.0
    %3540 = vmatpush1.msra.mxu0 0.0
    %3541 = vmatprep.subr.mxu0 0.0
    %3542 = vmatpush1.msra.mxu0 0.0
    %3543 = vmatprep.subr.mxu0 0.0
    %3544 = vmatpush1.msra.mxu0 0.0
    %3545 = vmatprep.subr.mxu0 0.0
    %3546 = vmatpush1.msra.mxu0 0.0
    %3547 = vmatprep.subr.mxu0 0.0
    %3548 = vmatpush1.msra.mxu0 0.0
    %3549 = vmatprep.subr.mxu0 0.0
    %3550 = vmatpush1.msra.mxu0 0.0
    %3551 = vmatprep.subr.mxu0 0.0
    %3552 = vmatpush1.msra.mxu0 0.0
    %3553 = vmatprep.subr.mxu0 0.0
    %3554 = vmatpush1.msra.mxu0 0.0
    %3555 = vmatprep.subr.mxu0 0.0
    %3556 = vmatpush1.msra.mxu0 0.0
    %3557 = vmatprep.subr.mxu0 0.0
    %3558 = vmatpush1.msra.mxu0 %v3522
    %3559 = vmatprep.subr.mxu0 0.0
    %3560 = vmatpush2.msra.mxu0 0.0
    %3561 = vmatprep.subr.mxu0 0.0
    %3562 = vmatpush2.msra.mxu0 0.0
    %3563 = vmatprep.subr.mxu0 0.0
    %3564 = vmatpush2.msra.mxu0 0.0
    %3565 = vmatprep.subr.mxu0 0.0
    %3566 = vmatpush2.msra.mxu0 0.0
    %3567 = vmatprep.subr.mxu0 0.0
    %3568 = vmatpush2.msra.mxu0 0.0
    %3569 = vmatprep.subr.mxu0 0.0
    %3570 = vmatpush2.msra.mxu0 0.0
    %3571 = vmatprep.subr.mxu0 0.0
    %3572 = vmatpush2.msra.mxu0 0.0
    %3573 = vmatprep.subr.mxu0 0.0
    %3574 = vmatpush2.msra.mxu0 0.0
    %3575 = vmatprep.subr.mxu0 0.0
    %3576 = vmatpush2.msra.mxu0 0.0
    %3577 = vmatprep.subr.mxu0 0.0
    %3578 = vmatpush2.msra.mxu0 0.0
    %3579 = vmatprep.subr.mxu0 0.0
    %3580 = vmatpush2.msra.mxu0 0.0
    %3581 = vmatprep.subr.mxu0 0.0
    %3582 = vmatpush2.msra.mxu0 0.0
    %3583 = vmatprep.subr.mxu0 0.0
    %3584 = vmatpush2.msra.mxu0 0.0
    %3585 = vmatprep.subr.mxu0 0.0
    %3586 = vmatpush2.msra.mxu0 0.0
    %3587 = vmatprep.subr.mxu0 0.0
    %3588 = vmatpush2.msra.mxu0 0.0
    %3589 = vmatprep.subr.mxu0 0.0
    %3590 = vmatpush2.msra.mxu0 0.0
    %3591 = vmatprep.mubr.f32.mxu0 0.0
    %3592 = vmatmul.mubr.f32.gmra.mxu0 %v3525
    %v3593 = vpop.f32.mrf.mxu0
    %v3594 = vadd.f32 0.0, %v3593
    %v3595 = vpop.f32.mrf.mxu0
    %3596 = vdwg.mxu0
    %v3597 = vpack.c.bf16 %v3594, %v3517
    %s3598 = scalar_lea.vmem [#allocation4], 80
    %v3599 = vld [vmem:[%s3598] sm:$0xf]
    %v3600 = vld [vmem:[%s3598 + $0x4] sm:$0xf]
    %v3601 = vld [vmem:[%s3598 + $0x8] sm:$0xf]
    %v3602 = vld [vmem:[%s3598 + $0xc] sm:$0xf]
    %v3607 = vunpack.c.l.b16 %v3599
    %v3608 = vunpack.c.l.b16 %v3600
    %v3609 = vunpack.c.l.b16 %v3601
    %v3610 = vunpack.c.l.b16 %v3602
    %v3611 = vpack.c.b16 %v3608, %v3607
    %v3612 = vpack.c.b16 %v3610, %v3609
    %v3616 = vsel %vm427, %v3597, 0
    %3618 = vmatprep.subr.bf16.mxu0 0
    %3619 = vmatpush1.bf16.msra.mxu0 0
    %3620 = vmatprep.subr.bf16.mxu0 0
    %3621 = vmatpush1.bf16.msra.mxu0 0
    %3622 = vmatprep.subr.bf16.mxu0 0
    %3623 = vmatpush1.bf16.msra.mxu0 0
    %3624 = vmatprep.subr.bf16.mxu0 0
    %3625 = vmatpush1.bf16.msra.mxu0 0
    %3626 = vmatprep.subr.bf16.mxu0 0
    %3627 = vmatpush1.bf16.msra.mxu0 0
    %3628 = vmatprep.subr.bf16.mxu0 0
    %3629 = vmatpush1.bf16.msra.mxu0 0
    %3630 = vmatprep.subr.bf16.mxu0 0
    %3631 = vmatpush1.bf16.msra.mxu0 %v3612
    %3632 = vmatprep.subr.bf16.mxu0 0
    %3633 = vmatpush1.bf16.msra.mxu0 %v3611
    %3634 = vmatprep.subr.bf16.mxu0 0
    %3635 = vmatpush2.bf16.msra.mxu0 0
    %3636 = vmatprep.subr.bf16.mxu0 0
    %3637 = vmatpush2.bf16.msra.mxu0 0
    %3638 = vmatprep.subr.bf16.mxu0 0
    %3639 = vmatpush2.bf16.msra.mxu0 0
    %3640 = vmatprep.subr.bf16.mxu0 0
    %3641 = vmatpush2.bf16.msra.mxu0 0
    %3642 = vmatprep.subr.bf16.mxu0 0
    %3643 = vmatpush2.bf16.msra.mxu0 0
    %3644 = vmatprep.subr.bf16.mxu0 0
    %3645 = vmatpush2.bf16.msra.mxu0 0
    %3646 = vmatprep.subr.bf16.mxu0 0
    %3647 = vmatpush2.bf16.msra.mxu0 0
    %3648 = vmatprep.subr.bf16.mxu0 0
    %3649 = vmatpush2.bf16.msra.mxu0 0
    %3650 = vmatprep.mubr.bf16.mxu0 0
    %3651 = vmatmul.mubr.bf16.gmra.mxu0 %v3616
    %v3652 = vpop.f32.mrf.mxu0
    %v3653 = vadd.f32 0.0, %v3652
    %v3654 = vpop.f32.mrf.mxu0
    %v3655 = vpop.f32.mrf.mxu0
    %v3656 = vadd.f32 0.0, %v3655
    %v3657 = vpop.f32.mrf.mxu0
    %3658 = vdwg.mxu0
    %v3663 = vunpack.c.l.b16 %v3439
    %v3664 = vunpack.c.l.b16 %v3440
    %v3665 = vunpack.c.l.b16 %v3441
    %v3666 = vunpack.c.l.b16 %v3442
    %v3667 = vpack.c.b16 %v3664, %v3663
    %v3668 = vpack.c.b16 %v3666, %v3665
    %v3672 = vsel %vm427, %v3437, 0
    %3674 = vmatprep.subr.bf16.mxu0 0
    %3675 = vmatpush1.bf16.msra.mxu0 0
    %3676 = vmatprep.subr.bf16.mxu0 0
    %3677 = vmatpush1.bf16.msra.mxu0 0
    %3678 = vmatprep.subr.bf16.mxu0 0
    %3679 = vmatpush1.bf16.msra.mxu0 0
    %3680 = vmatprep.subr.bf16.mxu0 0
    %3681 = vmatpush1.bf16.msra.mxu0 0
    %3682 = vmatprep.subr.bf16.mxu0 0
    %3683 = vmatpush1.bf16.msra.mxu0 0
    %3684 = vmatprep.subr.bf16.mxu0 0
    %3685 = vmatpush1.bf16.msra.mxu0 0
    %3686 = vmatprep.subr.bf16.mxu0 0
    %3687 = vmatpush1.bf16.msra.mxu0 %v3668
    %3688 = vmatprep.subr.bf16.mxu0 0
    %3689 = vmatpush1.bf16.msra.mxu0 %v3667
    %3690 = vmatprep.subr.bf16.mxu0 0
    %3691 = vmatpush2.bf16.msra.mxu0 0
    %3692 = vmatprep.subr.bf16.mxu0 0
    %3693 = vmatpush2.bf16.msra.mxu0 0
    %3694 = vmatprep.subr.bf16.mxu0 0
    %3695 = vmatpush2.bf16.msra.mxu0 0
    %3696 = vmatprep.subr.bf16.mxu0 0
    %3697 = vmatpush2.bf16.msra.mxu0 0
    %3698 = vmatprep.subr.bf16.mxu0 0
    %3699 = vmatpush2.bf16.msra.mxu0 0
    %3700 = vmatprep.subr.bf16.mxu0 0
    %3701 = vmatpush2.bf16.msra.mxu0 0
    %3702 = vmatprep.subr.bf16.mxu0 0
    %3703 = vmatpush2.bf16.msra.mxu0 0
    %3704 = vmatprep.subr.bf16.mxu0 0
    %3705 = vmatpush2.bf16.msra.mxu0 0
    %3706 = vmatprep.mubr.bf16.mxu0 0
    %3707 = vmatmul.mubr.bf16.gmra.mxu0 %v3672
    %v3708 = vpop.f32.mrf.mxu0
    %v3709 = vadd.f32 %v3653, %v3708
    %v3710 = vpop.f32.mrf.mxu0
    %v3711 = vpop.f32.mrf.mxu0
    %v3712 = vadd.f32 %v3656, %v3711
    %v3713 = vpop.f32.mrf.mxu0
    %3714 = vdwg.mxu0
    %3715 = vrot.lane.b32.xlu0 %v2573, 64
    %v3716 = vpop.permute.xlu0 %3715
    %v3719 = vsel %vm1056, %v3287, 0
    %3721 = vmatprep.subr.mxu0 0.0
    %3722 = vmatpush1.msra.mxu0 0.0
    %3723 = vmatprep.subr.mxu0 0.0
    %3724 = vmatpush1.msra.mxu0 0.0
    %3725 = vmatprep.subr.mxu0 0.0
    %3726 = vmatpush1.msra.mxu0 0.0
    %3727 = vmatprep.subr.mxu0 0.0
    %3728 = vmatpush1.msra.mxu0 0.0
    %3729 = vmatprep.subr.mxu0 0.0
    %3730 = vmatpush1.msra.mxu0 0.0
    %3731 = vmatprep.subr.mxu0 0.0
    %3732 = vmatpush1.msra.mxu0 0.0
    %3733 = vmatprep.subr.mxu0 0.0
    %3734 = vmatpush1.msra.mxu0 0.0
    %3735 = vmatprep.subr.mxu0 0.0
    %3736 = vmatpush1.msra.mxu0 0.0
    %3737 = vmatprep.subr.mxu0 0.0
    %3738 = vmatpush1.msra.mxu0 0.0
    %3739 = vmatprep.subr.mxu0 0.0
    %3740 = vmatpush1.msra.mxu0 0.0
    %3741 = vmatprep.subr.mxu0 0.0
    %3742 = vmatpush1.msra.mxu0 0.0
    %3743 = vmatprep.subr.mxu0 0.0
    %3744 = vmatpush1.msra.mxu0 0.0
    %3745 = vmatprep.subr.mxu0 0.0
    %3746 = vmatpush1.msra.mxu0 0.0
    %3747 = vmatprep.subr.mxu0 0.0
    %3748 = vmatpush1.msra.mxu0 0.0
    %3749 = vmatprep.subr.mxu0 0.0
    %3750 = vmatpush1.msra.mxu0 0.0
    %3751 = vmatprep.subr.mxu0 0.0
    %3752 = vmatpush1.msra.mxu0 %v3716
    %3753 = vmatprep.subr.mxu0 0.0
    %3754 = vmatpush2.msra.mxu0 0.0
    %3755 = vmatprep.subr.mxu0 0.0
    %3756 = vmatpush2.msra.mxu0 0.0
    %3757 = vmatprep.subr.mxu0 0.0
    %3758 = vmatpush2.msra.mxu0 0.0
    %3759 = vmatprep.subr.mxu0 0.0
    %3760 = vmatpush2.msra.mxu0 0.0
    %3761 = vmatprep.subr.mxu0 0.0
    %3762 = vmatpush2.msra.mxu0 0.0
    %3763 = vmatprep.subr.mxu0 0.0
    %3764 = vmatpush2.msra.mxu0 0.0
    %3765 = vmatprep.subr.mxu0 0.0
    %3766 = vmatpush2.msra.mxu0 0.0
    %3767 = vmatprep.subr.mxu0 0.0
    %3768 = vmatpush2.msra.mxu0 0.0
    %3769 = vmatprep.subr.mxu0 0.0
    %3770 = vmatpush2.msra.mxu0 0.0
    %3771 = vmatprep.subr.mxu0 0.0
    %3772 = vmatpush2.msra.mxu0 0.0
    %3773 = vmatprep.subr.mxu0 0.0
    %3774 = vmatpush2.msra.mxu0 0.0
    %3775 = vmatprep.subr.mxu0 0.0
    %3776 = vmatpush2.msra.mxu0 0.0
    %3777 = vmatprep.subr.mxu0 0.0
    %3778 = vmatpush2.msra.mxu0 0.0
    %3779 = vmatprep.subr.mxu0 0.0
    %3780 = vmatpush2.msra.mxu0 0.0
    %3781 = vmatprep.subr.mxu0 0.0
    %3782 = vmatpush2.msra.mxu0 0.0
    %3783 = vmatprep.subr.mxu0 0.0
    %3784 = vmatpush2.msra.mxu0 0.0
    %3785 = vmatprep.mubr.f32.mxu0 0.0
    %3786 = vmatmul.mubr.f32.gmra.mxu0 %v3719
    %v3787 = vpop.f32.mrf.mxu0
    %v3788 = vadd.f32 0.0, %v3787
    %v3789 = vpop.f32.mrf.mxu0
    %3790 = vdwg.mxu0
    %3791 = vrot.lane.b32.xlu0 %v2574, 64
    %v3792 = vpop.permute.xlu0 %3791
    %v3795 = vsel %vm1056, %v3288, 0
    %3797 = vmatprep.subr.mxu0 0.0
    %3798 = vmatpush1.msra.mxu0 0.0
    %3799 = vmatprep.subr.mxu0 0.0
    %3800 = vmatpush1.msra.mxu0 0.0
    %3801 = vmatprep.subr.mxu0 0.0
    %3802 = vmatpush1.msra.mxu0 0.0
    %3803 = vmatprep.subr.mxu0 0.0
    %3804 = vmatpush1.msra.mxu0 0.0
    %3805 = vmatprep.subr.mxu0 0.0
    %3806 = vmatpush1.msra.mxu0 0.0
    %3807 = vmatprep.subr.mxu0 0.0
    %3808 = vmatpush1.msra.mxu0 0.0
    %3809 = vmatprep.subr.mxu0 0.0
    %3810 = vmatpush1.msra.mxu0 0.0
    %3811 = vmatprep.subr.mxu0 0.0
    %3812 = vmatpush1.msra.mxu0 0.0
    %3813 = vmatprep.subr.mxu0 0.0
    %3814 = vmatpush1.msra.mxu0 0.0
    %3815 = vmatprep.subr.mxu0 0.0
    %3816 = vmatpush1.msra.mxu0 0.0
    %3817 = vmatprep.subr.mxu0 0.0
    %3818 = vmatpush1.msra.mxu0 0.0
    %3819 = vmatprep.subr.mxu0 0.0
    %3820 = vmatpush1.msra.mxu0 0.0
    %3821 = vmatprep.subr.mxu0 0.0
    %3822 = vmatpush1.msra.mxu0 0.0
    %3823 = vmatprep.subr.mxu0 0.0
    %3824 = vmatpush1.msra.mxu0 0.0
    %3825 = vmatprep.subr.mxu0 0.0
    %3826 = vmatpush1.msra.mxu0 0.0
    %3827 = vmatprep.subr.mxu0 0.0
    %3828 = vmatpush1.msra.mxu0 %v3792
    %3829 = vmatprep.subr.mxu0 0.0
    %3830 = vmatpush2.msra.mxu0 0.0
    %3831 = vmatprep.subr.mxu0 0.0
    %3832 = vmatpush2.msra.mxu0 0.0
    %3833 = vmatprep.subr.mxu0 0.0
    %3834 = vmatpush2.msra.mxu0 0.0
    %3835 = vmatprep.subr.mxu0 0.0
    %3836 = vmatpush2.msra.mxu0 0.0
    %3837 = vmatprep.subr.mxu0 0.0
    %3838 = vmatpush2.msra.mxu0 0.0
    %3839 = vmatprep.subr.mxu0 0.0
    %3840 = vmatpush2.msra.mxu0 0.0
    %3841 = vmatprep.subr.mxu0 0.0
    %3842 = vmatpush2.msra.mxu0 0.0
    %3843 = vmatprep.subr.mxu0 0.0
    %3844 = vmatpush2.msra.mxu0 0.0
    %3845 = vmatprep.subr.mxu0 0.0
    %3846 = vmatpush2.msra.mxu0 0.0
    %3847 = vmatprep.subr.mxu0 0.0
    %3848 = vmatpush2.msra.mxu0 0.0
    %3849 = vmatprep.subr.mxu0 0.0
    %3850 = vmatpush2.msra.mxu0 0.0
    %3851 = vmatprep.subr.mxu0 0.0
    %3852 = vmatpush2.msra.mxu0 0.0
    %3853 = vmatprep.subr.mxu0 0.0
    %3854 = vmatpush2.msra.mxu0 0.0
    %3855 = vmatprep.subr.mxu0 0.0
    %3856 = vmatpush2.msra.mxu0 0.0
    %3857 = vmatprep.subr.mxu0 0.0
    %3858 = vmatpush2.msra.mxu0 0.0
    %3859 = vmatprep.subr.mxu0 0.0
    %3860 = vmatpush2.msra.mxu0 0.0
    %3861 = vmatprep.mubr.f32.mxu0 0.0
    %3862 = vmatmul.mubr.f32.gmra.mxu0 %v3795
    %v3863 = vpop.f32.mrf.mxu0
    %v3864 = vadd.f32 0.0, %v3863
    %v3865 = vpop.f32.mrf.mxu0
    %3866 = vdwg.mxu0
    %v3867 = vpack.c.bf16 %v3864, %v3788
    %s3868 = scalar_lea.vmem [#allocation4], 96
    %v3869 = vld [vmem:[%s3868] sm:$0xf]
    %v3870 = vld [vmem:[%s3868 + $0x4] sm:$0xf]
    %v3871 = vld [vmem:[%s3868 + $0x8] sm:$0xf]
    %v3872 = vld [vmem:[%s3868 + $0xc] sm:$0xf]
    %v3877 = vunpack.c.l.b16 %v3869
    %v3878 = vunpack.c.l.b16 %v3870
    %v3879 = vunpack.c.l.b16 %v3871
    %v3880 = vunpack.c.l.b16 %v3872
    %v3881 = vpack.c.b16 %v3878, %v3877
    %v3882 = vpack.c.b16 %v3880, %v3879
    %v3886 = vsel %vm427, %v3867, 0
    %3888 = vmatprep.subr.bf16.mxu0 0
    %3889 = vmatpush1.bf16.msra.mxu0 0
    %3890 = vmatprep.subr.bf16.mxu0 0
    %3891 = vmatpush1.bf16.msra.mxu0 0
    %3892 = vmatprep.subr.bf16.mxu0 0
    %3893 = vmatpush1.bf16.msra.mxu0 0
    %3894 = vmatprep.subr.bf16.mxu0 0
    %3895 = vmatpush1.bf16.msra.mxu0 0
    %3896 = vmatprep.subr.bf16.mxu0 0
    %3897 = vmatpush1.bf16.msra.mxu0 0
    %3898 = vmatprep.subr.bf16.mxu0 0
    %3899 = vmatpush1.bf16.msra.mxu0 0
    %3900 = vmatprep.subr.bf16.mxu0 0
    %3901 = vmatpush1.bf16.msra.mxu0 %v3882
    %3902 = vmatprep.subr.bf16.mxu0 0
    %3903 = vmatpush1.bf16.msra.mxu0 %v3881
    %3904 = vmatprep.subr.bf16.mxu0 0
    %3905 = vmatpush2.bf16.msra.mxu0 0
    %3906 = vmatprep.subr.bf16.mxu0 0
    %3907 = vmatpush2.bf16.msra.mxu0 0
    %3908 = vmatprep.subr.bf16.mxu0 0
    %3909 = vmatpush2.bf16.msra.mxu0 0
    %3910 = vmatprep.subr.bf16.mxu0 0
    %3911 = vmatpush2.bf16.msra.mxu0 0
    %3912 = vmatprep.subr.bf16.mxu0 0
    %3913 = vmatpush2.bf16.msra.mxu0 0
    %3914 = vmatprep.subr.bf16.mxu0 0
    %3915 = vmatpush2.bf16.msra.mxu0 0
    %3916 = vmatprep.subr.bf16.mxu0 0
    %3917 = vmatpush2.bf16.msra.mxu0 0
    %3918 = vmatprep.subr.bf16.mxu0 0
    %3919 = vmatpush2.bf16.msra.mxu0 0
    %3920 = vmatprep.mubr.bf16.mxu0 0
    %3921 = vmatmul.mubr.bf16.gmra.mxu0 %v3886
    %v3922 = vpop.f32.mrf.mxu0
    %v3923 = vadd.f32 0.0, %v3922
    %v3924 = vpop.f32.mrf.mxu0
    %v3925 = vpop.f32.mrf.mxu0
    %v3926 = vadd.f32 0.0, %v3925
    %v3927 = vpop.f32.mrf.mxu0
    %3928 = vdwg.mxu0
    %v3929 = vadd.f32 %v3709, %v3923
    %v3930 = vadd.f32 %v3712, %v3926
    %3931 = vrot.lane.b32.xlu0 %v2573, 32
    %v3932 = vpop.permute.xlu0 %3931
    %v3935 = vsel %vm1056, %v3289, 0
    %3937 = vmatprep.subr.mxu0 0.0
    %3938 = vmatpush1.msra.mxu0 0.0
    %3939 = vmatprep.subr.mxu0 0.0
    %3940 = vmatpush1.msra.mxu0 0.0
    %3941 = vmatprep.subr.mxu0 0.0
    %3942 = vmatpush1.msra.mxu0 0.0
    %3943 = vmatprep.subr.mxu0 0.0
    %3944 = vmatpush1.msra.mxu0 0.0
    %3945 = vmatprep.subr.mxu0 0.0
    %3946 = vmatpush1.msra.mxu0 0.0
    %3947 = vmatprep.subr.mxu0 0.0
    %3948 = vmatpush1.msra.mxu0 0.0
    %3949 = vmatprep.subr.mxu0 0.0
    %3950 = vmatpush1.msra.mxu0 0.0
    %3951 = vmatprep.subr.mxu0 0.0
    %3952 = vmatpush1.msra.mxu0 0.0
    %3953 = vmatprep.subr.mxu0 0.0
    %3954 = vmatpush1.msra.mxu0 0.0
    %3955 = vmatprep.subr.mxu0 0.0
    %3956 = vmatpush1.msra.mxu0 0.0
    %3957 = vmatprep.subr.mxu0 0.0
    %3958 = vmatpush1.msra.mxu0 0.0
    %3959 = vmatprep.subr.mxu0 0.0
    %3960 = vmatpush1.msra.mxu0 0.0
    %3961 = vmatprep.subr.mxu0 0.0
    %3962 = vmatpush1.msra.mxu0 0.0
    %3963 = vmatprep.subr.mxu0 0.0
    %3964 = vmatpush1.msra.mxu0 0.0
    %3965 = vmatprep.subr.mxu0 0.0
    %3966 = vmatpush1.msra.mxu0 0.0
    %3967 = vmatprep.subr.mxu0 0.0
    %3968 = vmatpush1.msra.mxu0 %v3932
    %3969 = vmatprep.subr.mxu0 0.0
    %3970 = vmatpush2.msra.mxu0 0.0
    %3971 = vmatprep.subr.mxu0 0.0
    %3972 = vmatpush2.msra.mxu0 0.0
    %3973 = vmatprep.subr.mxu0 0.0
    %3974 = vmatpush2.msra.mxu0 0.0
    %3975 = vmatprep.subr.mxu0 0.0
    %3976 = vmatpush2.msra.mxu0 0.0
    %3977 = vmatprep.subr.mxu0 0.0
    %3978 = vmatpush2.msra.mxu0 0.0
    %3979 = vmatprep.subr.mxu0 0.0
    %3980 = vmatpush2.msra.mxu0 0.0
    %3981 = vmatprep.subr.mxu0 0.0
    %3982 = vmatpush2.msra.mxu0 0.0
    %3983 = vmatprep.subr.mxu0 0.0
    %3984 = vmatpush2.msra.mxu0 0.0
    %3985 = vmatprep.subr.mxu0 0.0
    %3986 = vmatpush2.msra.mxu0 0.0
    %3987 = vmatprep.subr.mxu0 0.0
    %3988 = vmatpush2.msra.mxu0 0.0
    %3989 = vmatprep.subr.mxu0 0.0
    %3990 = vmatpush2.msra.mxu0 0.0
    %3991 = vmatprep.subr.mxu0 0.0
    %3992 = vmatpush2.msra.mxu0 0.0
    %3993 = vmatprep.subr.mxu0 0.0
    %3994 = vmatpush2.msra.mxu0 0.0
    %3995 = vmatprep.subr.mxu0 0.0
    %3996 = vmatpush2.msra.mxu0 0.0
    %3997 = vmatprep.subr.mxu0 0.0
    %3998 = vmatpush2.msra.mxu0 0.0
    %3999 = vmatprep.subr.mxu0 0.0
    %4000 = vmatpush2.msra.mxu0 0.0
    %4001 = vmatprep.mubr.f32.mxu0 0.0
    %4002 = vmatmul.mubr.f32.gmra.mxu0 %v3935
    %v4003 = vpop.f32.mrf.mxu0
    %v4004 = vadd.f32 0.0, %v4003
    %v4005 = vpop.f32.mrf.mxu0
    %4006 = vdwg.mxu0
    %4007 = vrot.lane.b32.xlu0 %v2574, 32
    %v4008 = vpop.permute.xlu0 %4007
    %v4011 = vsel %vm1056, %v3290, 0
    %4013 = vmatprep.subr.mxu0 0.0
    %4014 = vmatpush1.msra.mxu0 0.0
    %4015 = vmatprep.subr.mxu0 0.0
    %4016 = vmatpush1.msra.mxu0 0.0
    %4017 = vmatprep.subr.mxu0 0.0
    %4018 = vmatpush1.msra.mxu0 0.0
    %4019 = vmatprep.subr.mxu0 0.0
    %4020 = vmatpush1.msra.mxu0 0.0
    %4021 = vmatprep.subr.mxu0 0.0
    %4022 = vmatpush1.msra.mxu0 0.0
    %4023 = vmatprep.subr.mxu0 0.0
    %4024 = vmatpush1.msra.mxu0 0.0
    %4025 = vmatprep.subr.mxu0 0.0
    %4026 = vmatpush1.msra.mxu0 0.0
    %4027 = vmatprep.subr.mxu0 0.0
    %4028 = vmatpush1.msra.mxu0 0.0
    %4029 = vmatprep.subr.mxu0 0.0
    %4030 = vmatpush1.msra.mxu0 0.0
    %4031 = vmatprep.subr.mxu0 0.0
    %4032 = vmatpush1.msra.mxu0 0.0
    %4033 = vmatprep.subr.mxu0 0.0
    %4034 = vmatpush1.msra.mxu0 0.0
    %4035 = vmatprep.subr.mxu0 0.0
    %4036 = vmatpush1.msra.mxu0 0.0
    %4037 = vmatprep.subr.mxu0 0.0
    %4038 = vmatpush1.msra.mxu0 0.0
    %4039 = vmatprep.subr.mxu0 0.0
    %4040 = vmatpush1.msra.mxu0 0.0
    %4041 = vmatprep.subr.mxu0 0.0
    %4042 = vmatpush1.msra.mxu0 0.0
    %4043 = vmatprep.subr.mxu0 0.0
    %4044 = vmatpush1.msra.mxu0 %v4008
    %4045 = vmatprep.subr.mxu0 0.0
    %4046 = vmatpush2.msra.mxu0 0.0
    %4047 = vmatprep.subr.mxu0 0.0
    %4048 = vmatpush2.msra.mxu0 0.0
    %4049 = vmatprep.subr.mxu0 0.0
    %4050 = vmatpush2.msra.mxu0 0.0
    %4051 = vmatprep.subr.mxu0 0.0
    %4052 = vmatpush2.msra.mxu0 0.0
    %4053 = vmatprep.subr.mxu0 0.0
    %4054 = vmatpush2.msra.mxu0 0.0
    %4055 = vmatprep.subr.mxu0 0.0
    %4056 = vmatpush2.msra.mxu0 0.0
    %4057 = vmatprep.subr.mxu0 0.0
    %4058 = vmatpush2.msra.mxu0 0.0
    %4059 = vmatprep.subr.mxu0 0.0
    %4060 = vmatpush2.msra.mxu0 0.0
    %4061 = vmatprep.subr.mxu0 0.0
    %4062 = vmatpush2.msra.mxu0 0.0
    %4063 = vmatprep.subr.mxu0 0.0
    %4064 = vmatpush2.msra.mxu0 0.0
    %4065 = vmatprep.subr.mxu0 0.0
    %4066 = vmatpush2.msra.mxu0 0.0
    %4067 = vmatprep.subr.mxu0 0.0
    %4068 = vmatpush2.msra.mxu0 0.0
    %4069 = vmatprep.subr.mxu0 0.0
    %4070 = vmatpush2.msra.mxu0 0.0
    %4071 = vmatprep.subr.mxu0 0.0
    %4072 = vmatpush2.msra.mxu0 0.0
    %4073 = vmatprep.subr.mxu0 0.0
    %4074 = vmatpush2.msra.mxu0 0.0
    %4075 = vmatprep.subr.mxu0 0.0
    %4076 = vmatpush2.msra.mxu0 0.0
    %4077 = vmatprep.mubr.f32.mxu0 0.0
    %4078 = vmatmul.mubr.f32.gmra.mxu0 %v4011
    %v4079 = vpop.f32.mrf.mxu0
    %v4080 = vadd.f32 0.0, %v4079
    %v4081 = vpop.f32.mrf.mxu0
    %4082 = vdwg.mxu0
    %v4083 = vpack.c.bf16 %v4080, %v4004
    %s4084 = scalar_lea.vmem [#allocation4], 112
    %v4085 = vld [vmem:[%s4084] sm:$0xf]
    %v4086 = vld [vmem:[%s4084 + $0x4] sm:$0xf]
    %v4087 = vld [vmem:[%s4084 + $0x8] sm:$0xf]
    %v4088 = vld [vmem:[%s4084 + $0xc] sm:$0xf]
    %v4093 = vunpack.c.l.b16 %v4085
    %v4094 = vunpack.c.l.b16 %v4086
    %v4095 = vunpack.c.l.b16 %v4087
    %v4096 = vunpack.c.l.b16 %v4088
    %v4097 = vpack.c.b16 %v4094, %v4093
    %v4098 = vpack.c.b16 %v4096, %v4095
    %v4102 = vsel %vm427, %v4083, 0
    %4104 = vmatprep.subr.bf16.mxu0 0
    %4105 = vmatpush1.bf16.msra.mxu0 0
    %4106 = vmatprep.subr.bf16.mxu0 0
    %4107 = vmatpush1.bf16.msra.mxu0 0
    %4108 = vmatprep.subr.bf16.mxu0 0
    %4109 = vmatpush1.bf16.msra.mxu0 0
    %4110 = vmatprep.subr.bf16.mxu0 0
    %4111 = vmatpush1.bf16.msra.mxu0 0
    %4112 = vmatprep.subr.bf16.mxu0 0
    %4113 = vmatpush1.bf16.msra.mxu0 0
    %4114 = vmatprep.subr.bf16.mxu0 0
    %4115 = vmatpush1.bf16.msra.mxu0 0
    %4116 = vmatprep.subr.bf16.mxu0 0
    %4117 = vmatpush1.bf16.msra.mxu0 %v4098
    %4118 = vmatprep.subr.bf16.mxu0 0
    %4119 = vmatpush1.bf16.msra.mxu0 %v4097
    %4120 = vmatprep.subr.bf16.mxu0 0
    %4121 = vmatpush2.bf16.msra.mxu0 0
    %4122 = vmatprep.subr.bf16.mxu0 0
    %4123 = vmatpush2.bf16.msra.mxu0 0
    %4124 = vmatprep.subr.bf16.mxu0 0
    %4125 = vmatpush2.bf16.msra.mxu0 0
    %4126 = vmatprep.subr.bf16.mxu0 0
    %4127 = vmatpush2.bf16.msra.mxu0 0
    %4128 = vmatprep.subr.bf16.mxu0 0
    %4129 = vmatpush2.bf16.msra.mxu0 0
    %4130 = vmatprep.subr.bf16.mxu0 0
    %4131 = vmatpush2.bf16.msra.mxu0 0
    %4132 = vmatprep.subr.bf16.mxu0 0
    %4133 = vmatpush2.bf16.msra.mxu0 0
    %4134 = vmatprep.subr.bf16.mxu0 0
    %4135 = vmatpush2.bf16.msra.mxu0 0
    %4136 = vmatprep.mubr.bf16.mxu0 0
    %4137 = vmatmul.mubr.bf16.gmra.mxu0 %v4102
    %v4138 = vpop.f32.mrf.mxu0
    %v4139 = vadd.f32 0.0, %v4138
    %v4140 = vpop.f32.mrf.mxu0
    %v4141 = vpop.f32.mrf.mxu0
    %v4142 = vadd.f32 0.0, %v4141
    %v4143 = vpop.f32.mrf.mxu0
    %4144 = vdwg.mxu0
    %v4145 = vadd.f32 %v3929, %v4139
    %v4146 = vadd.f32 %v3930, %v4142
    %v4147 = vlaneseq
    %v4148 = vshrl.u32 %v4147, 7
    %v4149 = vsub.s32 3, %v4148
    %v4150 = vrot.slane %v2309, %v4149
    %v4151 = vadd.f32 %v4145, %v4150
    %v4152 = vadd.f32 %v4146, %v4150
    %v4153 = vadd.f32 %v2306, %v4151
    %v4154 = vadd.f32 %v2307, %v4152
    %4155 = vadd.xlane.f32.xlu0 %v4153
    %v4156 = vpop.xlane.xlu0 %4155
    %4157 = vadd.xlane.f32.xlu0 %v4154
    %v4158 = vpop.xlane.xlu0 %4157
    %v4159 = vmul.f32 %v4156, 0.0078125
    %v4160 = vmul.f32 %v4158, 0.0078125
    %v4161 = vmul.f32 %v4153, %v4153
    %v4162 = vmul.f32 %v4154, %v4154
    %4163 = vadd.xlane.f32.xlu0 %v4161
    %v4164 = vpop.xlane.xlu0 %4163
    %4165 = vadd.xlane.f32.xlu0 %v4162
    %v4166 = vpop.xlane.xlu0 %4165
    %v4167 = vmul.f32 %v4164, 0.0078125
    %v4168 = vmul.f32 %v4166, 0.0078125
    %v4169 = vmul.f32 %v4159, %v4159
    %v4170 = vmul.f32 %v4160, %v4160
    %v4171 = vsub.f32 %v4167, %v4169
    %v4172 = vsub.f32 %v4168, %v4170
    %v4173 = vsub.f32 %v4153, %v4159
    %v4174 = vsub.f32 %v4154, %v4160
    %v4175 = vadd.f32 %v4171, 1e-05
    %v4176 = vadd.f32 %v4172, 1e-05
    %v4177 = vrsqrt.pop %v4175
    %v4178 = vrsqrt.pop %v4176
    %v4179 = vmul.f32 %v4173, %v4177
    %v4180 = vmul.f32 %v4174, %v4178
    %v4181 = vlaneseq
    %v4182 = vshrl.u32 %v4181, 7
    %v4183 = vsub.s32 4, %v4182
    %v4184 = vrot.slane %v2309, %v4183
    %v4185 = vmul.f32 %v4179, %v4184
    %v4186 = vmul.f32 %v4180, %v4184
    %v4187 = vlaneseq
    %v4188 = vshrl.u32 %v4187, 7
    %v4189 = vsub.s32 5, %v4188
    %v4190 = vrot.slane %v2309, %v4189
    %v4191 = vadd.f32 %v4185, %v4190
    %v4192 = vadd.f32 %v4186, %v4190
    %v4193 = vpack.c.bf16 %v4192, %v4191
    %s4194 = scalar_lea.vmem [#allocation6], 64
    %v4195 = vld [vmem:[%s4194] sm:$0xf]
    %v4196 = vld [vmem:[%s4194 + $0x4] sm:$0xf]
    %v4197 = vld [vmem:[%s4194 + $0x8] sm:$0xf]
    %v4198 = vld [vmem:[%s4194 + $0xc] sm:$0xf]
    %v4199 = vld [vmem:[%s4194 + $0x10] sm:$0xf]
    %v4200 = vld [vmem:[%s4194 + $0x14] sm:$0xf]
    %v4201 = vld [vmem:[%s4194 + $0x18] sm:$0xf]
    %v4202 = vld [vmem:[%s4194 + $0x1c] sm:$0xf]
    %v4203 = vld [vmem:[%s4194 + $0x20] sm:$0xf]
    %v4204 = vld [vmem:[%s4194 + $0x24] sm:$0xf]
    %v4205 = vld [vmem:[%s4194 + $0x28] sm:$0xf]
    %v4206 = vld [vmem:[%s4194 + $0x2c] sm:$0xf]
    %v4207 = vld [vmem:[%s4194 + $0x30] sm:$0xf]
    %v4208 = vld [vmem:[%s4194 + $0x34] sm:$0xf]
    %v4209 = vld [vmem:[%s4194 + $0x38] sm:$0xf]
    %v4210 = vld [vmem:[%s4194 + $0x3c] sm:$0xf]
    %v4211 = vlaneseq
    %v4212 = vshrl.u32 %v4211, 7
    %v4213 = vsub.s32 6, %v4212
    %v4214 = vrot.slane %v2309, %v4213
    %v4231 = vunpack.c.l.b16 %v4195
    %v4232 = vunpack.c.l.b16 %v4196
    %v4233 = vunpack.c.l.b16 %v4197
    %v4234 = vunpack.c.l.b16 %v4198
    %v4235 = vunpack.c.l.b16 %v4199
    %v4236 = vunpack.c.l.b16 %v4200
    %v4237 = vunpack.c.l.b16 %v4201
    %v4238 = vunpack.c.l.b16 %v4202
    %v4239 = vunpack.c.l.b16 %v4203
    %v4240 = vunpack.c.l.b16 %v4204
    %v4241 = vunpack.c.l.b16 %v4205
    %v4242 = vunpack.c.l.b16 %v4206
    %v4243 = vunpack.c.l.b16 %v4207
    %v4244 = vunpack.c.l.b16 %v4208
    %v4245 = vunpack.c.l.b16 %v4209
    %v4246 = vunpack.c.l.b16 %v4210
    %v4247 = vpack.c.b16 %v4232, %v4231
    %v4248 = vpack.c.b16 %v4234, %v4233
    %v4249 = vpack.c.b16 %v4236, %v4235
    %v4250 = vpack.c.b16 %v4238, %v4237
    %v4251 = vpack.c.b16 %v4240, %v4239
    %v4252 = vpack.c.b16 %v4242, %v4241
    %v4253 = vpack.c.b16 %v4244, %v4243
    %v4254 = vpack.c.b16 %v4246, %v4245
    %4263 = vmatprep.subr.bf16.mxu0 0
    %4264 = vmatpush1.bf16.msra.mxu0 %v4254
    %4265 = vmatprep.subr.bf16.mxu0 0
    %4266 = vmatpush1.bf16.msra.mxu0 %v4253
    %4267 = vmatprep.subr.bf16.mxu0 0
    %4268 = vmatpush1.bf16.msra.mxu0 %v4252
    %4269 = vmatprep.subr.bf16.mxu0 0
    %4270 = vmatpush1.bf16.msra.mxu0 %v4251
    %4271 = vmatprep.subr.bf16.mxu0 0
    %4272 = vmatpush1.bf16.msra.mxu0 %v4250
    %4273 = vmatprep.subr.bf16.mxu0 0
    %4274 = vmatpush1.bf16.msra.mxu0 %v4249
    %4275 = vmatprep.subr.bf16.mxu0 0
    %4276 = vmatpush1.bf16.msra.mxu0 %v4248
    %4277 = vmatprep.subr.bf16.mxu0 0
    %4278 = vmatpush1.bf16.msra.mxu0 %v4247
    %4279 = vmatprep.subr.bf16.mxu0 0
    %4280 = vmatpush2.bf16.msra.mxu0 0
    %4281 = vmatprep.subr.bf16.mxu0 0
    %4282 = vmatpush2.bf16.msra.mxu0 0
    %4283 = vmatprep.subr.bf16.mxu0 0
    %4284 = vmatpush2.bf16.msra.mxu0 0
    %4285 = vmatprep.subr.bf16.mxu0 0
    %4286 = vmatpush2.bf16.msra.mxu0 0
    %4287 = vmatprep.subr.bf16.mxu0 0
    %4288 = vmatpush2.bf16.msra.mxu0 0
    %4289 = vmatprep.subr.bf16.mxu0 0
    %4290 = vmatpush2.bf16.msra.mxu0 0
    %4291 = vmatprep.subr.bf16.mxu0 0
    %4292 = vmatpush2.bf16.msra.mxu0 0
    %4293 = vmatprep.subr.bf16.mxu0 0
    %4294 = vmatpush2.bf16.msra.mxu0 0
    %4295 = vmatprep.mubr.bf16.mxu0 0
    %4296 = vmatmul.mubr.bf16.gmra.mxu0 %v4193
    %v4297 = vpop.f32.mrf.mxu0
    %v4298 = vadd.f32 %v4214, %v4297
    %v4299 = vpop.f32.mrf.mxu0
    %v4300 = vpop.f32.mrf.mxu0
    %v4301 = vadd.f32 %v4214, %v4300
    %v4302 = vpop.f32.mrf.mxu0
    %4303 = vdwg.mxu0
    %v4304 = vmax.f32 %v4298, 0.0
    %v4305 = vmax.f32 %v4301, 0.0
    %v4306 = vpack.c.bf16 %v4305, %v4304
    %s4307 = scalar_lea.vmem [#allocation7], 64
    %v4308 = vld [vmem:[%s4307] sm:$0xf]
    %v4309 = vld [vmem:[%s4307 + $0x4] sm:$0xf]
    %v4310 = vld [vmem:[%s4307 + $0x8] sm:$0xf]
    %v4311 = vld [vmem:[%s4307 + $0xc] sm:$0xf]
    %v4312 = vld [vmem:[%s4307 + $0x10] sm:$0xf]
    %v4313 = vld [vmem:[%s4307 + $0x14] sm:$0xf]
    %v4314 = vld [vmem:[%s4307 + $0x18] sm:$0xf]
    %v4315 = vld [vmem:[%s4307 + $0x1c] sm:$0xf]
    %v4316 = vld [vmem:[%s4307 + $0x20] sm:$0xf]
    %v4317 = vld [vmem:[%s4307 + $0x24] sm:$0xf]
    %v4318 = vld [vmem:[%s4307 + $0x28] sm:$0xf]
    %v4319 = vld [vmem:[%s4307 + $0x2c] sm:$0xf]
    %v4320 = vld [vmem:[%s4307 + $0x30] sm:$0xf]
    %v4321 = vld [vmem:[%s4307 + $0x34] sm:$0xf]
    %v4322 = vld [vmem:[%s4307 + $0x38] sm:$0xf]
    %v4323 = vld [vmem:[%s4307 + $0x3c] sm:$0xf]
    %v4324 = vlaneseq
    %v4325 = vshrl.u32 %v4324, 7
    %v4326 = vsub.s32 7, %v4325
    %v4327 = vrot.slane %v2309, %v4326
    %v4344 = vunpack.c.l.b16 %v4308
    %v4345 = vunpack.c.l.b16 %v4309
    %v4346 = vunpack.c.l.b16 %v4310
    %v4347 = vunpack.c.l.b16 %v4311
    %v4348 = vunpack.c.l.b16 %v4312
    %v4349 = vunpack.c.l.b16 %v4313
    %v4350 = vunpack.c.l.b16 %v4314
    %v4351 = vunpack.c.l.b16 %v4315
    %v4352 = vunpack.c.l.b16 %v4316
    %v4353 = vunpack.c.l.b16 %v4317
    %v4354 = vunpack.c.l.b16 %v4318
    %v4355 = vunpack.c.l.b16 %v4319
    %v4356 = vunpack.c.l.b16 %v4320
    %v4357 = vunpack.c.l.b16 %v4321
    %v4358 = vunpack.c.l.b16 %v4322
    %v4359 = vunpack.c.l.b16 %v4323
    %v4360 = vpack.c.b16 %v4345, %v4344
    %v4361 = vpack.c.b16 %v4347, %v4346
    %v4362 = vpack.c.b16 %v4349, %v4348
    %v4363 = vpack.c.b16 %v4351, %v4350
    %v4364 = vpack.c.b16 %v4353, %v4352
    %v4365 = vpack.c.b16 %v4355, %v4354
    %v4366 = vpack.c.b16 %v4357, %v4356
    %v4367 = vpack.c.b16 %v4359, %v4358
    %4376 = vmatprep.subr.bf16.mxu0 0
    %4377 = vmatpush1.bf16.msra.mxu0 %v4367
    %4378 = vmatprep.subr.bf16.mxu0 0
    %4379 = vmatpush1.bf16.msra.mxu0 %v4366
    %4380 = vmatprep.subr.bf16.mxu0 0
    %4381 = vmatpush1.bf16.msra.mxu0 %v4365
    %4382 = vmatprep.subr.bf16.mxu0 0
    %4383 = vmatpush1.bf16.msra.mxu0 %v4364
    %4384 = vmatprep.subr.bf16.mxu0 0
    %4385 = vmatpush1.bf16.msra.mxu0 %v4363
    %4386 = vmatprep.subr.bf16.mxu0 0
    %4387 = vmatpush1.bf16.msra.mxu0 %v4362
    %4388 = vmatprep.subr.bf16.mxu0 0
    %4389 = vmatpush1.bf16.msra.mxu0 %v4361
    %4390 = vmatprep.subr.bf16.mxu0 0
    %4391 = vmatpush1.bf16.msra.mxu0 %v4360
    %4392 = vmatprep.subr.bf16.mxu0 0
    %4393 = vmatpush2.bf16.msra.mxu0 0
    %4394 = vmatprep.subr.bf16.mxu0 0
    %4395 = vmatpush2.bf16.msra.mxu0 0
    %4396 = vmatprep.subr.bf16.mxu0 0
    %4397 = vmatpush2.bf16.msra.mxu0 0
    %4398 = vmatprep.subr.bf16.mxu0 0
    %4399 = vmatpush2.bf16.msra.mxu0 0
    %4400 = vmatprep.subr.bf16.mxu0 0
    %4401 = vmatpush2.bf16.msra.mxu0 0
    %4402 = vmatprep.subr.bf16.mxu0 0
    %4403 = vmatpush2.bf16.msra.mxu0 0
    %4404 = vmatprep.subr.bf16.mxu0 0
    %4405 = vmatpush2.bf16.msra.mxu0 0
    %4406 = vmatprep.subr.bf16.mxu0 0
    %4407 = vmatpush2.bf16.msra.mxu0 0
    %4408 = vmatprep.mubr.bf16.mxu0 0
    %4409 = vmatmul.mubr.bf16.gmra.mxu0 %v4306
    %v4410 = vpop.f32.mrf.mxu0
    %v4411 = vadd.f32 %v4327, %v4410
    %v4412 = vpop.f32.mrf.mxu0
    %v4413 = vpop.f32.mrf.mxu0
    %v4414 = vadd.f32 %v4327, %v4413
    %v4415 = vpop.f32.mrf.mxu0
    %4416 = vdwg.mxu0
    %v4417 = vadd.f32 %v4191, %v4411
    %v4418 = vadd.f32 %v4192, %v4414
    %4419 = vadd.xlane.f32.xlu0 %v4417
    %v4420 = vpop.xlane.xlu0 %4419
    %4421 = vadd.xlane.f32.xlu0 %v4418
    %v4422 = vpop.xlane.xlu0 %4421
    %v4423 = vmul.f32 %v4420, 0.0078125
    %v4424 = vmul.f32 %v4422, 0.0078125
    %v4425 = vmul.f32 %v4417, %v4417
    %v4426 = vmul.f32 %v4418, %v4418
    %4427 = vadd.xlane.f32.xlu0 %v4425
    %v4428 = vpop.xlane.xlu0 %4427
    %4429 = vadd.xlane.f32.xlu0 %v4426
    %v4430 = vpop.xlane.xlu0 %4429
    %v4431 = vmul.f32 %v4428, 0.0078125
    %v4432 = vmul.f32 %v4430, 0.0078125
    %v4433 = vmul.f32 %v4423, %v4423
    %v4434 = vmul.f32 %v4424, %v4424
    %v4435 = vsub.f32 %v4431, %v4433
    %v4436 = vsub.f32 %v4432, %v4434
    %v4437 = vsub.f32 %v4417, %v4423
    %v4438 = vsub.f32 %v4418, %v4424
    %v4439 = vadd.f32 %v4435, 1e-05
    %v4440 = vadd.f32 %v4436, 1e-05
    %v4441 = vrsqrt.pop %v4439
    %v4442 = vrsqrt.pop %v4440
    %v4443 = vmul.f32 %v4437, %v4441
    %v4444 = vmul.f32 %v4438, %v4442
    %v4445 = vlaneseq
    %v4446 = vshrl.u32 %v4445, 7
    %v4447 = vsub.s32 0, %v4446
    %v4448 = vrot.slane %v2310, %v4447
    %v4449 = vmul.f32 %v4443, %v4448
    %v4450 = vmul.f32 %v4444, %v4448
    %v4451 = vlaneseq
    %v4452 = vshrl.u32 %v4451, 7
    %v4453 = vsub.s32 1, %v4452
    %v4454 = vrot.slane %v2310, %v4453
    %v4455 = vadd.f32 %v4449, %v4454
    %v4456 = vadd.f32 %v4450, %v4454
    %v4457 = vld [vmem:[%s9] sm:$0x7]
    %v4458 = vpack.c.bf16 %v4456, %v4455
    %v4459 = vld [vmem:[#allocation9] sm:$0xf]
    %v4460 = vld [vmem:[#allocation9 + $0x4] sm:$0xf]
    %v4461 = vld [vmem:[#allocation9 + $0x8] sm:$0xf]
    %v4462 = vld [vmem:[#allocation9 + $0xc] sm:$0xf]
    %v4463 = vld [vmem:[#allocation9 + $0x10] sm:$0xf]
    %v4464 = vld [vmem:[#allocation9 + $0x14] sm:$0xf]
    %v4465 = vld [vmem:[#allocation9 + $0x18] sm:$0xf]
    %v4466 = vld [vmem:[#allocation9 + $0x1c] sm:$0xf]
    %v4467 = vld [vmem:[#allocation9 + $0x20] sm:$0xf]
    %v4468 = vld [vmem:[#allocation9 + $0x24] sm:$0xf]
    %v4469 = vld [vmem:[#allocation9 + $0x28] sm:$0xf]
    %v4470 = vld [vmem:[#allocation9 + $0x2c] sm:$0xf]
    %v4471 = vld [vmem:[#allocation9 + $0x30] sm:$0xf]
    %v4472 = vld [vmem:[#allocation9 + $0x34] sm:$0xf]
    %v4473 = vld [vmem:[#allocation9 + $0x38] sm:$0xf]
    %v4474 = vld [vmem:[#allocation9 + $0x3c] sm:$0xf]
    %v4475 = vlaneseq
    %v4476 = vshrl.u32 %v4475, 7
    %v4477 = vsub.s32 0, %v4476
    %v4478 = vrot.slane %v4457, %v4477
    %v4495 = vunpack.c.l.b16 %v4459
    %v4496 = vunpack.c.l.b16 %v4460
    %v4497 = vunpack.c.l.b16 %v4461
    %v4498 = vunpack.c.l.b16 %v4462
    %v4499 = vunpack.c.l.b16 %v4463
    %v4500 = vunpack.c.l.b16 %v4464
    %v4501 = vunpack.c.l.b16 %v4465
    %v4502 = vunpack.c.l.b16 %v4466
    %v4503 = vunpack.c.l.b16 %v4467
    %v4504 = vunpack.c.l.b16 %v4468
    %v4505 = vunpack.c.l.b16 %v4469
    %v4506 = vunpack.c.l.b16 %v4470
    %v4507 = vunpack.c.l.b16 %v4471
    %v4508 = vunpack.c.l.b16 %v4472
    %v4509 = vunpack.c.l.b16 %v4473
    %v4510 = vunpack.c.l.b16 %v4474
    %v4511 = vpack.c.b16 %v4496, %v4495
    %v4512 = vpack.c.b16 %v4498, %v4497
    %v4513 = vpack.c.b16 %v4500, %v4499
    %v4514 = vpack.c.b16 %v4502, %v4501
    %v4515 = vpack.c.b16 %v4504, %v4503
    %v4516 = vpack.c.b16 %v4506, %v4505
    %v4517 = vpack.c.b16 %v4508, %v4507
    %v4518 = vpack.c.b16 %v4510, %v4509
    %4527 = vmatprep.subr.bf16.mxu0 0
    %4528 = vmatpush1.bf16.msra.mxu0 %v4518
    %4529 = vmatprep.subr.bf16.mxu0 0
    %4530 = vmatpush1.bf16.msra.mxu0 %v4517
    %4531 = vmatprep.subr.bf16.mxu0 0
    %4532 = vmatpush1.bf16.msra.mxu0 %v4516
    %4533 = vmatprep.subr.bf16.mxu0 0
    %4534 = vmatpush1.bf16.msra.mxu0 %v4515
    %4535 = vmatprep.subr.bf16.mxu0 0
    %4536 = vmatpush1.bf16.msra.mxu0 %v4514
    %4537 = vmatprep.subr.bf16.mxu0 0
    %4538 = vmatpush1.bf16.msra.mxu0 %v4513
    %4539 = vmatprep.subr.bf16.mxu0 0
    %4540 = vmatpush1.bf16.msra.mxu0 %v4512
    %4541 = vmatprep.subr.bf16.mxu0 0
    %4542 = vmatpush1.bf16.msra.mxu0 %v4511
    %4543 = vmatprep.subr.bf16.mxu0 0
    %4544 = vmatpush2.bf16.msra.mxu0 0
    %4545 = vmatprep.subr.bf16.mxu0 0
    %4546 = vmatpush2.bf16.msra.mxu0 0
    %4547 = vmatprep.subr.bf16.mxu0 0
    %4548 = vmatpush2.bf16.msra.mxu0 0
    %4549 = vmatprep.subr.bf16.mxu0 0
    %4550 = vmatpush2.bf16.msra.mxu0 0
    %4551 = vmatprep.subr.bf16.mxu0 0
    %4552 = vmatpush2.bf16.msra.mxu0 0
    %4553 = vmatprep.subr.bf16.mxu0 0
    %4554 = vmatpush2.bf16.msra.mxu0 0
    %4555 = vmatprep.subr.bf16.mxu0 0
    %4556 = vmatpush2.bf16.msra.mxu0 0
    %4557 = vmatprep.subr.bf16.mxu0 0
    %4558 = vmatpush2.bf16.msra.mxu0 0
    %4559 = vmatprep.mubr.bf16.mxu0 0
    %4560 = vmatmul.mubr.bf16.gmra.mxu0 %v4458
    %v4561 = vpop.f32.mrf.mxu0
    %v4562 = vadd.f32 %v4478, %v4561
    %v4563 = vpop.f32.mrf.mxu0
    %v4564 = vpop.f32.mrf.mxu0
    %v4565 = vadd.f32 %v4478, %v4564
    %v4566 = vpop.f32.mrf.mxu0
    %4567 = vdwg.mxu0
    %v4568 = vmax.f32 %v4562, 0.0
    %v4569 = vmax.f32 %v4565, 0.0
    %v4570 = vrot.slane %v4568, 4
    %v4571 = vadd.f32 %v4568, %v4570
    %v4572 = vrot.slane %v4571, 2
    %v4573 = vadd.f32 %v4571, %v4572
    %v4574 = vrot.slane %v4573, 1
    %v4575 = vadd.f32 %v4573, %v4574
    %v4576 = vrot.slane %v4569, 4
    %v4577 = vadd.f32 %v4569, %v4576
    %v4578 = vrot.slane %v4577, 2
    %v4579 = vadd.f32 %v4577, %v4578
    %v4580 = vrot.slane %v4579, 1
    %v4581 = vadd.f32 %v4579, %v4580
    %v4582 = vrcp.pop 8.0
    %v4583 = vmul.f32 %v4575, %v4582
    %v4584 = vmul.f32 %v4581, %v4582
    %v4585 = vlaneseq
    %v4586 = vshrl.u32 %v4585, 7
    %v4587 = vsub.s32 1, %v4586
    %v4588 = vrot.slane %v4457, %v4587
    %v4589 = vmul.f32 %v4583, %v4588
    %v4590 = vmul.f32 %v4584, %v4588
    %v4593 = vrot.slane %v4590, 7
    %vm4594 = vcmask 1041409
    %v4595 = vsel %vm4594, %v4593, %v4589
    %vm4597 = vcmask 1041408
    %v4598 = vsel %vm4597, %v4595, 0.0
    %4599 = vadd.xlane.f32.xlu0 %v4598
    %v4600 = vpop.xlane.xlu0 %4599
    %v4601 = vlaneseq
    %v4602 = vshrl.u32 %v4601, 7
    %v4603 = vsub.s32 2, %v4602
    %v4604 = vrot.slane %v4457, %v4603
    %v4605 = vadd.f32 %v4600, %v4604
    %vm4606 = vcmask 1024
    %4607 = vst.msk [vmem:[%s10] sm:$0x3] %vm4606, %v4605
    // Predicated region
    $region62: #{simple_transformer_forward.1} parent=1 // pred_check
      _
    $region63: #{simple_transformer_forward.1} parent=1 // pred_check_branch
      %4609 = sbr.rel (0) target = $region65
    $region64: #{simple_transformer_forward.1} parent=1 // pred_region
      _
    $region65: #{simple_transformer_forward.1} parent=1 // pred_fallthru
      _
    // Predicated region
    $region66: #{simple_transformer_forward.1} parent=1 // pred_check
      _
    $region67: #{simple_transformer_forward.1} parent=1 // pred_check_branch
      %4611 = sbr.rel (0) target = $region69
    $region68: #{simple_transformer_forward.1} parent=1 // pred_region
      _
    $region69: #{simple_transformer_forward.1} parent=1 // pred_fallthru
      _
    %4612 = vsyncpa [#allocation3], 1
    %4613 = vsyncpa [#allocation5], 1
    %4614 = vsyncpa [#allocation8], 1

</llo_original>
